<compile_context>
chip_gen: v7x
topology: tpu7x:2x2x1
jax: 0.10.0
libtpu: 0.0.40
codegen_flags: <defaults>
</compile_context>

<pallas_src>
import functools

import numpy as np
import jax
import jax.numpy as jnp
from jax.experimental import pallas as pl
from jax.experimental.pallas import tpu as pltpu

EPS = 1e-5                               # F.instance_norm default eps
VMEM_LIMIT_BYTES = 32 * 1024 * 1024      # explicit scoped-VMEM cap (safe on v5e/v6e/v7x)
# Set to jnp.bfloat16 on v6e/v7x for ~2x MXU throughput (accumulation stays f32);
# kept at float32 here to preserve the PyTorch reference numerics.
MXU_DTYPE = jnp.float32


# ----------------------------- Pallas kernels -----------------------------

def conv3x3_pass1_kernel(band_ref, w_ref, m_ref, raw_ref, stats_ref,
                         weff_ref, sacc_ref, *, th, w):
    """Modulated 3x3 conv over one row tile + instance-norm statistics.

    band_ref : [1, 3*(th+2)*w, Cin]  halo band, 3 dx-shifted row-major slabs
    w_ref    : [9, Cin, Cout]        base conv weight (per-tap), VMEM-resident
    m_ref    : [9, Cin, Cout]        modulation weight (elementwise)
    raw_ref  : [th*w, Cout]          raw (pre-norm) conv output for this tile
    stats_ref: [2, Cout]             (sum, sum-sq) written once at the last tile
    weff_ref : VMEM [9, Cin, Cout]   modulated weight, computed once at tile 0
    sacc_ref : VMEM [2, Cout]        running per-channel sum / sum-sq
    """
    @pl.when(pl.program_id(0) == 0)
    def _():
        weff_ref[...] = w_ref[...] * m_ref[...]
        sacc_ref[...] = jnp.zeros_like(sacc_ref)

    acc = None
    for dx in range(3):
        for dy in range(3):
            start = dx * (th + 2) * w + dy * w
            xs = band_ref[0, pl.ds(start, th * w), :]            # [th*w, Cin]
            wk = weff_ref[dy * 3 + dx]                           # [Cin, Cout]
            part = jnp.dot(xs.astype(MXU_DTYPE), wk.astype(MXU_DTYPE),
                           preferred_element_type=jnp.float32)
            acc = part if acc is None else acc + part
    raw_ref[...] = acc

    sacc_ref[0:1, :] += jnp.sum(acc, axis=0, keepdims=True)
    sacc_ref[1:2, :] += jnp.sum(acc * acc, axis=0, keepdims=True)

    @pl.when(pl.program_id(0) == pl.num_programs(0) - 1)
    def _():
        stats_ref[...] = sacc_ref[...]


def norm_relu_kernel(raw_ref, stats_ref, out_ref, *, inv_n):
    """Instance norm (biased var, eps=1e-5) + ReLU over one row tile."""
    mean = stats_ref[0:1, :] * inv_n
    var = stats_ref[1:2, :] * inv_n - mean * mean
    rstd = jax.lax.rsqrt(var + EPS)
    out_ref[...] = jnp.maximum((raw_ref[...] - mean) * rstd, 0.0)


def maxpool_kernel(z_ref, o_ref):
    """2x2 max pool; the 4 window taps are stacked on the leading axis."""
    o_ref[...] = jnp.maximum(jnp.maximum(z_ref[0], z_ref[1]),
                             jnp.maximum(z_ref[2], z_ref[3]))


def upsample_kernel(y_ref, uh_ref, uwT_ref, o_ref):
    """Separable bilinear 2x upsample of one channel: U_H @ Y @ U_W^T."""
    t = jnp.dot(uh_ref[...], y_ref[0], preferred_element_type=jnp.float32)   # [2H, W]
    o_ref[0] = jnp.dot(t, uwT_ref[...], preferred_element_type=jnp.float32)  # [2H, 2W]


def conv2_residual_kernel(x_ref, w1_ref, b1_ref, w2_ref, b2_ref, w3_ref, b3_ref,
                          xt_ref, o_ref):
    """Three chained 1x1 convs (channel matmuls) + residual add, one row tile."""
    h = jnp.dot(x_ref[...], w1_ref[...], preferred_element_type=jnp.float32) + b1_ref[...]
    h = jnp.dot(h, w2_ref[...], preferred_element_type=jnp.float32) + b2_ref[...]
    h = jnp.dot(h, w3_ref[...], preferred_element_type=jnp.float32) + b3_ref[...]
    o_ref[...] = h + xt_ref[...]


def dc_kernel(img_ref, ksr_ref, ksi_ref, m_ref,
              ch_ref, sh_ref, cw_ref, sw_ref, o_ref, *, scale):
    """Data-consistency layer for one batch sample (ortho DFT as matmuls)."""
    x = img_ref[0]                        # [H, W]
    CH, SH = ch_ref[...], sh_ref[...]     # [H, H]
    CW, SW = cw_ref[...], sw_ref[...]     # [W, W]

    # K = (1/sqrt(HW)) * F_H x F_W,  F = C - iS,  x real
    A = jnp.dot(CH, x, preferred_element_type=jnp.float32)
    B = jnp.dot(SH, x, preferred_element_type=jnp.float32)
    Kr = (jnp.dot(A, CW, preferred_element_type=jnp.float32)
          - jnp.dot(B, SW, preferred_element_type=jnp.float32)) * scale
    Ki = -(jnp.dot(A, SW, preferred_element_type=jnp.float32)
           + jnp.dot(B, CW, preferred_element_type=jnp.float32)) * scale

    m = m_ref[0]
    Ur = m * ksr_ref[0] + (1.0 - m) * Kr
    Ui = m * ksi_ref[0] + (1.0 - m) * Ki

    # y = (1/sqrt(HW)) * conj(F_H) U conj(F_W), keep Re(y)
    P = (jnp.dot(CH, Ur, preferred_element_type=jnp.float32)
         - jnp.dot(SH, Ui, preferred_element_type=jnp.float32))
    Q = (jnp.dot(CH, Ui, preferred_element_type=jnp.float32)
         + jnp.dot(SH, Ur, preferred_element_type=jnp.float32))
    o_ref[0] = (jnp.dot(P, CW, preferred_element_type=jnp.float32)
                - jnp.dot(Q, SW, preferred_element_type=jnp.float32)) * scale


# ----------------------------- glue helpers -----------------------------

def _w3x3_to_taps(w):
    """[Cout, Cin, 3, 3] -> [9, Cin, Cout], tap index k = ky*3 + kx."""
    cout, cin = w.shape[0], w.shape[1]
    return jnp.transpose(w, (2, 3, 1, 0)).reshape(9, cin, cout)


def _w1x1_to_mat(w):
    """[Cout, Cin, 1, 1] -> [Cin, Cout]."""
    return jnp.transpose(w[:, :, 0, 0], (1, 0))


def _pick_row_tile(h, w, cin, cout, budget_bytes=2 << 20):
    """Largest multiple-of-8 divisor of h whose per-tile working set fits the budget."""
    if h <= 8 or h % 8:
        return h
    best = None
    th = 8
    while th <= h:
        if h % th == 0:
            need = 4 * (3 * (th + 2) * w * cin + 2 * th * w * cout)
            if need <= budget_bytes:
                best = th
        th += 8
    return best if best is not None else 8


def _largest_row_block(n, cap=4096):
    if n <= cap:
        return n
    best = None
    for rt in range(8, cap + 1, 8):
        if n % rt == 0:
            best = rt
    return best if best is not None else n


def _conv_bands(x, th):
    """[H, W, C] -> [NT, 3*(th+2)*W, C] halo row bands for a pad=1 3x3 conv."""
    H, W, C = x.shape
    nt = H // th
    xp = jnp.pad(x, ((1, 1), (1, 1), (0, 0)))                          # [H+2, W+2, C]
    cols = jnp.stack([xp[:, dx:dx + W, :] for dx in range(3)], axis=0)  # [3, H+2, W, C]
    bands = [cols[:, i * th:i * th + th + 2, :, :].reshape(3 * (th + 2) * W, C)
             for i in range(nt)]
    return jnp.stack(bands, axis=0)                                     # [NT, 3*(th+2)*W, C]


def _up1d_matrix(n):
    """1-D matrix for F.interpolate(scale=2, bilinear, align_corners=False)."""
    out = np.zeros((2 * n, n), dtype=np.float32)
    for o in range(2 * n):
        coord = max((o + 0.5) / 2.0 - 0.5, 0.0)
        x0 = int(np.floor(coord))
        w1 = coord - x0
        x1 = min(x0 + 1, n - 1)
        out[o, min(x0, n - 1)] += 1.0 - w1
        out[o, x1] += w1
    return out


_UP_CACHE = {}
def _up_mats(h, w):
    key = (h, w)
    if key not in _UP_CACHE:
        _UP_CACHE[key] = (jnp.asarray(_up1d_matrix(h)),        # [2H, H]
                          jnp.asarray(_up1d_matrix(w).T))      # [W, 2W]
    return _UP_CACHE[key]


_DFT_CACHE = {}
def _dft_mats(h, w):
    key = (h, w)
    if key not in _DFT_CACHE:
        u = np.arange(h)
        v = np.arange(w)
        CH = np.cos(2 * np.pi * np.outer(u, u) / h).astype(np.float32)
        SH = np.sin(2 * np.pi * np.outer(u, u) / h).astype(np.float32)
        CW = np.cos(2 * np.pi * np.outer(v, v) / w).astype(np.float32)
        SW = np.sin(2 * np.pi * np.outer(v, v) / w).astype(np.float32)
        _DFT_CACHE[key] = tuple(jnp.asarray(m) for m in (CH, SH, CW, SW))
    return _DFT_CACHE[key]


# ----------------------------- op wrappers -----------------------------

def apply_conv_block(x, w_taps, mod_taps, row_tile=None):
    """Modulated ConvBlock: conv3x3(pad=1) + instance_norm + relu (+ inert dropout).

    x        : [H, W, Cin]
    w_taps   : [9, Cin, Cout]  base weight (tap-major)
    mod_taps : [9, Cin, Cout]  modulation weight
    Conv bias is intentionally not applied: instance norm's mean subtraction
    cancels a per-channel bias exactly, so the result is identical.
    """
    H, W, Cin = x.shape
    Cout = w_taps.shape[2]
    th = row_tile if row_tile is not None else _pick_row_tile(H, W, Cin, Cout)
    assert H % th == 0, (H, th)
    nt = H // th
    assert nt == 1 or (th * W) % 8 == 0, (th, W)

    bands = _conv_bands(x, th)                     # [nt, 3*(th+2)*W, Cin]
    band_rows = 3 * (th + 2) * W

    raw, stats = pl.pallas_call(
        functools.partial(conv3x3_pass1_kernel, th=th, w=W),
        grid=(nt,),
        in_specs=[
            pl.BlockSpec((1, band_rows, Cin), lambda i: (i, 0, 0)),
            pl.BlockSpec((9, Cin, Cout), lambda i: (0, 0, 0)),   # resident weights
            pl.BlockSpec((9, Cin, Cout), lambda i: (0, 0, 0)),
        ],
        out_specs=(
            pl.BlockSpec((th * W, Cout), lambda i: (i, 0)),
            pl.BlockSpec((2, Cout), lambda i: (0, 0)),
        ),
        out_shape=(
            jax.ShapeDtypeStruct((H * W, Cout), jnp.float32),
            jax.ShapeDtypeStruct((2, Cout), jnp.float32),
        ),
        scratch_shapes=[pltpu.VMEM((9, Cin, Cout), jnp.float32),
                        pltpu.VMEM((2, Cout), jnp.float32)],
        compiler_params=pltpu.CompilerParams(
            dimension_semantics=("arbitrary",),          # stats accumulate over row tiles
            vmem_limit_bytes=VMEM_LIMIT_BYTES),
    )(bands, w_taps, mod_taps)

    out = pl.pallas_call(
        functools.partial(norm_relu_kernel, inv_n=1.0 / float(H * W)),
        grid=(nt,),
        in_specs=[
            pl.BlockSpec((th * W, Cout), lambda i: (i, 0)),
            pl.BlockSpec((2, Cout), lambda i: (0, 0)),
        ],
        out_specs=pl.BlockSpec((th * W, Cout), lambda i: (i, 0)),
        out_shape=jax.ShapeDtypeStruct((H * W, Cout), jnp.float32),
        compiler_params=pltpu.CompilerParams(
            dimension_semantics=("parallel",),
            vmem_limit_bytes=VMEM_LIMIT_BYTES),
    )(raw, stats)
    return out.reshape(H, W, Cout)


def maxpool2x2(y):
    """y: [H, W, C] -> [H//2, W//2, C] (floor mode, matching F.max_pool2d)."""
    # TODO(synk): fuse this into the norm/ReLU epilogue to avoid one HBM round trip.
    H, W, C = y.shape
    H2, W2 = H // 2, W // 2
    y = y[:2 * H2, :2 * W2, :]
    z = y.reshape(H2, 2, W2, 2, C).transpose(1, 3, 0, 2, 4).reshape(4, H2 * W2, C)
    out = pl.pallas_call(
        maxpool_kernel,
        out_shape=jax.ShapeDtypeStruct((H2 * W2, C), y.dtype),
    )(z)
    return out.reshape(H2, W2, C)


def upsample_bilinear_2x(y):
    """y: [H, W, C] -> [2H, 2W, C], separable bilinear (align_corners=False)."""
    H, W, C = y.shape
    uh, uwT = _up_mats(H, W)
    ycf = jnp.transpose(y, (2, 0, 1))               # [C, H, W]
    out = pl.pallas_call(
        upsample_kernel,
        grid=(C,),
        in_specs=[pl.BlockSpec((1, H, W), lambda c: (c, 0, 0)),
                  pl.BlockSpec((2 * H, H), lambda c: (0, 0)),
                  pl.BlockSpec((W, 2 * W), lambda c: (0, 0))],
        out_specs=pl.BlockSpec((1, 2 * H, 2 * W), lambda c: (c, 0, 0)),
        out_shape=jax.ShapeDtypeStruct((C, 2 * H, 2 * W), jnp.float32),
        compiler_params=pltpu.CompilerParams(
            dimension_semantics=("parallel",),
            vmem_limit_bytes=VMEM_LIMIT_BYTES),
    )(ycf, uh, uwT)
    return jnp.transpose(out, (1, 2, 0))            # [2H, 2W, C]


def apply_conv2_residual(x, conv2_mats, xtemp):
    """x: [H, W, C]; three 1x1 convs + residual add with xtemp [H, W, Cin]."""
    H, W, C = x.shape
    (w1, b1), (w2, b2), (w3, b3) = conv2_mats       # wi: [Cin_i, Cout_i]
    out_ch = w3.shape[1]
    cx = xtemp.shape[-1]
    n = H * W
    rt = _largest_row_block(n)
    nt = n // rt

    out = pl.pallas_call(
        conv2_residual_kernel,
        grid=(nt,),
        in_specs=[
            pl.BlockSpec((rt, C), lambda i: (i, 0)),
            pl.BlockSpec(w1.shape, lambda i: (0, 0)),
            pl.BlockSpec((1, w1.shape[1]), lambda i: (0, 0)),
            pl.BlockSpec(w2.shape, lambda i: (0, 0)),
            pl.BlockSpec((1, w2.shape[1]), lambda i: (0, 0)),
            pl.BlockSpec(w3.shape, lambda i: (0, 0)),
            pl.BlockSpec((1, w3.shape[1]), lambda i: (0, 0)),
            pl.BlockSpec((rt, cx), lambda i: (i, 0)),
        ],
        out_specs=pl.BlockSpec((rt, out_ch), lambda i: (i, 0)),
        out_shape=jax.ShapeDtypeStruct((n, out_ch), jnp.float32),
        compiler_params=pltpu.CompilerParams(
            dimension_semantics=("parallel",),
            vmem_limit_bytes=VMEM_LIMIT_BYTES),
    )(x.reshape(n, C), w1, b1.reshape(1, -1), w2, b2.reshape(1, -1),
      w3, b3.reshape(1, -1), xtemp.reshape(n, cx))
    return out.reshape(H, W, out_ch)


def data_consistency_batched(pred, ksp, mask):
    """pred: [B, H, W] real; ksp: [B, H, W, 2]; mask: [B, H, W] -> [B, H, W]."""
    B, H, W = pred.shape
    CH, SH, CW, SW = _dft_mats(H, W)
    scale = 1.0 / float(np.sqrt(H * W))
    return pl.pallas_call(
        functools.partial(dc_kernel, scale=scale),
        grid=(B,),
        in_specs=[pl.BlockSpec((1, H, W), lambda b: (b, 0, 0))] * 4 +
                 [pl.BlockSpec((H, H), lambda b: (0, 0)),
                  pl.BlockSpec((H, H), lambda b: (0, 0)),
                  pl.BlockSpec((W, W), lambda b: (0, 0)),
                  pl.BlockSpec((W, W), lambda b: (0, 0))],
        out_specs=pl.BlockSpec((1, H, W), lambda b: (b, 0, 0)),
        out_shape=jax.ShapeDtypeStruct((B, H, W), jnp.float32),
        compiler_params=pltpu.CompilerParams(
            dimension_semantics=("parallel",),
            vmem_limit_bytes=VMEM_LIMIT_BYTES),
    )(pred.astype(jnp.float32), ksp[..., 0], ksp[..., 1], mask.astype(jnp.float32),
      CH, SH, CW, SW)


# ----------------------------- parameters & forward -----------------------------

def init_params(key, in_chans, out_chans, chans, num_pool_layers):
    """Deterministic synthetic params mirroring the module's __init__ shapes."""
    def conv_param(k, cout, cin, ksz):
        k1, k2 = jax.random.split(k)
        s = 1.0 / np.sqrt(cin * ksz * ksz)
        w = jax.random.uniform(k1, (cout, cin, ksz, ksz), jnp.float32, -s, s)
        b = jax.random.uniform(k2, (cout,), jnp.float32, -s, s)
        return w, b

    keys = iter(jax.random.split(key, 2 * num_pool_layers + 8))
    down = [conv_param(next(keys), chans, in_chans, 3)]
    ch = chans
    for _ in range(num_pool_layers - 1):
        down.append(conv_param(next(keys), ch * 2, ch, 3))
        ch *= 2
    latent = conv_param(next(keys), ch, ch, 3)
    up = []
    for _ in range(num_pool_layers - 1):
        up.append(conv_param(next(keys), ch // 2, ch * 2, 3))
        ch //= 2
    up.append(conv_param(next(keys), ch, ch * 2, 3))
    conv2 = [conv_param(next(keys), ch // 2, ch, 1),
             conv_param(next(keys), out_chans, ch // 2, 1),
             conv_param(next(keys), out_chans, out_chans, 1)]
    return dict(down=down, latent=latent, up=up, conv2=conv2)


def unet_mac_forward(params, us_query_input, ksp_query_imgs, acc_string, mask_string,
                     dataset_type, ksp_mask_query, down_mod_weights,
                     latent_mod_weights, up_mod_weights, num_pool_layers):
    """Matches UnetMACReconNetEncDecKM.forward (dropout inert, eval semantics)."""
    del acc_string, mask_string  # unused, as in the reference forward
    B = us_query_input.shape[0]

    # Hoist per-layer base-weight reshapes (shared across batch samples).
    down_w = [_w3x3_to_taps(params['down'][i][0]) for i in range(num_pool_layers)]
    latent_w = _w3x3_to_taps(params['latent'][0])
    up_w = [_w3x3_to_taps(params['up'][i][0]) for i in range(num_pool_layers)]
    conv2_mats = [(_w1x1_to_mat(w), b) for (w, b) in params['conv2']]

    # TODO(synk): fold the batch loop into a leading 'parallel' grid axis
    # (requires stacking the per-sample modulation weights) for v7x megacore.
    preds = []
    for n in range(B):
        x = jnp.transpose(us_query_input[n], (1, 2, 0))          # [H, W, Cin]
        if dataset_type == 'cardiac':
            # TODO(synk): 'cardiac' pad path only usable when padded dims stay
            # even through the pooling stages (same constraint as PyTorch).
            x = jnp.pad(x, ((5, 5), (5, 5), (0, 0)))
        xtemp = x
        stack = []
        out = x
        for i in range(num_pool_layers):
            out = apply_conv_block(out, down_w[i],
                                   _w3x3_to_taps(down_mod_weights[n][i]))
            stack.append(out)
            out = maxpool2x2(out)
        out = apply_conv_block(out, latent_w, _w3x3_to_taps(latent_mod_weights[n]))
        for i in range(num_pool_layers):
            out = upsample_bilinear_2x(out)
            skip = stack.pop()
            out = jnp.concatenate([out, skip], axis=-1)          # cat([up, skip], channel)
            out = apply_conv_block(out, up_w[i],
                                   _w3x3_to_taps(up_mod_weights[n][i]))
        out = apply_conv2_residual(out, conv2_mats, xtemp)
        if dataset_type == 'cardiac':
            out = out[5:out.shape[0] - 5, 5:out.shape[1] - 5, :]
        preds.append(out[..., 0])                                # channel 0, [H, W]

    pred = jnp.stack(preds, axis=0)                              # [B, H, W]
    dc_out = data_consistency_batched(pred, ksp_query_imgs, ksp_mask_query)
    return dc_out[:, None, :, :]                                 # [B, 1, H, W] (NCHW)


# ----------------------------------- demo -----------------------------------

if __name__ == "__main__":
    key = jax.random.PRNGKey(0)
    B, in_chans, out_chans = 2, 1, 1
    chans, num_pool_layers = 8, 2
    H = W = 16

    k_param, k_x, k_ksp, k_mask, k_mod, k_chk = jax.random.split(key, 6)
    params = init_params(k_param, in_chans, out_chans, chans, num_pool_layers)

    x = jax.random.normal(k_x, (B, in_chans, H, W), jnp.float32)
    ksp = jax.random.normal(k_ksp, (B, H, W, 2), jnp.float32)          # us_kspace (re, im)
    mask = (jax.random.uniform(k_mask, (B, H, W)) > 0.5).astype(jnp.float32)

    # per-sample, per-layer modulation weights with the same shapes as the conv weights
    mod_keys = iter(jax.random.split(k_mod, B * (2 * num_pool_layers + 1)))
    down_mod, latent_mod, up_mod = [], [], []
    for n in range(B):
        down_mod.append([1.0 + 0.1 * jax.random.normal(next(mod_keys),
                                                       params['down'][i][0].shape)
                         for i in range(num_pool_layers)])
        latent_mod.append(1.0 + 0.1 * jax.random.normal(next(mod_keys),
                                                        params['latent'][0].shape))
        up_mod.append([1.0 + 0.1 * jax.random.normal(next(mod_keys),
                                                     params['up'][i][0].shape)
                       for i in range(num_pool_layers)])

    out = unet_mac_forward(params, x, ksp, "acc4x", "cartesian", "knee", mask,
                           down_mod, latent_mod, up_mod, num_pool_layers)
    out = jax.block_until_ready(out)
    assert out.shape == (B, 1, H, W), out.shape
    assert out.dtype == jnp.float32

    # Self-consistency check of the row-tiled conv path: grid=1 vs grid=2 must agree.
    kc1, kc2, kc3 = jax.random.split(k_chk, 3)
    xc = jax.random.normal(kc1, (16, 16, 4), jnp.float32)
    wc = 0.1 * jax.random.normal(kc2, (8, 4, 3, 3), jnp.float32)
    mc = 1.0 + 0.1 * jax.random.normal(kc3, (8, 4, 3, 3), jnp.float32)
    y_one = apply_conv_block(xc, _w3x3_to_taps(wc), _w3x3_to_taps(mc), row_tile=16)
    y_two = apply_conv_block(xc, _w3x3_to_taps(wc), _w3x3_to_taps(mc), row_tile=8)
    y_one, y_two = jax.block_until_ready((y_one, y_two))
    assert np.allclose(np.asarray(y_one), np.asarray(y_two), atol=1e-4, rtol=1e-4), \
        "tiled conv self-consistency check failed"

    print("KERNEL_OK")
</pallas_src>

<mosaic_0001>
module attributes {stable_mosaic.version = 11 : i64} {
  func.func @conv3x3_pass1_kernel(%arg0: i32, %arg1: memref<1x864x1xf32, #tpu.memory_space<vmem>>, %arg2: memref<9x1x8xf32, #tpu.memory_space<vmem>>, %arg3: memref<9x1x8xf32, #tpu.memory_space<vmem>>, %arg4: memref<256x8xf32, #tpu.memory_space<vmem>>, %arg5: memref<2x8xf32, #tpu.memory_space<vmem>>, %arg6: memref<9x1x8xf32, #tpu.memory_space<vmem>>, %arg7: memref<2x8xf32, #tpu.memory_space<vmem>>) attributes {dimension_semantics = [#tpu.dimension_semantics<arbitrary>], iteration_bounds = array<i64: 1>, scalar_prefetch = 0 : i64, scratch_operands = 2 : i64, tpu.core_type = #tpu.core_type<tc>, window_params = [{transform_indices = @transform_0, window_bounds = array<i64: 1, 864, 1>}, {pipeline_mode = #tpu.pipeline_mode<synchronous>, transform_indices = @transform_1, window_bounds = array<i64: 9, 1, 8>}, {pipeline_mode = #tpu.pipeline_mode<synchronous>, transform_indices = @transform_2, window_bounds = array<i64: 9, 1, 8>}, {transform_indices = @transform_3, window_bounds = array<i64: 256, 8>}, {pipeline_mode = #tpu.pipeline_mode<synchronous>, transform_indices = @transform_4, window_bounds = array<i64: 2, 8>}]} {
    %c0_i32 = arith.constant 0 : i32
    %0 = arith.cmpi eq, %arg0, %c0_i32 : i32
    %1 = arith.extui %0 : i1 to i32
    %c0_i32_0 = arith.constant 0 : i32
    %2 = arith.cmpi ne, %1, %c0_i32_0 : i32
    scf.if %2 {
      %c0_60 = arith.constant 0 : index
      %c0_61 = arith.constant 0 : index
      %c0_62 = arith.constant 0 : index
      %71 = vector.load %arg2[%c0_60, %c0_61, %c0_62] : memref<9x1x8xf32, #tpu.memory_space<vmem>>, vector<9x1x8xf32>
      %c0_63 = arith.constant 0 : index
      %c0_64 = arith.constant 0 : index
      %c0_65 = arith.constant 0 : index
      %72 = vector.load %arg3[%c0_63, %c0_64, %c0_65] : memref<9x1x8xf32, #tpu.memory_space<vmem>>, vector<9x1x8xf32>
      %73 = arith.mulf %71, %72 : vector<9x1x8xf32>
      %c0_66 = arith.constant 0 : index
      %c0_67 = arith.constant 0 : index
      %c0_68 = arith.constant 0 : index
      %74 = vector.load %arg6[%c0_66, %c0_67, %c0_68] : memref<9x1x8xf32, #tpu.memory_space<vmem>>, vector<9x1x8xf32>
      tpu.vector_store %arg6[%c0_66, %c0_67, %c0_68], %73 {strides = array<i32>} : memref<9x1x8xf32, #tpu.memory_space<vmem>>, vector<9x1x8xf32>,
      %cst_69 = arith.constant 0.000000e+00 : f32
      %75 = vector.broadcast %cst_69 : f32 to vector<2x8xf32>
      %c0_70 = arith.constant 0 : index
      %c0_71 = arith.constant 0 : index
      %76 = vector.load %arg7[%c0_70, %c0_71] : memref<2x8xf32, #tpu.memory_space<vmem>>, vector<2x8xf32>
      tpu.vector_store %arg7[%c0_70, %c0_71], %75 {strides = array<i32>} : memref<2x8xf32, #tpu.memory_space<vmem>>, vector<2x8xf32>,
    } else {
    }
    %c0 = arith.constant 0 : index
    %c0_1 = arith.constant 0 : index
    %c0_2 = arith.constant 0 : index
    %3 = vector.load %arg1[%c0, %c0_1, %c0_2] : memref<1x864x1xf32, #tpu.memory_space<vmem>>, vector<1x256x1xf32>
    %4 = vector.shape_cast %3 : vector<1x256x1xf32> to vector<256x1xf32>
    %c0_3 = arith.constant 0 : index
    %c0_4 = arith.constant 0 : index
    %c0_5 = arith.constant 0 : index
    %5 = vector.load %arg6[%c0_3, %c0_4, %c0_5] : memref<9x1x8xf32, #tpu.memory_space<vmem>>, vector<1x1x8xf32>
    %6 = vector.shape_cast %5 : vector<1x1x8xf32> to vector<1x8xf32>
    %cst = arith.constant dense<0.000000e+00> : vector<256x8xf32>
    %7 = tpu.matmul %4, %6, %cst {dimension_numbers = #tpu.dot_dimension_numbers<[1], [0], [0], [1], [0, 0, 1, 1], [], []>} : vector<256x1xf32>, vector<1x8xf32>, vector<256x8xf32> -> vector<256x8xf32>
    %c0_6 = arith.constant 0 : index
    %c16 = arith.constant 16 : index
    %c0_7 = arith.constant 0 : index
    %8 = vector.load %arg1[%c0_6, %c16, %c0_7] : memref<1x864x1xf32, #tpu.memory_space<vmem>>, vector<1x256x1xf32>
    %9 = vector.shape_cast %8 : vector<1x256x1xf32> to vector<256x1xf32>
    %c3 = arith.constant 3 : index
    %c0_8 = arith.constant 0 : index
    %c0_9 = arith.constant 0 : index
    %10 = vector.load %arg6[%c3, %c0_8, %c0_9] : memref<9x1x8xf32, #tpu.memory_space<vmem>>, vector<1x1x8xf32>
    %11 = vector.shape_cast %10 : vector<1x1x8xf32> to vector<1x8xf32>
    %cst_10 = arith.constant dense<0.000000e+00> : vector<256x8xf32>
    %12 = tpu.matmul %9, %11, %cst_10 {dimension_numbers = #tpu.dot_dimension_numbers<[1], [0], [0], [1], [0, 0, 1, 1], [], []>} : vector<256x1xf32>, vector<1x8xf32>, vector<256x8xf32> -> vector<256x8xf32>
    %13 = arith.addf %7, %12 : vector<256x8xf32>
    %c0_11 = arith.constant 0 : index
    %c32 = arith.constant 32 : index
    %c0_12 = arith.constant 0 : index
    %14 = vector.load %arg1[%c0_11, %c32, %c0_12] : memref<1x864x1xf32, #tpu.memory_space<vmem>>, vector<1x256x1xf32>
    %15 = vector.shape_cast %14 : vector<1x256x1xf32> to vector<256x1xf32>
    %c6 = arith.constant 6 : index
    %c0_13 = arith.constant 0 : index
    %c0_14 = arith.constant 0 : index
    %16 = vector.load %arg6[%c6, %c0_13, %c0_14] : memref<9x1x8xf32, #tpu.memory_space<vmem>>, vector<1x1x8xf32>
    %17 = vector.shape_cast %16 : vector<1x1x8xf32> to vector<1x8xf32>
    %cst_15 = arith.constant dense<0.000000e+00> : vector<256x8xf32>
    %18 = tpu.matmul %15, %17, %cst_15 {dimension_numbers = #tpu.dot_dimension_numbers<[1], [0], [0], [1], [0, 0, 1, 1], [], []>} : vector<256x1xf32>, vector<1x8xf32>, vector<256x8xf32> -> vector<256x8xf32>
    %19 = arith.addf %13, %18 : vector<256x8xf32>
    %c0_16 = arith.constant 0 : index
    %c288 = arith.constant 288 : index
    %c0_17 = arith.constant 0 : index
    %20 = vector.load %arg1[%c0_16, %c288, %c0_17] : memref<1x864x1xf32, #tpu.memory_space<vmem>>, vector<1x256x1xf32>
    %21 = vector.shape_cast %20 : vector<1x256x1xf32> to vector<256x1xf32>
    %c1 = arith.constant 1 : index
    %c0_18 = arith.constant 0 : index
    %c0_19 = arith.constant 0 : index
    %22 = vector.load %arg6[%c1, %c0_18, %c0_19] : memref<9x1x8xf32, #tpu.memory_space<vmem>>, vector<1x1x8xf32>
    %23 = vector.shape_cast %22 : vector<1x1x8xf32> to vector<1x8xf32>
    %cst_20 = arith.constant dense<0.000000e+00> : vector<256x8xf32>
    %24 = tpu.matmul %21, %23, %cst_20 {dimension_numbers = #tpu.dot_dimension_numbers<[1], [0], [0], [1], [0, 0, 1, 1], [], []>} : vector<256x1xf32>, vector<1x8xf32>, vector<256x8xf32> -> vector<256x8xf32>
    %25 = arith.addf %19, %24 : vector<256x8xf32>
    %c0_21 = arith.constant 0 : index
    %c304 = arith.constant 304 : index
    %c0_22 = arith.constant 0 : index
    %26 = vector.load %arg1[%c0_21, %c304, %c0_22] : memref<1x864x1xf32, #tpu.memory_space<vmem>>, vector<1x256x1xf32>
    %27 = vector.shape_cast %26 : vector<1x256x1xf32> to vector<256x1xf32>
    %c4 = arith.constant 4 : index
    %c0_23 = arith.constant 0 : index
    %c0_24 = arith.constant 0 : index
    %28 = vector.load %arg6[%c4, %c0_23, %c0_24] : memref<9x1x8xf32, #tpu.memory_space<vmem>>, vector<1x1x8xf32>
    %29 = vector.shape_cast %28 : vector<1x1x8xf32> to vector<1x8xf32>
    %cst_25 = arith.constant dense<0.000000e+00> : vector<256x8xf32>
    %30 = tpu.matmul %27, %29, %cst_25 {dimension_numbers = #tpu.dot_dimension_numbers<[1], [0], [0], [1], [0, 0, 1, 1], [], []>} : vector<256x1xf32>, vector<1x8xf32>, vector<256x8xf32> -> vector<256x8xf32>
    %31 = arith.addf %25, %30 : vector<256x8xf32>
    %c0_26 = arith.constant 0 : index
    %c320 = arith.constant 320 : index
    %c0_27 = arith.constant 0 : index
    %32 = vector.load %arg1[%c0_26, %c320, %c0_27] : memref<1x864x1xf32, #tpu.memory_space<vmem>>, vector<1x256x1xf32>
    %33 = vector.shape_cast %32 : vector<1x256x1xf32> to vector<256x1xf32>
    %c7 = arith.constant 7 : index
    %c0_28 = arith.constant 0 : index
    %c0_29 = arith.constant 0 : index
    %34 = vector.load %arg6[%c7, %c0_28, %c0_29] : memref<9x1x8xf32, #tpu.memory_space<vmem>>, vector<1x1x8xf32>
    %35 = vector.shape_cast %34 : vector<1x1x8xf32> to vector<1x8xf32>
    %cst_30 = arith.constant dense<0.000000e+00> : vector<256x8xf32>
    %36 = tpu.matmul %33, %35, %cst_30 {dimension_numbers = #tpu.dot_dimension_numbers<[1], [0], [0], [1], [0, 0, 1, 1], [], []>} : vector<256x1xf32>, vector<1x8xf32>, vector<256x8xf32> -> vector<256x8xf32>
    %37 = arith.addf %31, %36 : vector<256x8xf32>
    %c0_31 = arith.constant 0 : index
    %c576 = arith.constant 576 : index
    %c0_32 = arith.constant 0 : index
    %38 = vector.load %arg1[%c0_31, %c576, %c0_32] : memref<1x864x1xf32, #tpu.memory_space<vmem>>, vector<1x256x1xf32>
    %39 = vector.shape_cast %38 : vector<1x256x1xf32> to vector<256x1xf32>
    %c2 = arith.constant 2 : index
    %c0_33 = arith.constant 0 : index
    %c0_34 = arith.constant 0 : index
    %40 = vector.load %arg6[%c2, %c0_33, %c0_34] : memref<9x1x8xf32, #tpu.memory_space<vmem>>, vector<1x1x8xf32>
    %41 = vector.shape_cast %40 : vector<1x1x8xf32> to vector<1x8xf32>
    %cst_35 = arith.constant dense<0.000000e+00> : vector<256x8xf32>
    %42 = tpu.matmul %39, %41, %cst_35 {dimension_numbers = #tpu.dot_dimension_numbers<[1], [0], [0], [1], [0, 0, 1, 1], [], []>} : vector<256x1xf32>, vector<1x8xf32>, vector<256x8xf32> -> vector<256x8xf32>
    %43 = arith.addf %37, %42 : vector<256x8xf32>
    %c0_36 = arith.constant 0 : index
    %c592 = arith.constant 592 : index
    %c0_37 = arith.constant 0 : index
    %44 = vector.load %arg1[%c0_36, %c592, %c0_37] : memref<1x864x1xf32, #tpu.memory_space<vmem>>, vector<1x256x1xf32>
    %45 = vector.shape_cast %44 : vector<1x256x1xf32> to vector<256x1xf32>
    %c5 = arith.constant 5 : index
    %c0_38 = arith.constant 0 : index
    %c0_39 = arith.constant 0 : index
    %46 = vector.load %arg6[%c5, %c0_38, %c0_39] : memref<9x1x8xf32, #tpu.memory_space<vmem>>, vector<1x1x8xf32>
    %47 = vector.shape_cast %46 : vector<1x1x8xf32> to vector<1x8xf32>
    %cst_40 = arith.constant dense<0.000000e+00> : vector<256x8xf32>
    %48 = tpu.matmul %45, %47, %cst_40 {dimension_numbers = #tpu.dot_dimension_numbers<[1], [0], [0], [1], [0, 0, 1, 1], [], []>} : vector<256x1xf32>, vector<1x8xf32>, vector<256x8xf32> -> vector<256x8xf32>
    %49 = arith.addf %43, %48 : vector<256x8xf32>
    %c0_41 = arith.constant 0 : index
    %c608 = arith.constant 608 : index
    %c0_42 = arith.constant 0 : index
    %50 = vector.load %arg1[%c0_41, %c608, %c0_42] : memref<1x864x1xf32, #tpu.memory_space<vmem>>, vector<1x256x1xf32>
    %51 = vector.shape_cast %50 : vector<1x256x1xf32> to vector<256x1xf32>
    %c8 = arith.constant 8 : index
    %c0_43 = arith.constant 0 : index
    %c0_44 = arith.constant 0 : index
    %52 = vector.load %arg6[%c8, %c0_43, %c0_44] : memref<9x1x8xf32, #tpu.memory_space<vmem>>, vector<1x1x8xf32>
    %53 = vector.shape_cast %52 : vector<1x1x8xf32> to vector<1x8xf32>
    %cst_45 = arith.constant dense<0.000000e+00> : vector<256x8xf32>
    %54 = tpu.matmul %51, %53, %cst_45 {dimension_numbers = #tpu.dot_dimension_numbers<[1], [0], [0], [1], [0, 0, 1, 1], [], []>} : vector<256x1xf32>, vector<1x8xf32>, vector<256x8xf32> -> vector<256x8xf32>
    %55 = arith.addf %49, %54 : vector<256x8xf32>
    %c0_46 = arith.constant 0 : index
    %c0_47 = arith.constant 0 : index
    %56 = vector.load %arg4[%c0_46, %c0_47] : memref<256x8xf32, #tpu.memory_space<vmem>>, vector<256x8xf32>
    tpu.vector_store %arg4[%c0_46, %c0_47], %55 {strides = array<i32>} : memref<256x8xf32, #tpu.memory_space<vmem>>, vector<256x8xf32>,
    %c0_48 = arith.constant 0 : index
    %c0_49 = arith.constant 0 : index
    %57 = vector.load %arg7[%c0_48, %c0_49] : memref<2x8xf32, #tpu.memory_space<vmem>>, vector<1x8xf32>
    %cst_50 = arith.constant dense<0.000000e+00> : vector<8xf32>
    %58 = vector.multi_reduction <add>, %55, %cst_50 [0] : vector<256x8xf32> to vector<8xf32>
    %59 = vector.shape_cast %58 : vector<8xf32> to vector<1x8xf32>
    %60 = arith.addf %57, %59 : vector<1x8xf32>
    %c0_51 = arith.constant 0 : index
    %c0_52 = arith.constant 0 : index
    %61 = vector.load %arg7[%c0_51, %c0_52] : memref<2x8xf32, #tpu.memory_space<vmem>>, vector<1x8xf32>
    tpu.vector_store %arg7[%c0_51, %c0_52], %60 {strides = array<i32>} : memref<2x8xf32, #tpu.memory_space<vmem>>, vector<1x8xf32>,
    %c1_53 = arith.constant 1 : index
    %c0_54 = arith.constant 0 : index
    %62 = vector.load %arg7[%c1_53, %c0_54] : memref<2x8xf32, #tpu.memory_space<vmem>>, vector<1x8xf32>
    %63 = arith.mulf %55, %55 : vector<256x8xf32>
    %cst_55 = arith.constant dense<0.000000e+00> : vector<8xf32>
    %64 = vector.multi_reduction <add>, %63, %cst_55 [0] : vector<256x8xf32> to vector<8xf32>
    %65 = vector.shape_cast %64 : vector<8xf32> to vector<1x8xf32>
    %66 = arith.addf %62, %65 : vector<1x8xf32>
    %c1_56 = arith.constant 1 : index
    %c0_57 = arith.constant 0 : index
    %67 = vector.load %arg7[%c1_56, %c0_57] : memref<2x8xf32, #tpu.memory_space<vmem>>, vector<1x8xf32>
    tpu.vector_store %arg7[%c1_56, %c0_57], %66 {strides = array<i32>} : memref<2x8xf32, #tpu.memory_space<vmem>>, vector<1x8xf32>,
    %c0_i32_58 = arith.constant 0 : i32
    %68 = arith.cmpi eq, %arg0, %c0_i32_58 : i32
    %69 = arith.extui %68 : i1 to i32
    %c0_i32_59 = arith.constant 0 : i32
    %70 = arith.cmpi ne, %69, %c0_i32_59 : i32
    scf.if %70 {
      %c0_60 = arith.constant 0 : index
      %c0_61 = arith.constant 0 : index
      %71 = vector.load %arg7[%c0_60, %c0_61] : memref<2x8xf32, #tpu.memory_space<vmem>>, vector<2x8xf32>
      %c0_62 = arith.constant 0 : index
      %c0_63 = arith.constant 0 : index
      %72 = vector.load %arg5[%c0_62, %c0_63] : memref<2x8xf32, #tpu.memory_space<vmem>>, vector<2x8xf32>
      tpu.vector_store %arg5[%c0_62, %c0_63], %71 {strides = array<i32>} : memref<2x8xf32, #tpu.memory_space<vmem>>, vector<2x8xf32>,
    } else {
    }
    return
  }
  func.func @transform_0(%arg0: i32) -> (i32, i32, i32) {
    %c0_i32 = arith.constant 0 : i32
    %c0_i32_0 = arith.constant 0 : i32
    %c0_i32_1 = arith.constant 0 : i32
    return %arg0, %c0_i32, %c0_i32_0 : i32, i32, i32
  }
  func.func @transform_1(%arg0: i32) -> (i32, i32, i32) {
    %c0_i32 = arith.constant 0 : i32
    %c0_i32_0 = arith.constant 0 : i32
    %c0_i32_1 = arith.constant 0 : i32
    %c0_i32_2 = arith.constant 0 : i32
    return %c0_i32, %c0_i32_0, %c0_i32_1 : i32, i32, i32
  }
  func.func @transform_2(%arg0: i32) -> (i32, i32, i32) {
    %c0_i32 = arith.constant 0 : i32
    %c0_i32_0 = arith.constant 0 : i32
    %c0_i32_1 = arith.constant 0 : i32
    %c0_i32_2 = arith.constant 0 : i32
    return %c0_i32, %c0_i32_0, %c0_i32_1 : i32, i32, i32
  }
  func.func @transform_3(%arg0: i32) -> (i32, i32) {
    %c0_i32 = arith.constant 0 : i32
    %c0_i32_0 = arith.constant 0 : i32
    return %arg0, %c0_i32 : i32, i32
  }
  func.func @transform_4(%arg0: i32) -> (i32, i32) {
    %c0_i32 = arith.constant 0 : i32
    %c0_i32_0 = arith.constant 0 : i32
    %c0_i32_1 = arith.constant 0 : i32
    return %c0_i32, %c0_i32_0 : i32, i32
  }
}

</mosaic_0001>

<llo_original>
// kernel: tpu_custom_call.1
$region0: #{tpu_custom_call.1}
  #allocation0 [shape = 'u32[]', space=smem, size = 0x4, offset = 0x4, fixed_abs, tag = 'smem constant byte address 0x4 - core index']
  #allocation1 [shape = 'u32[144,128]{1,0:T(1,128)}', space=vmem, size = 0x12000, scoped, tag = 'internal scratch']
  #allocation2 [shape = 'f32[9,1,8]{2,1,0:T(1,128)}', space=vmem, size = 0x1200, scoped, tag = 'scratch operand']
  #allocation3 [shape = 'f32[2,8]{1,0:T(2,128)}', space=vmem, size = 0x400, scoped, tag = 'scratch operand']
  %s0 = inlined_call_operand.vmem [shape: f32[1,864,1], index: 0, kind: input, shape index: {}]
  %s1 = inlined_call_operand.vmem [shape: f32[9,1,8], index: 1, kind: input, shape index: {}]
  %s2 = inlined_call_operand.vmem [shape: f32[9,1,8], index: 2, kind: input, shape index: {}]
  %s3 = inlined_call_operand.vmem [shape: f32[256,8], index: 3, kind: output, shape index: {0}]
  %s4 = inlined_call_operand.hbm [shape: f32[2,8], index: 4, kind: output, shape index: {1}]
  %5 = xla_tuple %s3, %s4
  %s6 = sld [smem:[#allocation0]]
  $region38: #{tpu_custom_call.1} parent=0
    _
  %s8 = ssub.s32 1, %s6
  %s9 = scalar_select 0, %s8, %s6
  $region1: #{tpu_custom_call.1} parent=0
    #allocation4 [shape = 'u8[1024]{0}', space=vmem, size = 0x400, scoped, tag = 'output window, operand 1, single buffered']
    #allocation5 [shape = 's32[1]{0}', space=sflag, size = 0x4, scoped, tag = 'scoped memory for tpu_custom_call.1']
    %10 = vsyncpa [#allocation5], 0
    // Predicated region
    $region2: #{tpu_custom_call.1} parent=1 // pred_check
      _
    $region3: #{tpu_custom_call.1} parent=1 // pred_check_branch
      %12 = sbr.rel (0) target = $region5
    $region4: #{tpu_custom_call.1} parent=1 // pred_region
      _
    $region5: #{tpu_custom_call.1} parent=1 // pred_fallthru
      _
    // Predicated region
    $region6: #{tpu_custom_call.1} parent=1 // pred_check
      _
    $region7: #{tpu_custom_call.1} parent=1 // pred_check_branch
      %14 = sbr.rel (0) target = $region9
    $region8: #{tpu_custom_call.1} parent=1 // pred_region
      _
    $region9: #{tpu_custom_call.1} parent=1 // pred_fallthru
      _
    // Predicated region
    $region10: #{tpu_custom_call.1} parent=1 // pred_check
      _
    $region11: #{tpu_custom_call.1} parent=1 // pred_check_branch
      %16 = sbr.rel (0) target = $region13
    $region12: #{tpu_custom_call.1} parent=1 // pred_region
      _
    $region13: #{tpu_custom_call.1} parent=1 // pred_fallthru
      _
    %p17 = scmp.eq.s32.totalorder 0, 0
    // Predicated region
    $region14: #{tpu_custom_call.1} parent=1 // pred_check
      %p18 = pneg %p17
    $region15: #{tpu_custom_call.1} parent=1 // pred_check_branch
      %20 = sbr.rel (%p18) target = $region17
    $region16: #{tpu_custom_call.1} parent=1 // pred_region
      %v21 = vld [vmem:[%s1] sm:$0x1]
      %v22 = vld [vmem:[%s1 + $0x1] sm:$0x1]
      %v23 = vld [vmem:[%s1 + $0x2] sm:$0x1]
      %v24 = vld [vmem:[%s1 + $0x3] sm:$0x1]
      %v25 = vld [vmem:[%s1 + $0x4] sm:$0x1]
      %v26 = vld [vmem:[%s1 + $0x5] sm:$0x1]
      %v27 = vld [vmem:[%s1 + $0x6] sm:$0x1]
      %v28 = vld [vmem:[%s1 + $0x7] sm:$0x1]
      %v29 = vld [vmem:[%s1 + $0x8] sm:$0x1]
      %v30 = vld [vmem:[%s2] sm:$0x1]
      %v31 = vld [vmem:[%s2 + $0x1] sm:$0x1]
      %v32 = vld [vmem:[%s2 + $0x2] sm:$0x1]
      %v33 = vld [vmem:[%s2 + $0x3] sm:$0x1]
      %v34 = vld [vmem:[%s2 + $0x4] sm:$0x1]
      %v35 = vld [vmem:[%s2 + $0x5] sm:$0x1]
      %v36 = vld [vmem:[%s2 + $0x6] sm:$0x1]
      %v37 = vld [vmem:[%s2 + $0x7] sm:$0x1]
      %v38 = vld [vmem:[%s2 + $0x8] sm:$0x1]
      %v39 = vmul.f32 %v21, %v30
      %v40 = vmul.f32 %v22, %v31
      %v41 = vmul.f32 %v23, %v32
      %v42 = vmul.f32 %v24, %v33
      %v43 = vmul.f32 %v25, %v34
      %v44 = vmul.f32 %v26, %v35
      %v45 = vmul.f32 %v27, %v36
      %v46 = vmul.f32 %v28, %v37
      %v47 = vmul.f32 %v29, %v38
      %vm48 = vcmask 57344
      %49 = vst.msk [vmem:[#allocation2] sm:$0x1] %vm48, %v39
      %50 = vst.msk [vmem:[#allocation2 + $0x1] sm:$0x1] %vm48, %v40
      %51 = vst.msk [vmem:[#allocation2 + $0x2] sm:$0x1] %vm48, %v41
      %52 = vst.msk [vmem:[#allocation2 + $0x3] sm:$0x1] %vm48, %v42
      %53 = vst.msk [vmem:[#allocation2 + $0x4] sm:$0x1] %vm48, %v43
      %54 = vst.msk [vmem:[#allocation2 + $0x5] sm:$0x1] %vm48, %v44
      %55 = vst.msk [vmem:[#allocation2 + $0x6] sm:$0x1] %vm48, %v45
      %56 = vst.msk [vmem:[#allocation2 + $0x7] sm:$0x1] %vm48, %v46
      %57 = vst.msk [vmem:[#allocation2 + $0x8] sm:$0x1] %vm48, %v47
      %vm58 = vcmask 58368
      %59 = vst.msk [vmem:[#allocation3] sm:$0x3] %vm58, 0.0
    $region17: #{tpu_custom_call.1} parent=1 // pred_fallthru
      _
    %v60 = vld [vmem:[%s0] sm:$0xff]
    %v61 = vld [vmem:[%s0 + $0x8] sm:$0xff]
    %v62 = vld [vmem:[%s0 + $0x10] sm:$0xff]
    %v63 = vld [vmem:[%s0 + $0x18] sm:$0xff]
    %v64 = vld [vmem:[%s0 + $0x20] sm:$0xff]
    %v65 = vld [vmem:[%s0 + $0x28] sm:$0xff]
    %v66 = vld [vmem:[%s0 + $0x30] sm:$0xff]
    %v67 = vld [vmem:[%s0 + $0x38] sm:$0xff]
    %v68 = vld [vmem:[%s0 + $0x40] sm:$0xff]
    %v69 = vld [vmem:[%s0 + $0x48] sm:$0xff]
    %v70 = vld [vmem:[%s0 + $0x50] sm:$0xff]
    %v71 = vld [vmem:[%s0 + $0x58] sm:$0xff]
    %v72 = vld [vmem:[%s0 + $0x60] sm:$0xff]
    %v73 = vld [vmem:[%s0 + $0x68] sm:$0xff]
    %v74 = vld [vmem:[%s0 + $0x70] sm:$0xff]
    %v75 = vld [vmem:[%s0 + $0x78] sm:$0xff]
    %v76 = vld [vmem:[%s0 + $0x80] sm:$0xff]
    %v77 = vld [vmem:[%s0 + $0x88] sm:$0xff]
    %v78 = vld [vmem:[%s0 + $0x90] sm:$0xff]
    %v79 = vld [vmem:[%s0 + $0x98] sm:$0xff]
    %v80 = vld [vmem:[%s0 + $0xa0] sm:$0xff]
    %v81 = vld [vmem:[%s0 + $0xa8] sm:$0xff]
    %v82 = vld [vmem:[%s0 + $0xb0] sm:$0xff]
    %v83 = vld [vmem:[%s0 + $0xb8] sm:$0xff]
    %v84 = vld [vmem:[%s0 + $0xc0] sm:$0xff]
    %v85 = vld [vmem:[%s0 + $0xc8] sm:$0xff]
    %v86 = vld [vmem:[%s0 + $0xd0] sm:$0xff]
    %v87 = vld [vmem:[%s0 + $0xd8] sm:$0xff]
    %v88 = vld [vmem:[%s0 + $0xe0] sm:$0xff]
    %v89 = vld [vmem:[%s0 + $0xe8] sm:$0xff]
    %v90 = vld [vmem:[%s0 + $0xf0] sm:$0xff]
    %v91 = vld [vmem:[%s0 + $0xf8] sm:$0xff]
    %v92 = vld [vmem:[#allocation2] sm:$0x1]
    %v93 = vld [vmem:[%s0 + $0x100] sm:$0xff]
    %v94 = vld [vmem:[%s0 + $0x108] sm:$0xff]
    %s95 = scalar_lea.vmem [#allocation2], 3
    %v96 = vld [vmem:[%s95] sm:$0x1]
    %vm97 = vcmask 7168
    %v99 = vsel %vm97, %v62, 0
    %v102 = vsel %vm97, %v63, 0
    %v105 = vsel %vm97, %v64, 0
    %v108 = vsel %vm97, %v65, 0
    %v111 = vsel %vm97, %v66, 0
    %v114 = vsel %vm97, %v67, 0
    %v117 = vsel %vm97, %v68, 0
    %v120 = vsel %vm97, %v69, 0
    %v123 = vsel %vm97, %v70, 0
    %v126 = vsel %vm97, %v71, 0
    %v129 = vsel %vm97, %v72, 0
    %v132 = vsel %vm97, %v73, 0
    %v135 = vsel %vm97, %v74, 0
    %v138 = vsel %vm97, %v75, 0
    %v141 = vsel %vm97, %v76, 0
    %v144 = vsel %vm97, %v77, 0
    %v147 = vsel %vm97, %v78, 0
    %v150 = vsel %vm97, %v79, 0
    %v153 = vsel %vm97, %v80, 0
    %v156 = vsel %vm97, %v81, 0
    %v159 = vsel %vm97, %v82, 0
    %v162 = vsel %vm97, %v83, 0
    %v165 = vsel %vm97, %v84, 0
    %v168 = vsel %vm97, %v85, 0
    %v171 = vsel %vm97, %v86, 0
    %v174 = vsel %vm97, %v87, 0
    %v177 = vsel %vm97, %v88, 0
    %v180 = vsel %vm97, %v89, 0
    %v183 = vsel %vm97, %v90, 0
    %v186 = vsel %vm97, %v91, 0
    %v189 = vsel %vm97, %v93, 0
    %v192 = vsel %vm97, %v94, 0
    %vm194 = vcmask 1040384
    %v196 = vsel %vm194, %v96, 0
    %198 = vmatprep.subr.mxu0 0.0
    %199 = vmatpush1.msra.mxu0 %v196
    %200 = vmatprep.subr.mxu0 0.0
    %201 = vmatpush1.msra.mxu0 0.0
    %202 = vmatprep.subr.mxu0 0.0
    %203 = vmatpush1.msra.mxu0 0.0
    %204 = vmatprep.subr.mxu0 0.0
    %205 = vmatpush1.msra.mxu0 0.0
    %206 = vmatprep.subr.mxu0 0.0
    %207 = vmatpush1.msra.mxu0 0.0
    %208 = vmatprep.subr.mxu0 0.0
    %209 = vmatpush1.msra.mxu0 0.0
    %210 = vmatprep.subr.mxu0 0.0
    %211 = vmatpush1.msra.mxu0 0.0
    %212 = vmatprep.subr.mxu0 0.0
    %213 = vmatpush1.msra.mxu0 0.0
    %214 = vmatprep.subr.mxu0 0.0
    %215 = vmatpush1.msra.mxu0 0.0
    %216 = vmatprep.subr.mxu0 0.0
    %217 = vmatpush1.msra.mxu0 0.0
    %218 = vmatprep.subr.mxu0 0.0
    %219 = vmatpush1.msra.mxu0 0.0
    %220 = vmatprep.subr.mxu0 0.0
    %221 = vmatpush1.msra.mxu0 0.0
    %222 = vmatprep.subr.mxu0 0.0
    %223 = vmatpush1.msra.mxu0 0.0
    %224 = vmatprep.subr.mxu0 0.0
    %225 = vmatpush1.msra.mxu0 0.0
    %226 = vmatprep.subr.mxu0 0.0
    %227 = vmatpush1.msra.mxu0 0.0
    %228 = vmatprep.subr.mxu0 0.0
    %229 = vmatpush1.msra.mxu0 0.0
    %230 = vmatprep.subr.mxu0 0.0
    %231 = vmatpush1.msra.mxu0 0.0
    %232 = vmatprep.subr.mxu0 0.0
    %233 = vmatpush1.msra.mxu0 0.0
    %234 = vmatprep.subr.mxu0 0.0
    %235 = vmatpush1.msra.mxu0 0.0
    %236 = vmatprep.subr.mxu0 0.0
    %237 = vmatpush1.msra.mxu0 0.0
    %238 = vmatprep.subr.mxu0 0.0
    %239 = vmatpush1.msra.mxu0 0.0
    %240 = vmatprep.subr.mxu0 0.0
    %241 = vmatpush1.msra.mxu0 0.0
    %242 = vmatprep.subr.mxu0 0.0
    %243 = vmatpush1.msra.mxu0 0.0
    %244 = vmatprep.subr.mxu0 0.0
    %245 = vmatpush1.msra.mxu0 0.0
    %246 = vmatprep.subr.mxu0 0.0
    %247 = vmatpush1.msra.mxu0 0.0
    %248 = vmatprep.subr.mxu0 0.0
    %249 = vmatpush1.msra.mxu0 0.0
    %250 = vmatprep.subr.mxu0 0.0
    %251 = vmatpush1.msra.mxu0 0.0
    %252 = vmatprep.subr.mxu0 0.0
    %253 = vmatpush1.msra.mxu0 0.0
    %254 = vmatprep.subr.mxu0 0.0
    %255 = vmatpush1.msra.mxu0 0.0
    %256 = vmatprep.subr.mxu0 0.0
    %257 = vmatpush1.msra.mxu0 0.0
    %258 = vmatprep.subr.mxu0 0.0
    %259 = vmatpush1.msra.mxu0 0.0
    %260 = vmatprep.subr.mxu0 0.0
    %261 = vmatpush1.msra.mxu0 0.0
    %262 = vmatprep.mubr.f32.mxu0 0.0
    %263 = vmatmul.mubr.f32.gmra.mrb[0].mxu0 %v99
    %v264 = vpop.f32.mrb[0].mxu0
    %v265 = vadd.f32 0.0, %v264
    %v266 = vpop.f32.mrb[0].mxu0
    %267 = vmatprep.mubr.f32.mxu0 0.0
    %268 = vmatmul.mubr.f32.gmra.mrb[0].mxu0 %v102
    %v269 = vpop.f32.mrb[0].mxu0
    %v270 = vadd.f32 0.0, %v269
    %v271 = vpop.f32.mrb[0].mxu0
    %272 = vmatprep.mubr.f32.mxu0 0.0
    %273 = vmatmul.mubr.f32.gmra.mrb[0].mxu0 %v105
    %v274 = vpop.f32.mrb[0].mxu0
    %v275 = vadd.f32 0.0, %v274
    %v276 = vpop.f32.mrb[0].mxu0
    %277 = vmatprep.mubr.f32.mxu0 0.0
    %278 = vmatmul.mubr.f32.gmra.mrb[0].mxu0 %v108
    %v279 = vpop.f32.mrb[0].mxu0
    %v280 = vadd.f32 0.0, %v279
    %v281 = vpop.f32.mrb[0].mxu0
    %282 = vmatprep.mubr.f32.mxu0 0.0
    %283 = vmatmul.mubr.f32.gmra.mrb[0].mxu0 %v111
    %v284 = vpop.f32.mrb[0].mxu0
    %v285 = vadd.f32 0.0, %v284
    %v286 = vpop.f32.mrb[0].mxu0
    %287 = vmatprep.mubr.f32.mxu0 0.0
    %288 = vmatmul.mubr.f32.gmra.mrb[0].mxu0 %v114
    %v289 = vpop.f32.mrb[0].mxu0
    %v290 = vadd.f32 0.0, %v289
    %v291 = vpop.f32.mrb[0].mxu0
    %292 = vmatprep.mubr.f32.mxu0 0.0
    %293 = vmatmul.mubr.f32.gmra.mrb[0].mxu0 %v117
    %v294 = vpop.f32.mrb[0].mxu0
    %v295 = vadd.f32 0.0, %v294
    %v296 = vpop.f32.mrb[0].mxu0
    %297 = vmatprep.mubr.f32.mxu0 0.0
    %298 = vmatmul.mubr.f32.gmra.mrb[0].mxu0 %v120
    %v299 = vpop.f32.mrb[0].mxu0
    %v300 = vadd.f32 0.0, %v299
    %v301 = vpop.f32.mrb[0].mxu0
    %302 = vmatprep.mubr.f32.mxu0 0.0
    %303 = vmatmul.mubr.f32.gmra.mrb[0].mxu0 %v123
    %v304 = vpop.f32.mrb[0].mxu0
    %v305 = vadd.f32 0.0, %v304
    %v306 = vpop.f32.mrb[0].mxu0
    %307 = vmatprep.mubr.f32.mxu0 0.0
    %308 = vmatmul.mubr.f32.gmra.mrb[0].mxu0 %v126
    %v309 = vpop.f32.mrb[0].mxu0
    %v310 = vadd.f32 0.0, %v309
    %v311 = vpop.f32.mrb[0].mxu0
    %312 = vmatprep.mubr.f32.mxu0 0.0
    %313 = vmatmul.mubr.f32.gmra.mrb[0].mxu0 %v129
    %v314 = vpop.f32.mrb[0].mxu0
    %v315 = vadd.f32 0.0, %v314
    %v316 = vpop.f32.mrb[0].mxu0
    %317 = vmatprep.mubr.f32.mxu0 0.0
    %318 = vmatmul.mubr.f32.gmra.mrb[0].mxu0 %v132
    %v319 = vpop.f32.mrb[0].mxu0
    %v320 = vadd.f32 0.0, %v319
    %v321 = vpop.f32.mrb[0].mxu0
    %322 = vmatprep.mubr.f32.mxu0 0.0
    %323 = vmatmul.mubr.f32.gmra.mrb[0].mxu0 %v135
    %v324 = vpop.f32.mrb[0].mxu0
    %v325 = vadd.f32 0.0, %v324
    %v326 = vpop.f32.mrb[0].mxu0
    %327 = vmatprep.mubr.f32.mxu0 0.0
    %328 = vmatmul.mubr.f32.gmra.mrb[0].mxu0 %v138
    %v329 = vpop.f32.mrb[0].mxu0
    %v330 = vadd.f32 0.0, %v329
    %v331 = vpop.f32.mrb[0].mxu0
    %332 = vmatprep.mubr.f32.mxu0 0.0
    %333 = vmatmul.mubr.f32.gmra.mrb[0].mxu0 %v141
    %v334 = vpop.f32.mrb[0].mxu0
    %v335 = vadd.f32 0.0, %v334
    %v336 = vpop.f32.mrb[0].mxu0
    %337 = vmatprep.mubr.f32.mxu0 0.0
    %338 = vmatmul.mubr.f32.gmra.mrb[0].mxu0 %v144
    %v339 = vpop.f32.mrb[0].mxu0
    %v340 = vadd.f32 0.0, %v339
    %v341 = vpop.f32.mrb[0].mxu0
    %342 = vmatprep.mubr.f32.mxu0 0.0
    %343 = vmatmul.mubr.f32.gmra.mrb[0].mxu0 %v147
    %v344 = vpop.f32.mrb[0].mxu0
    %v345 = vadd.f32 0.0, %v344
    %v346 = vpop.f32.mrb[0].mxu0
    %347 = vmatprep.mubr.f32.mxu0 0.0
    %348 = vmatmul.mubr.f32.gmra.mrb[0].mxu0 %v150
    %v349 = vpop.f32.mrb[0].mxu0
    %v350 = vadd.f32 0.0, %v349
    %v351 = vpop.f32.mrb[0].mxu0
    %352 = vmatprep.mubr.f32.mxu0 0.0
    %353 = vmatmul.mubr.f32.gmra.mrb[0].mxu0 %v153
    %v354 = vpop.f32.mrb[0].mxu0
    %v355 = vadd.f32 0.0, %v354
    %v356 = vpop.f32.mrb[0].mxu0
    %357 = vmatprep.mubr.f32.mxu0 0.0
    %358 = vmatmul.mubr.f32.gmra.mrb[0].mxu0 %v156
    %v359 = vpop.f32.mrb[0].mxu0
    %v360 = vadd.f32 0.0, %v359
    %v361 = vpop.f32.mrb[0].mxu0
    %362 = vmatprep.mubr.f32.mxu0 0.0
    %363 = vmatmul.mubr.f32.gmra.mrb[0].mxu0 %v159
    %v364 = vpop.f32.mrb[0].mxu0
    %v365 = vadd.f32 0.0, %v364
    %v366 = vpop.f32.mrb[0].mxu0
    %367 = vmatprep.mubr.f32.mxu0 0.0
    %368 = vmatmul.mubr.f32.gmra.mrb[0].mxu0 %v162
    %v369 = vpop.f32.mrb[0].mxu0
    %v370 = vadd.f32 0.0, %v369
    %v371 = vpop.f32.mrb[0].mxu0
    %372 = vmatprep.mubr.f32.mxu0 0.0
    %373 = vmatmul.mubr.f32.gmra.mrb[0].mxu0 %v165
    %v374 = vpop.f32.mrb[0].mxu0
    %v375 = vadd.f32 0.0, %v374
    %v376 = vpop.f32.mrb[0].mxu0
    %377 = vmatprep.mubr.f32.mxu0 0.0
    %378 = vmatmul.mubr.f32.gmra.mrb[0].mxu0 %v168
    %v379 = vpop.f32.mrb[0].mxu0
    %v380 = vadd.f32 0.0, %v379
    %v381 = vpop.f32.mrb[0].mxu0
    %382 = vmatprep.mubr.f32.mxu0 0.0
    %383 = vmatmul.mubr.f32.gmra.mrb[0].mxu0 %v171
    %v384 = vpop.f32.mrb[0].mxu0
    %v385 = vadd.f32 0.0, %v384
    %v386 = vpop.f32.mrb[0].mxu0
    %387 = vmatprep.mubr.f32.mxu0 0.0
    %388 = vmatmul.mubr.f32.gmra.mrb[0].mxu0 %v174
    %v389 = vpop.f32.mrb[0].mxu0
    %v390 = vadd.f32 0.0, %v389
    %v391 = vpop.f32.mrb[0].mxu0
    %392 = vmatprep.mubr.f32.mxu0 0.0
    %393 = vmatmul.mubr.f32.gmra.mrb[0].mxu0 %v177
    %v394 = vpop.f32.mrb[0].mxu0
    %v395 = vadd.f32 0.0, %v394
    %v396 = vpop.f32.mrb[0].mxu0
    %397 = vmatprep.mubr.f32.mxu0 0.0
    %398 = vmatmul.mubr.f32.gmra.mrb[0].mxu0 %v180
    %v399 = vpop.f32.mrb[0].mxu0
    %v400 = vadd.f32 0.0, %v399
    %v401 = vpop.f32.mrb[0].mxu0
    %402 = vmatprep.mubr.f32.mxu0 0.0
    %403 = vmatmul.mubr.f32.gmra.mrb[0].mxu0 %v183
    %v404 = vpop.f32.mrb[0].mxu0
    %v405 = vadd.f32 0.0, %v404
    %v406 = vpop.f32.mrb[0].mxu0
    %407 = vmatprep.mubr.f32.mxu0 0.0
    %408 = vmatmul.mubr.f32.gmra.mrb[0].mxu0 %v186
    %v409 = vpop.f32.mrb[0].mxu0
    %v410 = vadd.f32 0.0, %v409
    %v411 = vpop.f32.mrb[0].mxu0
    %412 = vmatprep.mubr.f32.mxu0 0.0
    %413 = vmatmul.mubr.f32.gmra.mrb[0].mxu0 %v189
    %v414 = vpop.f32.mrb[0].mxu0
    %v415 = vadd.f32 0.0, %v414
    %v416 = vpop.f32.mrb[0].mxu0
    %417 = vmatprep.mubr.f32.mxu0 0.0
    %418 = vmatmul.mubr.f32.gmra.mrb[0].mxu0 %v192
    %v419 = vpop.f32.mrb[0].mxu0
    %v420 = vadd.f32 0.0, %v419
    %v421 = vpop.f32.mrb[0].mxu0
    %422 = vdwg.mxu0
    %v424 = vsel %vm97, %v60, 0
    %v427 = vsel %vm97, %v61, 0
    %v430 = vsel %vm194, %v92, 0
    %432 = vmatprep.subr.mxu0 0.0
    %433 = vmatpush1.msra.mxu0 %v430
    %434 = vmatprep.subr.mxu0 0.0
    %435 = vmatpush1.msra.mxu0 0.0
    %436 = vmatprep.subr.mxu0 0.0
    %437 = vmatpush1.msra.mxu0 0.0
    %438 = vmatprep.subr.mxu0 0.0
    %439 = vmatpush1.msra.mxu0 0.0
    %440 = vmatprep.subr.mxu0 0.0
    %441 = vmatpush1.msra.mxu0 0.0
    %442 = vmatprep.subr.mxu0 0.0
    %443 = vmatpush1.msra.mxu0 0.0
    %444 = vmatprep.subr.mxu0 0.0
    %445 = vmatpush1.msra.mxu0 0.0
    %446 = vmatprep.subr.mxu0 0.0
    %447 = vmatpush1.msra.mxu0 0.0
    %448 = vmatprep.subr.mxu0 0.0
    %449 = vmatpush1.msra.mxu0 0.0
    %450 = vmatprep.subr.mxu0 0.0
    %451 = vmatpush1.msra.mxu0 0.0
    %452 = vmatprep.subr.mxu0 0.0
    %453 = vmatpush1.msra.mxu0 0.0
    %454 = vmatprep.subr.mxu0 0.0
    %455 = vmatpush1.msra.mxu0 0.0
    %456 = vmatprep.subr.mxu0 0.0
    %457 = vmatpush1.msra.mxu0 0.0
    %458 = vmatprep.subr.mxu0 0.0
    %459 = vmatpush1.msra.mxu0 0.0
    %460 = vmatprep.subr.mxu0 0.0
    %461 = vmatpush1.msra.mxu0 0.0
    %462 = vmatprep.subr.mxu0 0.0
    %463 = vmatpush1.msra.mxu0 0.0
    %464 = vmatprep.subr.mxu0 0.0
    %465 = vmatpush1.msra.mxu0 0.0
    %466 = vmatprep.subr.mxu0 0.0
    %467 = vmatpush1.msra.mxu0 0.0
    %468 = vmatprep.subr.mxu0 0.0
    %469 = vmatpush1.msra.mxu0 0.0
    %470 = vmatprep.subr.mxu0 0.0
    %471 = vmatpush1.msra.mxu0 0.0
    %472 = vmatprep.subr.mxu0 0.0
    %473 = vmatpush1.msra.mxu0 0.0
    %474 = vmatprep.subr.mxu0 0.0
    %475 = vmatpush1.msra.mxu0 0.0
    %476 = vmatprep.subr.mxu0 0.0
    %477 = vmatpush1.msra.mxu0 0.0
    %478 = vmatprep.subr.mxu0 0.0
    %479 = vmatpush1.msra.mxu0 0.0
    %480 = vmatprep.subr.mxu0 0.0
    %481 = vmatpush1.msra.mxu0 0.0
    %482 = vmatprep.subr.mxu0 0.0
    %483 = vmatpush1.msra.mxu0 0.0
    %484 = vmatprep.subr.mxu0 0.0
    %485 = vmatpush1.msra.mxu0 0.0
    %486 = vmatprep.subr.mxu0 0.0
    %487 = vmatpush1.msra.mxu0 0.0
    %488 = vmatprep.subr.mxu0 0.0
    %489 = vmatpush1.msra.mxu0 0.0
    %490 = vmatprep.subr.mxu0 0.0
    %491 = vmatpush1.msra.mxu0 0.0
    %492 = vmatprep.subr.mxu0 0.0
    %493 = vmatpush1.msra.mxu0 0.0
    %494 = vmatprep.subr.mxu0 0.0
    %495 = vmatpush1.msra.mxu0 0.0
    %496 = vmatprep.mubr.f32.mxu0 0.0
    %497 = vmatmul.mubr.f32.gmra.mrb[0].mxu0 %v424
    %v498 = vpop.f32.mrb[0].mxu0
    %v499 = vadd.f32 %v265, %v498
    %v500 = vpop.f32.mrb[0].mxu0
    %501 = vmatprep.mubr.f32.mxu0 0.0
    %502 = vmatmul.mubr.f32.gmra.mrb[0].mxu0 %v427
    %v503 = vpop.f32.mrb[0].mxu0
    %v504 = vadd.f32 %v270, %v503
    %v505 = vpop.f32.mrb[0].mxu0
    %506 = vmatprep.mubr.f32.mxu0 0.0
    %507 = vmatmul.mubr.f32.gmra.mrb[0].mxu0 %v99
    %v508 = vpop.f32.mrb[0].mxu0
    %v509 = vadd.f32 %v275, %v508
    %v510 = vpop.f32.mrb[0].mxu0
    %511 = vmatprep.mubr.f32.mxu0 0.0
    %512 = vmatmul.mubr.f32.gmra.mrb[0].mxu0 %v102
    %v513 = vpop.f32.mrb[0].mxu0
    %v514 = vadd.f32 %v280, %v513
    %v515 = vpop.f32.mrb[0].mxu0
    %516 = vmatprep.mubr.f32.mxu0 0.0
    %517 = vmatmul.mubr.f32.gmra.mrb[0].mxu0 %v105
    %v518 = vpop.f32.mrb[0].mxu0
    %v519 = vadd.f32 %v285, %v518
    %v520 = vpop.f32.mrb[0].mxu0
    %521 = vmatprep.mubr.f32.mxu0 0.0
    %522 = vmatmul.mubr.f32.gmra.mrb[0].mxu0 %v108
    %v523 = vpop.f32.mrb[0].mxu0
    %v524 = vadd.f32 %v290, %v523
    %v525 = vpop.f32.mrb[0].mxu0
    %526 = vmatprep.mubr.f32.mxu0 0.0
    %527 = vmatmul.mubr.f32.gmra.mrb[0].mxu0 %v111
    %v528 = vpop.f32.mrb[0].mxu0
    %v529 = vadd.f32 %v295, %v528
    %v530 = vpop.f32.mrb[0].mxu0
    %531 = vmatprep.mubr.f32.mxu0 0.0
    %532 = vmatmul.mubr.f32.gmra.mrb[0].mxu0 %v114
    %v533 = vpop.f32.mrb[0].mxu0
    %v534 = vadd.f32 %v300, %v533
    %v535 = vpop.f32.mrb[0].mxu0
    %536 = vmatprep.mubr.f32.mxu0 0.0
    %537 = vmatmul.mubr.f32.gmra.mrb[0].mxu0 %v117
    %v538 = vpop.f32.mrb[0].mxu0
    %v539 = vadd.f32 %v305, %v538
    %v540 = vpop.f32.mrb[0].mxu0
    %541 = vmatprep.mubr.f32.mxu0 0.0
    %542 = vmatmul.mubr.f32.gmra.mrb[0].mxu0 %v120
    %v543 = vpop.f32.mrb[0].mxu0
    %v544 = vadd.f32 %v310, %v543
    %v545 = vpop.f32.mrb[0].mxu0
    %546 = vmatprep.mubr.f32.mxu0 0.0
    %547 = vmatmul.mubr.f32.gmra.mrb[0].mxu0 %v123
    %v548 = vpop.f32.mrb[0].mxu0
    %v549 = vadd.f32 %v315, %v548
    %v550 = vpop.f32.mrb[0].mxu0
    %551 = vmatprep.mubr.f32.mxu0 0.0
    %552 = vmatmul.mubr.f32.gmra.mrb[0].mxu0 %v126
    %v553 = vpop.f32.mrb[0].mxu0
    %v554 = vadd.f32 %v320, %v553
    %v555 = vpop.f32.mrb[0].mxu0
    %556 = vmatprep.mubr.f32.mxu0 0.0
    %557 = vmatmul.mubr.f32.gmra.mrb[0].mxu0 %v129
    %v558 = vpop.f32.mrb[0].mxu0
    %v559 = vadd.f32 %v325, %v558
    %v560 = vpop.f32.mrb[0].mxu0
    %561 = vmatprep.mubr.f32.mxu0 0.0
    %562 = vmatmul.mubr.f32.gmra.mrb[0].mxu0 %v132
    %v563 = vpop.f32.mrb[0].mxu0
    %v564 = vadd.f32 %v330, %v563
    %v565 = vpop.f32.mrb[0].mxu0
    %566 = vmatprep.mubr.f32.mxu0 0.0
    %567 = vmatmul.mubr.f32.gmra.mrb[0].mxu0 %v135
    %v568 = vpop.f32.mrb[0].mxu0
    %v569 = vadd.f32 %v335, %v568
    %v570 = vpop.f32.mrb[0].mxu0
    %571 = vmatprep.mubr.f32.mxu0 0.0
    %572 = vmatmul.mubr.f32.gmra.mrb[0].mxu0 %v138
    %v573 = vpop.f32.mrb[0].mxu0
    %v574 = vadd.f32 %v340, %v573
    %v575 = vpop.f32.mrb[0].mxu0
    %576 = vmatprep.mubr.f32.mxu0 0.0
    %577 = vmatmul.mubr.f32.gmra.mrb[0].mxu0 %v141
    %v578 = vpop.f32.mrb[0].mxu0
    %v579 = vadd.f32 %v345, %v578
    %v580 = vpop.f32.mrb[0].mxu0
    %581 = vmatprep.mubr.f32.mxu0 0.0
    %582 = vmatmul.mubr.f32.gmra.mrb[0].mxu0 %v144
    %v583 = vpop.f32.mrb[0].mxu0
    %v584 = vadd.f32 %v350, %v583
    %v585 = vpop.f32.mrb[0].mxu0
    %586 = vmatprep.mubr.f32.mxu0 0.0
    %587 = vmatmul.mubr.f32.gmra.mrb[0].mxu0 %v147
    %v588 = vpop.f32.mrb[0].mxu0
    %v589 = vadd.f32 %v355, %v588
    %v590 = vpop.f32.mrb[0].mxu0
    %591 = vmatprep.mubr.f32.mxu0 0.0
    %592 = vmatmul.mubr.f32.gmra.mrb[0].mxu0 %v150
    %v593 = vpop.f32.mrb[0].mxu0
    %v594 = vadd.f32 %v360, %v593
    %v595 = vpop.f32.mrb[0].mxu0
    %596 = vmatprep.mubr.f32.mxu0 0.0
    %597 = vmatmul.mubr.f32.gmra.mrb[0].mxu0 %v153
    %v598 = vpop.f32.mrb[0].mxu0
    %v599 = vadd.f32 %v365, %v598
    %v600 = vpop.f32.mrb[0].mxu0
    %601 = vmatprep.mubr.f32.mxu0 0.0
    %602 = vmatmul.mubr.f32.gmra.mrb[0].mxu0 %v156
    %v603 = vpop.f32.mrb[0].mxu0
    %v604 = vadd.f32 %v370, %v603
    %v605 = vpop.f32.mrb[0].mxu0
    %606 = vmatprep.mubr.f32.mxu0 0.0
    %607 = vmatmul.mubr.f32.gmra.mrb[0].mxu0 %v159
    %v608 = vpop.f32.mrb[0].mxu0
    %v609 = vadd.f32 %v375, %v608
    %v610 = vpop.f32.mrb[0].mxu0
    %611 = vmatprep.mubr.f32.mxu0 0.0
    %612 = vmatmul.mubr.f32.gmra.mrb[0].mxu0 %v162
    %v613 = vpop.f32.mrb[0].mxu0
    %v614 = vadd.f32 %v380, %v613
    %v615 = vpop.f32.mrb[0].mxu0
    %616 = vmatprep.mubr.f32.mxu0 0.0
    %617 = vmatmul.mubr.f32.gmra.mrb[0].mxu0 %v165
    %v618 = vpop.f32.mrb[0].mxu0
    %v619 = vadd.f32 %v385, %v618
    %v620 = vpop.f32.mrb[0].mxu0
    %621 = vmatprep.mubr.f32.mxu0 0.0
    %622 = vmatmul.mubr.f32.gmra.mrb[0].mxu0 %v168
    %v623 = vpop.f32.mrb[0].mxu0
    %v624 = vadd.f32 %v390, %v623
    %v625 = vpop.f32.mrb[0].mxu0
    %626 = vmatprep.mubr.f32.mxu0 0.0
    %627 = vmatmul.mubr.f32.gmra.mrb[0].mxu0 %v171
    %v628 = vpop.f32.mrb[0].mxu0
    %v629 = vadd.f32 %v395, %v628
    %v630 = vpop.f32.mrb[0].mxu0
    %631 = vmatprep.mubr.f32.mxu0 0.0
    %632 = vmatmul.mubr.f32.gmra.mrb[0].mxu0 %v174
    %v633 = vpop.f32.mrb[0].mxu0
    %v634 = vadd.f32 %v400, %v633
    %v635 = vpop.f32.mrb[0].mxu0
    %636 = vmatprep.mubr.f32.mxu0 0.0
    %637 = vmatmul.mubr.f32.gmra.mrb[0].mxu0 %v177
    %v638 = vpop.f32.mrb[0].mxu0
    %v639 = vadd.f32 %v405, %v638
    %v640 = vpop.f32.mrb[0].mxu0
    %641 = vmatprep.mubr.f32.mxu0 0.0
    %642 = vmatmul.mubr.f32.gmra.mrb[0].mxu0 %v180
    %v643 = vpop.f32.mrb[0].mxu0
    %v644 = vadd.f32 %v410, %v643
    %v645 = vpop.f32.mrb[0].mxu0
    %646 = vmatprep.mubr.f32.mxu0 0.0
    %647 = vmatmul.mubr.f32.gmra.mrb[0].mxu0 %v183
    %v648 = vpop.f32.mrb[0].mxu0
    %v649 = vadd.f32 %v415, %v648
    %v650 = vpop.f32.mrb[0].mxu0
    %651 = vmatprep.mubr.f32.mxu0 0.0
    %652 = vmatmul.mubr.f32.gmra.mrb[0].mxu0 %v186
    %v653 = vpop.f32.mrb[0].mxu0
    %v654 = vadd.f32 %v420, %v653
    %v655 = vpop.f32.mrb[0].mxu0
    %656 = vdwg.mxu0
    %v657 = vld [vmem:[%s0 + $0x20] sm:$0xff]
    %v658 = vld [vmem:[%s0 + $0x28] sm:$0xff]
    %v659 = vld [vmem:[%s0 + $0x30] sm:$0xff]
    %v660 = vld [vmem:[%s0 + $0x38] sm:$0xff]
    %v661 = vld [vmem:[%s0 + $0x40] sm:$0xff]
    %v662 = vld [vmem:[%s0 + $0x48] sm:$0xff]
    %v663 = vld [vmem:[%s0 + $0x50] sm:$0xff]
    %v664 = vld [vmem:[%s0 + $0x58] sm:$0xff]
    %v665 = vld [vmem:[%s0 + $0x60] sm:$0xff]
    %v666 = vld [vmem:[%s0 + $0x68] sm:$0xff]
    %v667 = vld [vmem:[%s0 + $0x70] sm:$0xff]
    %v668 = vld [vmem:[%s0 + $0x78] sm:$0xff]
    %v669 = vld [vmem:[%s0 + $0x80] sm:$0xff]
    %v670 = vld [vmem:[%s0 + $0x88] sm:$0xff]
    %v671 = vld [vmem:[%s0 + $0x90] sm:$0xff]
    %v672 = vld [vmem:[%s0 + $0x98] sm:$0xff]
    %v673 = vld [vmem:[%s0 + $0xa0] sm:$0xff]
    %v674 = vld [vmem:[%s0 + $0xa8] sm:$0xff]
    %v675 = vld [vmem:[%s0 + $0xb0] sm:$0xff]
    %v676 = vld [vmem:[%s0 + $0xb8] sm:$0xff]
    %v677 = vld [vmem:[%s0 + $0xc0] sm:$0xff]
    %v678 = vld [vmem:[%s0 + $0xc8] sm:$0xff]
    %v679 = vld [vmem:[%s0 + $0xd0] sm:$0xff]
    %v680 = vld [vmem:[%s0 + $0xd8] sm:$0xff]
    %v681 = vld [vmem:[%s0 + $0xe0] sm:$0xff]
    %v682 = vld [vmem:[%s0 + $0xe8] sm:$0xff]
    %v683 = vld [vmem:[%s0 + $0xf0] sm:$0xff]
    %v684 = vld [vmem:[%s0 + $0xf8] sm:$0xff]
    %v685 = vld [vmem:[%s0 + $0x100] sm:$0xff]
    %v686 = vld [vmem:[%s0 + $0x108] sm:$0xff]
    %v687 = vld [vmem:[%s0 + $0x110] sm:$0xff]
    %v688 = vld [vmem:[%s0 + $0x118] sm:$0xff]
    %s689 = scalar_lea.vmem [#allocation2], 6
    %v690 = vld [vmem:[%s689] sm:$0x1]
    %v692 = vsel %vm97, %v657, 0
    %v695 = vsel %vm97, %v658, 0
    %v698 = vsel %vm97, %v659, 0
    %v701 = vsel %vm97, %v660, 0
    %v704 = vsel %vm97, %v661, 0
    %v707 = vsel %vm97, %v662, 0
    %v710 = vsel %vm97, %v663, 0
    %v713 = vsel %vm97, %v664, 0
    %v716 = vsel %vm97, %v665, 0
    %v719 = vsel %vm97, %v666, 0
    %v722 = vsel %vm97, %v667, 0
    %v725 = vsel %vm97, %v668, 0
    %v728 = vsel %vm97, %v669, 0
    %v731 = vsel %vm97, %v670, 0
    %v734 = vsel %vm97, %v671, 0
    %v737 = vsel %vm97, %v672, 0
    %v740 = vsel %vm97, %v673, 0
    %v743 = vsel %vm97, %v674, 0
    %v746 = vsel %vm97, %v675, 0
    %v749 = vsel %vm97, %v676, 0
    %v752 = vsel %vm97, %v677, 0
    %v755 = vsel %vm97, %v678, 0
    %v758 = vsel %vm97, %v679, 0
    %v761 = vsel %vm97, %v680, 0
    %v764 = vsel %vm97, %v681, 0
    %v767 = vsel %vm97, %v682, 0
    %v770 = vsel %vm97, %v683, 0
    %v773 = vsel %vm97, %v684, 0
    %v776 = vsel %vm97, %v685, 0
    %v779 = vsel %vm97, %v686, 0
    %v782 = vsel %vm97, %v687, 0
    %v785 = vsel %vm97, %v688, 0
    %v788 = vsel %vm194, %v690, 0
    %790 = vmatprep.subr.mxu0 0.0
    %791 = vmatpush1.msra.mxu0 %v788
    %792 = vmatprep.subr.mxu0 0.0
    %793 = vmatpush1.msra.mxu0 0.0
    %794 = vmatprep.subr.mxu0 0.0
    %795 = vmatpush1.msra.mxu0 0.0
    %796 = vmatprep.subr.mxu0 0.0
    %797 = vmatpush1.msra.mxu0 0.0
    %798 = vmatprep.subr.mxu0 0.0
    %799 = vmatpush1.msra.mxu0 0.0
    %800 = vmatprep.subr.mxu0 0.0
    %801 = vmatpush1.msra.mxu0 0.0
    %802 = vmatprep.subr.mxu0 0.0
    %803 = vmatpush1.msra.mxu0 0.0
    %804 = vmatprep.subr.mxu0 0.0
    %805 = vmatpush1.msra.mxu0 0.0
    %806 = vmatprep.subr.mxu0 0.0
    %807 = vmatpush1.msra.mxu0 0.0
    %808 = vmatprep.subr.mxu0 0.0
    %809 = vmatpush1.msra.mxu0 0.0
    %810 = vmatprep.subr.mxu0 0.0
    %811 = vmatpush1.msra.mxu0 0.0
    %812 = vmatprep.subr.mxu0 0.0
    %813 = vmatpush1.msra.mxu0 0.0
    %814 = vmatprep.subr.mxu0 0.0
    %815 = vmatpush1.msra.mxu0 0.0
    %816 = vmatprep.subr.mxu0 0.0
    %817 = vmatpush1.msra.mxu0 0.0
    %818 = vmatprep.subr.mxu0 0.0
    %819 = vmatpush1.msra.mxu0 0.0
    %820 = vmatprep.subr.mxu0 0.0
    %821 = vmatpush1.msra.mxu0 0.0
    %822 = vmatprep.subr.mxu0 0.0
    %823 = vmatpush1.msra.mxu0 0.0
    %824 = vmatprep.subr.mxu0 0.0
    %825 = vmatpush1.msra.mxu0 0.0
    %826 = vmatprep.subr.mxu0 0.0
    %827 = vmatpush1.msra.mxu0 0.0
    %828 = vmatprep.subr.mxu0 0.0
    %829 = vmatpush1.msra.mxu0 0.0
    %830 = vmatprep.subr.mxu0 0.0
    %831 = vmatpush1.msra.mxu0 0.0
    %832 = vmatprep.subr.mxu0 0.0
    %833 = vmatpush1.msra.mxu0 0.0
    %834 = vmatprep.subr.mxu0 0.0
    %835 = vmatpush1.msra.mxu0 0.0
    %836 = vmatprep.subr.mxu0 0.0
    %837 = vmatpush1.msra.mxu0 0.0
    %838 = vmatprep.subr.mxu0 0.0
    %839 = vmatpush1.msra.mxu0 0.0
    %840 = vmatprep.subr.mxu0 0.0
    %841 = vmatpush1.msra.mxu0 0.0
    %842 = vmatprep.subr.mxu0 0.0
    %843 = vmatpush1.msra.mxu0 0.0
    %844 = vmatprep.subr.mxu0 0.0
    %845 = vmatpush1.msra.mxu0 0.0
    %846 = vmatprep.subr.mxu0 0.0
    %847 = vmatpush1.msra.mxu0 0.0
    %848 = vmatprep.subr.mxu0 0.0
    %849 = vmatpush1.msra.mxu0 0.0
    %850 = vmatprep.subr.mxu0 0.0
    %851 = vmatpush1.msra.mxu0 0.0
    %852 = vmatprep.subr.mxu0 0.0
    %853 = vmatpush1.msra.mxu0 0.0
    %854 = vmatprep.mubr.f32.mxu0 0.0
    %855 = vmatmul.mubr.f32.gmra.mrb[0].mxu0 %v692
    %v856 = vpop.f32.mrb[0].mxu0
    %v857 = vadd.f32 0.0, %v856
    %v858 = vpop.f32.mrb[0].mxu0
    %859 = vmatprep.mubr.f32.mxu0 0.0
    %860 = vmatmul.mubr.f32.gmra.mrb[0].mxu0 %v695
    %v861 = vpop.f32.mrb[0].mxu0
    %v862 = vadd.f32 0.0, %v861
    %v863 = vpop.f32.mrb[0].mxu0
    %864 = vmatprep.mubr.f32.mxu0 0.0
    %865 = vmatmul.mubr.f32.gmra.mrb[0].mxu0 %v698
    %v866 = vpop.f32.mrb[0].mxu0
    %v867 = vadd.f32 0.0, %v866
    %v868 = vpop.f32.mrb[0].mxu0
    %869 = vmatprep.mubr.f32.mxu0 0.0
    %870 = vmatmul.mubr.f32.gmra.mrb[0].mxu0 %v701
    %v871 = vpop.f32.mrb[0].mxu0
    %v872 = vadd.f32 0.0, %v871
    %v873 = vpop.f32.mrb[0].mxu0
    %874 = vmatprep.mubr.f32.mxu0 0.0
    %875 = vmatmul.mubr.f32.gmra.mrb[0].mxu0 %v704
    %v876 = vpop.f32.mrb[0].mxu0
    %v877 = vadd.f32 0.0, %v876
    %v878 = vpop.f32.mrb[0].mxu0
    %879 = vmatprep.mubr.f32.mxu0 0.0
    %880 = vmatmul.mubr.f32.gmra.mrb[0].mxu0 %v707
    %v881 = vpop.f32.mrb[0].mxu0
    %v882 = vadd.f32 0.0, %v881
    %v883 = vpop.f32.mrb[0].mxu0
    %884 = vmatprep.mubr.f32.mxu0 0.0
    %885 = vmatmul.mubr.f32.gmra.mrb[0].mxu0 %v710
    %v886 = vpop.f32.mrb[0].mxu0
    %v887 = vadd.f32 0.0, %v886
    %v888 = vpop.f32.mrb[0].mxu0
    %889 = vmatprep.mubr.f32.mxu0 0.0
    %890 = vmatmul.mubr.f32.gmra.mrb[0].mxu0 %v713
    %v891 = vpop.f32.mrb[0].mxu0
    %v892 = vadd.f32 0.0, %v891
    %v893 = vpop.f32.mrb[0].mxu0
    %894 = vmatprep.mubr.f32.mxu0 0.0
    %895 = vmatmul.mubr.f32.gmra.mrb[0].mxu0 %v716
    %v896 = vpop.f32.mrb[0].mxu0
    %v897 = vadd.f32 0.0, %v896
    %v898 = vpop.f32.mrb[0].mxu0
    %899 = vmatprep.mubr.f32.mxu0 0.0
    %900 = vmatmul.mubr.f32.gmra.mrb[0].mxu0 %v719
    %v901 = vpop.f32.mrb[0].mxu0
    %v902 = vadd.f32 0.0, %v901
    %v903 = vpop.f32.mrb[0].mxu0
    %904 = vmatprep.mubr.f32.mxu0 0.0
    %905 = vmatmul.mubr.f32.gmra.mrb[0].mxu0 %v722
    %v906 = vpop.f32.mrb[0].mxu0
    %v907 = vadd.f32 0.0, %v906
    %v908 = vpop.f32.mrb[0].mxu0
    %909 = vmatprep.mubr.f32.mxu0 0.0
    %910 = vmatmul.mubr.f32.gmra.mrb[0].mxu0 %v725
    %v911 = vpop.f32.mrb[0].mxu0
    %v912 = vadd.f32 0.0, %v911
    %v913 = vpop.f32.mrb[0].mxu0
    %914 = vmatprep.mubr.f32.mxu0 0.0
    %915 = vmatmul.mubr.f32.gmra.mrb[0].mxu0 %v728
    %v916 = vpop.f32.mrb[0].mxu0
    %v917 = vadd.f32 0.0, %v916
    %v918 = vpop.f32.mrb[0].mxu0
    %919 = vmatprep.mubr.f32.mxu0 0.0
    %920 = vmatmul.mubr.f32.gmra.mrb[0].mxu0 %v731
    %v921 = vpop.f32.mrb[0].mxu0
    %v922 = vadd.f32 0.0, %v921
    %v923 = vpop.f32.mrb[0].mxu0
    %924 = vmatprep.mubr.f32.mxu0 0.0
    %925 = vmatmul.mubr.f32.gmra.mrb[0].mxu0 %v734
    %v926 = vpop.f32.mrb[0].mxu0
    %v927 = vadd.f32 0.0, %v926
    %v928 = vpop.f32.mrb[0].mxu0
    %929 = vmatprep.mubr.f32.mxu0 0.0
    %930 = vmatmul.mubr.f32.gmra.mrb[0].mxu0 %v737
    %v931 = vpop.f32.mrb[0].mxu0
    %v932 = vadd.f32 0.0, %v931
    %v933 = vpop.f32.mrb[0].mxu0
    %934 = vmatprep.mubr.f32.mxu0 0.0
    %935 = vmatmul.mubr.f32.gmra.mrb[0].mxu0 %v740
    %v936 = vpop.f32.mrb[0].mxu0
    %v937 = vadd.f32 0.0, %v936
    %v938 = vpop.f32.mrb[0].mxu0
    %939 = vmatprep.mubr.f32.mxu0 0.0
    %940 = vmatmul.mubr.f32.gmra.mrb[0].mxu0 %v743
    %v941 = vpop.f32.mrb[0].mxu0
    %v942 = vadd.f32 0.0, %v941
    %v943 = vpop.f32.mrb[0].mxu0
    %944 = vmatprep.mubr.f32.mxu0 0.0
    %945 = vmatmul.mubr.f32.gmra.mrb[0].mxu0 %v746
    %v946 = vpop.f32.mrb[0].mxu0
    %v947 = vadd.f32 0.0, %v946
    %v948 = vpop.f32.mrb[0].mxu0
    %949 = vmatprep.mubr.f32.mxu0 0.0
    %950 = vmatmul.mubr.f32.gmra.mrb[0].mxu0 %v749
    %v951 = vpop.f32.mrb[0].mxu0
    %v952 = vadd.f32 0.0, %v951
    %v953 = vpop.f32.mrb[0].mxu0
    %954 = vmatprep.mubr.f32.mxu0 0.0
    %955 = vmatmul.mubr.f32.gmra.mrb[0].mxu0 %v752
    %v956 = vpop.f32.mrb[0].mxu0
    %v957 = vadd.f32 0.0, %v956
    %v958 = vpop.f32.mrb[0].mxu0
    %959 = vmatprep.mubr.f32.mxu0 0.0
    %960 = vmatmul.mubr.f32.gmra.mrb[0].mxu0 %v755
    %v961 = vpop.f32.mrb[0].mxu0
    %v962 = vadd.f32 0.0, %v961
    %v963 = vpop.f32.mrb[0].mxu0
    %964 = vmatprep.mubr.f32.mxu0 0.0
    %965 = vmatmul.mubr.f32.gmra.mrb[0].mxu0 %v758
    %v966 = vpop.f32.mrb[0].mxu0
    %v967 = vadd.f32 0.0, %v966
    %v968 = vpop.f32.mrb[0].mxu0
    %969 = vmatprep.mubr.f32.mxu0 0.0
    %970 = vmatmul.mubr.f32.gmra.mrb[0].mxu0 %v761
    %v971 = vpop.f32.mrb[0].mxu0
    %v972 = vadd.f32 0.0, %v971
    %v973 = vpop.f32.mrb[0].mxu0
    %974 = vmatprep.mubr.f32.mxu0 0.0
    %975 = vmatmul.mubr.f32.gmra.mrb[0].mxu0 %v764
    %v976 = vpop.f32.mrb[0].mxu0
    %v977 = vadd.f32 0.0, %v976
    %v978 = vpop.f32.mrb[0].mxu0
    %979 = vmatprep.mubr.f32.mxu0 0.0
    %980 = vmatmul.mubr.f32.gmra.mrb[0].mxu0 %v767
    %v981 = vpop.f32.mrb[0].mxu0
    %v982 = vadd.f32 0.0, %v981
    %v983 = vpop.f32.mrb[0].mxu0
    %984 = vmatprep.mubr.f32.mxu0 0.0
    %985 = vmatmul.mubr.f32.gmra.mrb[0].mxu0 %v770
    %v986 = vpop.f32.mrb[0].mxu0
    %v987 = vadd.f32 0.0, %v986
    %v988 = vpop.f32.mrb[0].mxu0
    %989 = vmatprep.mubr.f32.mxu0 0.0
    %990 = vmatmul.mubr.f32.gmra.mrb[0].mxu0 %v773
    %v991 = vpop.f32.mrb[0].mxu0
    %v992 = vadd.f32 0.0, %v991
    %v993 = vpop.f32.mrb[0].mxu0
    %994 = vmatprep.mubr.f32.mxu0 0.0
    %995 = vmatmul.mubr.f32.gmra.mrb[0].mxu0 %v776
    %v996 = vpop.f32.mrb[0].mxu0
    %v997 = vadd.f32 0.0, %v996
    %v998 = vpop.f32.mrb[0].mxu0
    %999 = vmatprep.mubr.f32.mxu0 0.0
    %1000 = vmatmul.mubr.f32.gmra.mrb[0].mxu0 %v779
    %v1001 = vpop.f32.mrb[0].mxu0
    %v1002 = vadd.f32 0.0, %v1001
    %v1003 = vpop.f32.mrb[0].mxu0
    %1004 = vmatprep.mubr.f32.mxu0 0.0
    %1005 = vmatmul.mubr.f32.gmra.mrb[0].mxu0 %v782
    %v1006 = vpop.f32.mrb[0].mxu0
    %v1007 = vadd.f32 0.0, %v1006
    %v1008 = vpop.f32.mrb[0].mxu0
    %1009 = vmatprep.mubr.f32.mxu0 0.0
    %1010 = vmatmul.mubr.f32.gmra.mrb[0].mxu0 %v785
    %v1011 = vpop.f32.mrb[0].mxu0
    %v1012 = vadd.f32 0.0, %v1011
    %v1013 = vpop.f32.mrb[0].mxu0
    %1014 = vdwg.mxu0
    %v1015 = vadd.f32 %v499, %v857
    %v1016 = vadd.f32 %v504, %v862
    %v1017 = vadd.f32 %v509, %v867
    %v1018 = vadd.f32 %v514, %v872
    %v1019 = vadd.f32 %v519, %v877
    %v1020 = vadd.f32 %v524, %v882
    %v1021 = vadd.f32 %v529, %v887
    %v1022 = vadd.f32 %v534, %v892
    %v1023 = vadd.f32 %v539, %v897
    %v1024 = vadd.f32 %v544, %v902
    %v1025 = vadd.f32 %v549, %v907
    %v1026 = vadd.f32 %v554, %v912
    %v1027 = vadd.f32 %v559, %v917
    %v1028 = vadd.f32 %v564, %v922
    %v1029 = vadd.f32 %v569, %v927
    %v1030 = vadd.f32 %v574, %v932
    %v1031 = vadd.f32 %v579, %v937
    %v1032 = vadd.f32 %v584, %v942
    %v1033 = vadd.f32 %v589, %v947
    %v1034 = vadd.f32 %v594, %v952
    %v1035 = vadd.f32 %v599, %v957
    %v1036 = vadd.f32 %v604, %v962
    %v1037 = vadd.f32 %v609, %v967
    %v1038 = vadd.f32 %v614, %v972
    %v1039 = vadd.f32 %v619, %v977
    %v1040 = vadd.f32 %v624, %v982
    %v1041 = vadd.f32 %v629, %v987
    %v1042 = vadd.f32 %v634, %v992
    %v1043 = vadd.f32 %v639, %v997
    %v1044 = vadd.f32 %v644, %v1002
    %v1045 = vadd.f32 %v649, %v1007
    %v1046 = vadd.f32 %v654, %v1012
    %v1047 = vld [vmem:[%s0 + $0x120] sm:$0xff]
    %v1048 = vld [vmem:[%s0 + $0x128] sm:$0xff]
    %v1049 = vld [vmem:[%s0 + $0x130] sm:$0xff]
    %v1050 = vld [vmem:[%s0 + $0x138] sm:$0xff]
    %v1051 = vld [vmem:[%s0 + $0x140] sm:$0xff]
    %v1052 = vld [vmem:[%s0 + $0x148] sm:$0xff]
    %v1053 = vld [vmem:[%s0 + $0x150] sm:$0xff]
    %v1054 = vld [vmem:[%s0 + $0x158] sm:$0xff]
    %v1055 = vld [vmem:[%s0 + $0x160] sm:$0xff]
    %v1056 = vld [vmem:[%s0 + $0x168] sm:$0xff]
    %v1057 = vld [vmem:[%s0 + $0x170] sm:$0xff]
    %v1058 = vld [vmem:[%s0 + $0x178] sm:$0xff]
    %v1059 = vld [vmem:[%s0 + $0x180] sm:$0xff]
    %v1060 = vld [vmem:[%s0 + $0x188] sm:$0xff]
    %v1061 = vld [vmem:[%s0 + $0x190] sm:$0xff]
    %v1062 = vld [vmem:[%s0 + $0x198] sm:$0xff]
    %v1063 = vld [vmem:[%s0 + $0x1a0] sm:$0xff]
    %v1064 = vld [vmem:[%s0 + $0x1a8] sm:$0xff]
    %v1065 = vld [vmem:[%s0 + $0x1b0] sm:$0xff]
    %v1066 = vld [vmem:[%s0 + $0x1b8] sm:$0xff]
    %v1067 = vld [vmem:[%s0 + $0x1c0] sm:$0xff]
    %v1068 = vld [vmem:[%s0 + $0x1c8] sm:$0xff]
    %v1069 = vld [vmem:[%s0 + $0x1d0] sm:$0xff]
    %v1070 = vld [vmem:[%s0 + $0x1d8] sm:$0xff]
    %v1071 = vld [vmem:[%s0 + $0x1e0] sm:$0xff]
    %v1072 = vld [vmem:[%s0 + $0x1e8] sm:$0xff]
    %v1073 = vld [vmem:[%s0 + $0x1f0] sm:$0xff]
    %v1074 = vld [vmem:[%s0 + $0x1f8] sm:$0xff]
    %v1075 = vld [vmem:[%s0 + $0x200] sm:$0xff]
    %v1076 = vld [vmem:[%s0 + $0x208] sm:$0xff]
    %v1077 = vld [vmem:[%s0 + $0x210] sm:$0xff]
    %v1078 = vld [vmem:[%s0 + $0x218] sm:$0xff]
    %s1079 = scalar_lea.vmem [#allocation2], 1
    %v1080 = vld [vmem:[%s1079] sm:$0x1]
    %v1082 = vsel %vm97, %v1047, 0
    %v1085 = vsel %vm97, %v1048, 0
    %v1088 = vsel %vm97, %v1049, 0
    %v1091 = vsel %vm97, %v1050, 0
    %v1094 = vsel %vm97, %v1051, 0
    %v1097 = vsel %vm97, %v1052, 0
    %v1100 = vsel %vm97, %v1053, 0
    %v1103 = vsel %vm97, %v1054, 0
    %v1106 = vsel %vm97, %v1055, 0
    %v1109 = vsel %vm97, %v1056, 0
    %v1112 = vsel %vm97, %v1057, 0
    %v1115 = vsel %vm97, %v1058, 0
    %v1118 = vsel %vm97, %v1059, 0
    %v1121 = vsel %vm97, %v1060, 0
    %v1124 = vsel %vm97, %v1061, 0
    %v1127 = vsel %vm97, %v1062, 0
    %v1130 = vsel %vm97, %v1063, 0
    %v1133 = vsel %vm97, %v1064, 0
    %v1136 = vsel %vm97, %v1065, 0
    %v1139 = vsel %vm97, %v1066, 0
    %v1142 = vsel %vm97, %v1067, 0
    %v1145 = vsel %vm97, %v1068, 0
    %v1148 = vsel %vm97, %v1069, 0
    %v1151 = vsel %vm97, %v1070, 0
    %v1154 = vsel %vm97, %v1071, 0
    %v1157 = vsel %vm97, %v1072, 0
    %v1160 = vsel %vm97, %v1073, 0
    %v1163 = vsel %vm97, %v1074, 0
    %v1166 = vsel %vm97, %v1075, 0
    %v1169 = vsel %vm97, %v1076, 0
    %v1172 = vsel %vm97, %v1077, 0
    %v1175 = vsel %vm97, %v1078, 0
    %v1178 = vsel %vm194, %v1080, 0
    %1180 = vmatprep.subr.mxu0 0.0
    %1181 = vmatpush1.msra.mxu0 %v1178
    %1182 = vmatprep.subr.mxu0 0.0
    %1183 = vmatpush1.msra.mxu0 0.0
    %1184 = vmatprep.subr.mxu0 0.0
    %1185 = vmatpush1.msra.mxu0 0.0
    %1186 = vmatprep.subr.mxu0 0.0
    %1187 = vmatpush1.msra.mxu0 0.0
    %1188 = vmatprep.subr.mxu0 0.0
    %1189 = vmatpush1.msra.mxu0 0.0
    %1190 = vmatprep.subr.mxu0 0.0
    %1191 = vmatpush1.msra.mxu0 0.0
    %1192 = vmatprep.subr.mxu0 0.0
    %1193 = vmatpush1.msra.mxu0 0.0
    %1194 = vmatprep.subr.mxu0 0.0
    %1195 = vmatpush1.msra.mxu0 0.0
    %1196 = vmatprep.subr.mxu0 0.0
    %1197 = vmatpush1.msra.mxu0 0.0
    %1198 = vmatprep.subr.mxu0 0.0
    %1199 = vmatpush1.msra.mxu0 0.0
    %1200 = vmatprep.subr.mxu0 0.0
    %1201 = vmatpush1.msra.mxu0 0.0
    %1202 = vmatprep.subr.mxu0 0.0
    %1203 = vmatpush1.msra.mxu0 0.0
    %1204 = vmatprep.subr.mxu0 0.0
    %1205 = vmatpush1.msra.mxu0 0.0
    %1206 = vmatprep.subr.mxu0 0.0
    %1207 = vmatpush1.msra.mxu0 0.0
    %1208 = vmatprep.subr.mxu0 0.0
    %1209 = vmatpush1.msra.mxu0 0.0
    %1210 = vmatprep.subr.mxu0 0.0
    %1211 = vmatpush1.msra.mxu0 0.0
    %1212 = vmatprep.subr.mxu0 0.0
    %1213 = vmatpush1.msra.mxu0 0.0
    %1214 = vmatprep.subr.mxu0 0.0
    %1215 = vmatpush1.msra.mxu0 0.0
    %1216 = vmatprep.subr.mxu0 0.0
    %1217 = vmatpush1.msra.mxu0 0.0
    %1218 = vmatprep.subr.mxu0 0.0
    %1219 = vmatpush1.msra.mxu0 0.0
    %1220 = vmatprep.subr.mxu0 0.0
    %1221 = vmatpush1.msra.mxu0 0.0
    %1222 = vmatprep.subr.mxu0 0.0
    %1223 = vmatpush1.msra.mxu0 0.0
    %1224 = vmatprep.subr.mxu0 0.0
    %1225 = vmatpush1.msra.mxu0 0.0
    %1226 = vmatprep.subr.mxu0 0.0
    %1227 = vmatpush1.msra.mxu0 0.0
    %1228 = vmatprep.subr.mxu0 0.0
    %1229 = vmatpush1.msra.mxu0 0.0
    %1230 = vmatprep.subr.mxu0 0.0
    %1231 = vmatpush1.msra.mxu0 0.0
    %1232 = vmatprep.subr.mxu0 0.0
    %1233 = vmatpush1.msra.mxu0 0.0
    %1234 = vmatprep.subr.mxu0 0.0
    %1235 = vmatpush1.msra.mxu0 0.0
    %1236 = vmatprep.subr.mxu0 0.0
    %1237 = vmatpush1.msra.mxu0 0.0
    %1238 = vmatprep.subr.mxu0 0.0
    %1239 = vmatpush1.msra.mxu0 0.0
    %1240 = vmatprep.subr.mxu0 0.0
    %1241 = vmatpush1.msra.mxu0 0.0
    %1242 = vmatprep.subr.mxu0 0.0
    %1243 = vmatpush1.msra.mxu0 0.0
    %1244 = vmatprep.mubr.f32.mxu0 0.0
    %1245 = vmatmul.mubr.f32.gmra.mrb[0].mxu0 %v1082
    %v1246 = vpop.f32.mrb[0].mxu0
    %v1247 = vadd.f32 0.0, %v1246
    %v1248 = vpop.f32.mrb[0].mxu0
    %1249 = vmatprep.mubr.f32.mxu0 0.0
    %1250 = vmatmul.mubr.f32.gmra.mrb[0].mxu0 %v1085
    %v1251 = vpop.f32.mrb[0].mxu0
    %v1252 = vadd.f32 0.0, %v1251
    %v1253 = vpop.f32.mrb[0].mxu0
    %1254 = vmatprep.mubr.f32.mxu0 0.0
    %1255 = vmatmul.mubr.f32.gmra.mrb[0].mxu0 %v1088
    %v1256 = vpop.f32.mrb[0].mxu0
    %v1257 = vadd.f32 0.0, %v1256
    %v1258 = vpop.f32.mrb[0].mxu0
    %1259 = vmatprep.mubr.f32.mxu0 0.0
    %1260 = vmatmul.mubr.f32.gmra.mrb[0].mxu0 %v1091
    %v1261 = vpop.f32.mrb[0].mxu0
    %v1262 = vadd.f32 0.0, %v1261
    %v1263 = vpop.f32.mrb[0].mxu0
    %1264 = vmatprep.mubr.f32.mxu0 0.0
    %1265 = vmatmul.mubr.f32.gmra.mrb[0].mxu0 %v1094
    %v1266 = vpop.f32.mrb[0].mxu0
    %v1267 = vadd.f32 0.0, %v1266
    %v1268 = vpop.f32.mrb[0].mxu0
    %1269 = vmatprep.mubr.f32.mxu0 0.0
    %1270 = vmatmul.mubr.f32.gmra.mrb[0].mxu0 %v1097
    %v1271 = vpop.f32.mrb[0].mxu0
    %v1272 = vadd.f32 0.0, %v1271
    %v1273 = vpop.f32.mrb[0].mxu0
    %1274 = vmatprep.mubr.f32.mxu0 0.0
    %1275 = vmatmul.mubr.f32.gmra.mrb[0].mxu0 %v1100
    %v1276 = vpop.f32.mrb[0].mxu0
    %v1277 = vadd.f32 0.0, %v1276
    %v1278 = vpop.f32.mrb[0].mxu0
    %1279 = vmatprep.mubr.f32.mxu0 0.0
    %1280 = vmatmul.mubr.f32.gmra.mrb[0].mxu0 %v1103
    %v1281 = vpop.f32.mrb[0].mxu0
    %v1282 = vadd.f32 0.0, %v1281
    %v1283 = vpop.f32.mrb[0].mxu0
    %1284 = vmatprep.mubr.f32.mxu0 0.0
    %1285 = vmatmul.mubr.f32.gmra.mrb[0].mxu0 %v1106
    %v1286 = vpop.f32.mrb[0].mxu0
    %v1287 = vadd.f32 0.0, %v1286
    %v1288 = vpop.f32.mrb[0].mxu0
    %1289 = vmatprep.mubr.f32.mxu0 0.0
    %1290 = vmatmul.mubr.f32.gmra.mrb[0].mxu0 %v1109
    %v1291 = vpop.f32.mrb[0].mxu0
    %v1292 = vadd.f32 0.0, %v1291
    %v1293 = vpop.f32.mrb[0].mxu0
    %1294 = vmatprep.mubr.f32.mxu0 0.0
    %1295 = vmatmul.mubr.f32.gmra.mrb[0].mxu0 %v1112
    %v1296 = vpop.f32.mrb[0].mxu0
    %v1297 = vadd.f32 0.0, %v1296
    %v1298 = vpop.f32.mrb[0].mxu0
    %1299 = vmatprep.mubr.f32.mxu0 0.0
    %1300 = vmatmul.mubr.f32.gmra.mrb[0].mxu0 %v1115
    %v1301 = vpop.f32.mrb[0].mxu0
    %v1302 = vadd.f32 0.0, %v1301
    %v1303 = vpop.f32.mrb[0].mxu0
    %1304 = vmatprep.mubr.f32.mxu0 0.0
    %1305 = vmatmul.mubr.f32.gmra.mrb[0].mxu0 %v1118
    %v1306 = vpop.f32.mrb[0].mxu0
    %v1307 = vadd.f32 0.0, %v1306
    %v1308 = vpop.f32.mrb[0].mxu0
    %1309 = vmatprep.mubr.f32.mxu0 0.0
    %1310 = vmatmul.mubr.f32.gmra.mrb[0].mxu0 %v1121
    %v1311 = vpop.f32.mrb[0].mxu0
    %v1312 = vadd.f32 0.0, %v1311
    %v1313 = vpop.f32.mrb[0].mxu0
    %1314 = vmatprep.mubr.f32.mxu0 0.0
    %1315 = vmatmul.mubr.f32.gmra.mrb[0].mxu0 %v1124
    %v1316 = vpop.f32.mrb[0].mxu0
    %v1317 = vadd.f32 0.0, %v1316
    %v1318 = vpop.f32.mrb[0].mxu0
    %1319 = vmatprep.mubr.f32.mxu0 0.0
    %1320 = vmatmul.mubr.f32.gmra.mrb[0].mxu0 %v1127
    %v1321 = vpop.f32.mrb[0].mxu0
    %v1322 = vadd.f32 0.0, %v1321
    %v1323 = vpop.f32.mrb[0].mxu0
    %1324 = vmatprep.mubr.f32.mxu0 0.0
    %1325 = vmatmul.mubr.f32.gmra.mrb[0].mxu0 %v1130
    %v1326 = vpop.f32.mrb[0].mxu0
    %v1327 = vadd.f32 0.0, %v1326
    %v1328 = vpop.f32.mrb[0].mxu0
    %1329 = vmatprep.mubr.f32.mxu0 0.0
    %1330 = vmatmul.mubr.f32.gmra.mrb[0].mxu0 %v1133
    %v1331 = vpop.f32.mrb[0].mxu0
    %v1332 = vadd.f32 0.0, %v1331
    %v1333 = vpop.f32.mrb[0].mxu0
    %1334 = vmatprep.mubr.f32.mxu0 0.0
    %1335 = vmatmul.mubr.f32.gmra.mrb[0].mxu0 %v1136
    %v1336 = vpop.f32.mrb[0].mxu0
    %v1337 = vadd.f32 0.0, %v1336
    %v1338 = vpop.f32.mrb[0].mxu0
    %1339 = vmatprep.mubr.f32.mxu0 0.0
    %1340 = vmatmul.mubr.f32.gmra.mrb[0].mxu0 %v1139
    %v1341 = vpop.f32.mrb[0].mxu0
    %v1342 = vadd.f32 0.0, %v1341
    %v1343 = vpop.f32.mrb[0].mxu0
    %1344 = vmatprep.mubr.f32.mxu0 0.0
    %1345 = vmatmul.mubr.f32.gmra.mrb[0].mxu0 %v1142
    %v1346 = vpop.f32.mrb[0].mxu0
    %v1347 = vadd.f32 0.0, %v1346
    %v1348 = vpop.f32.mrb[0].mxu0
    %1349 = vmatprep.mubr.f32.mxu0 0.0
    %1350 = vmatmul.mubr.f32.gmra.mrb[0].mxu0 %v1145
    %v1351 = vpop.f32.mrb[0].mxu0
    %v1352 = vadd.f32 0.0, %v1351
    %v1353 = vpop.f32.mrb[0].mxu0
    %1354 = vmatprep.mubr.f32.mxu0 0.0
    %1355 = vmatmul.mubr.f32.gmra.mrb[0].mxu0 %v1148
    %v1356 = vpop.f32.mrb[0].mxu0
    %v1357 = vadd.f32 0.0, %v1356
    %v1358 = vpop.f32.mrb[0].mxu0
    %1359 = vmatprep.mubr.f32.mxu0 0.0
    %1360 = vmatmul.mubr.f32.gmra.mrb[0].mxu0 %v1151
    %v1361 = vpop.f32.mrb[0].mxu0
    %v1362 = vadd.f32 0.0, %v1361
    %v1363 = vpop.f32.mrb[0].mxu0
    %1364 = vmatprep.mubr.f32.mxu0 0.0
    %1365 = vmatmul.mubr.f32.gmra.mrb[0].mxu0 %v1154
    %v1366 = vpop.f32.mrb[0].mxu0
    %v1367 = vadd.f32 0.0, %v1366
    %v1368 = vpop.f32.mrb[0].mxu0
    %1369 = vmatprep.mubr.f32.mxu0 0.0
    %1370 = vmatmul.mubr.f32.gmra.mrb[0].mxu0 %v1157
    %v1371 = vpop.f32.mrb[0].mxu0
    %v1372 = vadd.f32 0.0, %v1371
    %v1373 = vpop.f32.mrb[0].mxu0
    %1374 = vmatprep.mubr.f32.mxu0 0.0
    %1375 = vmatmul.mubr.f32.gmra.mrb[0].mxu0 %v1160
    %v1376 = vpop.f32.mrb[0].mxu0
    %v1377 = vadd.f32 0.0, %v1376
    %v1378 = vpop.f32.mrb[0].mxu0
    %1379 = vmatprep.mubr.f32.mxu0 0.0
    %1380 = vmatmul.mubr.f32.gmra.mrb[0].mxu0 %v1163
    %v1381 = vpop.f32.mrb[0].mxu0
    %v1382 = vadd.f32 0.0, %v1381
    %v1383 = vpop.f32.mrb[0].mxu0
    %1384 = vmatprep.mubr.f32.mxu0 0.0
    %1385 = vmatmul.mubr.f32.gmra.mrb[0].mxu0 %v1166
    %v1386 = vpop.f32.mrb[0].mxu0
    %v1387 = vadd.f32 0.0, %v1386
    %v1388 = vpop.f32.mrb[0].mxu0
    %1389 = vmatprep.mubr.f32.mxu0 0.0
    %1390 = vmatmul.mubr.f32.gmra.mrb[0].mxu0 %v1169
    %v1391 = vpop.f32.mrb[0].mxu0
    %v1392 = vadd.f32 0.0, %v1391
    %v1393 = vpop.f32.mrb[0].mxu0
    %1394 = vmatprep.mubr.f32.mxu0 0.0
    %1395 = vmatmul.mubr.f32.gmra.mrb[0].mxu0 %v1172
    %v1396 = vpop.f32.mrb[0].mxu0
    %v1397 = vadd.f32 0.0, %v1396
    %v1398 = vpop.f32.mrb[0].mxu0
    %1399 = vmatprep.mubr.f32.mxu0 0.0
    %1400 = vmatmul.mubr.f32.gmra.mrb[0].mxu0 %v1175
    %v1401 = vpop.f32.mrb[0].mxu0
    %v1402 = vadd.f32 0.0, %v1401
    %v1403 = vpop.f32.mrb[0].mxu0
    %1404 = vdwg.mxu0
    %v1405 = vadd.f32 %v1015, %v1247
    %v1406 = vadd.f32 %v1016, %v1252
    %v1407 = vadd.f32 %v1017, %v1257
    %v1408 = vadd.f32 %v1018, %v1262
    %v1409 = vadd.f32 %v1019, %v1267
    %v1410 = vadd.f32 %v1020, %v1272
    %v1411 = vadd.f32 %v1021, %v1277
    %v1412 = vadd.f32 %v1022, %v1282
    %v1413 = vadd.f32 %v1023, %v1287
    %v1414 = vadd.f32 %v1024, %v1292
    %v1415 = vadd.f32 %v1025, %v1297
    %v1416 = vadd.f32 %v1026, %v1302
    %v1417 = vadd.f32 %v1027, %v1307
    %v1418 = vadd.f32 %v1028, %v1312
    %v1419 = vadd.f32 %v1029, %v1317
    %v1420 = vadd.f32 %v1030, %v1322
    %v1421 = vadd.f32 %v1031, %v1327
    %v1422 = vadd.f32 %v1032, %v1332
    %v1423 = vadd.f32 %v1033, %v1337
    %v1424 = vadd.f32 %v1034, %v1342
    %v1425 = vadd.f32 %v1035, %v1347
    %v1426 = vadd.f32 %v1036, %v1352
    %v1427 = vadd.f32 %v1037, %v1357
    %v1428 = vadd.f32 %v1038, %v1362
    %v1429 = vadd.f32 %v1039, %v1367
    %v1430 = vadd.f32 %v1040, %v1372
    %v1431 = vadd.f32 %v1041, %v1377
    %v1432 = vadd.f32 %v1042, %v1382
    %v1433 = vadd.f32 %v1043, %v1387
    %v1434 = vadd.f32 %v1044, %v1392
    %v1435 = vadd.f32 %v1045, %v1397
    %v1436 = vadd.f32 %v1046, %v1402
    %v1437 = vld [vmem:[%s0 + $0x130] sm:$0xff]
    %v1438 = vld [vmem:[%s0 + $0x138] sm:$0xff]
    %v1439 = vld [vmem:[%s0 + $0x140] sm:$0xff]
    %v1440 = vld [vmem:[%s0 + $0x148] sm:$0xff]
    %v1441 = vld [vmem:[%s0 + $0x150] sm:$0xff]
    %v1442 = vld [vmem:[%s0 + $0x158] sm:$0xff]
    %v1443 = vld [vmem:[%s0 + $0x160] sm:$0xff]
    %v1444 = vld [vmem:[%s0 + $0x168] sm:$0xff]
    %v1445 = vld [vmem:[%s0 + $0x170] sm:$0xff]
    %v1446 = vld [vmem:[%s0 + $0x178] sm:$0xff]
    %v1447 = vld [vmem:[%s0 + $0x180] sm:$0xff]
    %v1448 = vld [vmem:[%s0 + $0x188] sm:$0xff]
    %v1449 = vld [vmem:[%s0 + $0x190] sm:$0xff]
    %v1450 = vld [vmem:[%s0 + $0x198] sm:$0xff]
    %v1451 = vld [vmem:[%s0 + $0x1a0] sm:$0xff]
    %v1452 = vld [vmem:[%s0 + $0x1a8] sm:$0xff]
    %v1453 = vld [vmem:[%s0 + $0x1b0] sm:$0xff]
    %v1454 = vld [vmem:[%s0 + $0x1b8] sm:$0xff]
    %v1455 = vld [vmem:[%s0 + $0x1c0] sm:$0xff]
    %v1456 = vld [vmem:[%s0 + $0x1c8] sm:$0xff]
    %v1457 = vld [vmem:[%s0 + $0x1d0] sm:$0xff]
    %v1458 = vld [vmem:[%s0 + $0x1d8] sm:$0xff]
    %v1459 = vld [vmem:[%s0 + $0x1e0] sm:$0xff]
    %v1460 = vld [vmem:[%s0 + $0x1e8] sm:$0xff]
    %v1461 = vld [vmem:[%s0 + $0x1f0] sm:$0xff]
    %v1462 = vld [vmem:[%s0 + $0x1f8] sm:$0xff]
    %v1463 = vld [vmem:[%s0 + $0x200] sm:$0xff]
    %v1464 = vld [vmem:[%s0 + $0x208] sm:$0xff]
    %v1465 = vld [vmem:[%s0 + $0x210] sm:$0xff]
    %v1466 = vld [vmem:[%s0 + $0x218] sm:$0xff]
    %v1467 = vld [vmem:[%s0 + $0x220] sm:$0xff]
    %v1468 = vld [vmem:[%s0 + $0x228] sm:$0xff]
    %s1469 = scalar_lea.vmem [#allocation2], 4
    %v1470 = vld [vmem:[%s1469] sm:$0x1]
    %v1472 = vsel %vm97, %v1437, 0
    %v1475 = vsel %vm97, %v1438, 0
    %v1478 = vsel %vm97, %v1439, 0
    %v1481 = vsel %vm97, %v1440, 0
    %v1484 = vsel %vm97, %v1441, 0
    %v1487 = vsel %vm97, %v1442, 0
    %v1490 = vsel %vm97, %v1443, 0
    %v1493 = vsel %vm97, %v1444, 0
    %v1496 = vsel %vm97, %v1445, 0
    %v1499 = vsel %vm97, %v1446, 0
    %v1502 = vsel %vm97, %v1447, 0
    %v1505 = vsel %vm97, %v1448, 0
    %v1508 = vsel %vm97, %v1449, 0
    %v1511 = vsel %vm97, %v1450, 0
    %v1514 = vsel %vm97, %v1451, 0
    %v1517 = vsel %vm97, %v1452, 0
    %v1520 = vsel %vm97, %v1453, 0
    %v1523 = vsel %vm97, %v1454, 0
    %v1526 = vsel %vm97, %v1455, 0
    %v1529 = vsel %vm97, %v1456, 0
    %v1532 = vsel %vm97, %v1457, 0
    %v1535 = vsel %vm97, %v1458, 0
    %v1538 = vsel %vm97, %v1459, 0
    %v1541 = vsel %vm97, %v1460, 0
    %v1544 = vsel %vm97, %v1461, 0
    %v1547 = vsel %vm97, %v1462, 0
    %v1550 = vsel %vm97, %v1463, 0
    %v1553 = vsel %vm97, %v1464, 0
    %v1556 = vsel %vm97, %v1465, 0
    %v1559 = vsel %vm97, %v1466, 0
    %v1562 = vsel %vm97, %v1467, 0
    %v1565 = vsel %vm97, %v1468, 0
    %v1568 = vsel %vm194, %v1470, 0
    %1570 = vmatprep.subr.mxu0 0.0
    %1571 = vmatpush1.msra.mxu0 %v1568
    %1572 = vmatprep.subr.mxu0 0.0
    %1573 = vmatpush1.msra.mxu0 0.0
    %1574 = vmatprep.subr.mxu0 0.0
    %1575 = vmatpush1.msra.mxu0 0.0
    %1576 = vmatprep.subr.mxu0 0.0
    %1577 = vmatpush1.msra.mxu0 0.0
    %1578 = vmatprep.subr.mxu0 0.0
    %1579 = vmatpush1.msra.mxu0 0.0
    %1580 = vmatprep.subr.mxu0 0.0
    %1581 = vmatpush1.msra.mxu0 0.0
    %1582 = vmatprep.subr.mxu0 0.0
    %1583 = vmatpush1.msra.mxu0 0.0
    %1584 = vmatprep.subr.mxu0 0.0
    %1585 = vmatpush1.msra.mxu0 0.0
    %1586 = vmatprep.subr.mxu0 0.0
    %1587 = vmatpush1.msra.mxu0 0.0
    %1588 = vmatprep.subr.mxu0 0.0
    %1589 = vmatpush1.msra.mxu0 0.0
    %1590 = vmatprep.subr.mxu0 0.0
    %1591 = vmatpush1.msra.mxu0 0.0
    %1592 = vmatprep.subr.mxu0 0.0
    %1593 = vmatpush1.msra.mxu0 0.0
    %1594 = vmatprep.subr.mxu0 0.0
    %1595 = vmatpush1.msra.mxu0 0.0
    %1596 = vmatprep.subr.mxu0 0.0
    %1597 = vmatpush1.msra.mxu0 0.0
    %1598 = vmatprep.subr.mxu0 0.0
    %1599 = vmatpush1.msra.mxu0 0.0
    %1600 = vmatprep.subr.mxu0 0.0
    %1601 = vmatpush1.msra.mxu0 0.0
    %1602 = vmatprep.subr.mxu0 0.0
    %1603 = vmatpush1.msra.mxu0 0.0
    %1604 = vmatprep.subr.mxu0 0.0
    %1605 = vmatpush1.msra.mxu0 0.0
    %1606 = vmatprep.subr.mxu0 0.0
    %1607 = vmatpush1.msra.mxu0 0.0
    %1608 = vmatprep.subr.mxu0 0.0
    %1609 = vmatpush1.msra.mxu0 0.0
    %1610 = vmatprep.subr.mxu0 0.0
    %1611 = vmatpush1.msra.mxu0 0.0
    %1612 = vmatprep.subr.mxu0 0.0
    %1613 = vmatpush1.msra.mxu0 0.0
    %1614 = vmatprep.subr.mxu0 0.0
    %1615 = vmatpush1.msra.mxu0 0.0
    %1616 = vmatprep.subr.mxu0 0.0
    %1617 = vmatpush1.msra.mxu0 0.0
    %1618 = vmatprep.subr.mxu0 0.0
    %1619 = vmatpush1.msra.mxu0 0.0
    %1620 = vmatprep.subr.mxu0 0.0
    %1621 = vmatpush1.msra.mxu0 0.0
    %1622 = vmatprep.subr.mxu0 0.0
    %1623 = vmatpush1.msra.mxu0 0.0
    %1624 = vmatprep.subr.mxu0 0.0
    %1625 = vmatpush1.msra.mxu0 0.0
    %1626 = vmatprep.subr.mxu0 0.0
    %1627 = vmatpush1.msra.mxu0 0.0
    %1628 = vmatprep.subr.mxu0 0.0
    %1629 = vmatpush1.msra.mxu0 0.0
    %1630 = vmatprep.subr.mxu0 0.0
    %1631 = vmatpush1.msra.mxu0 0.0
    %1632 = vmatprep.subr.mxu0 0.0
    %1633 = vmatpush1.msra.mxu0 0.0
    %1634 = vmatprep.mubr.f32.mxu0 0.0
    %1635 = vmatmul.mubr.f32.gmra.mrb[0].mxu0 %v1472
    %v1636 = vpop.f32.mrb[0].mxu0
    %v1637 = vadd.f32 0.0, %v1636
    %v1638 = vpop.f32.mrb[0].mxu0
    %1639 = vmatprep.mubr.f32.mxu0 0.0
    %1640 = vmatmul.mubr.f32.gmra.mrb[0].mxu0 %v1475
    %v1641 = vpop.f32.mrb[0].mxu0
    %v1642 = vadd.f32 0.0, %v1641
    %v1643 = vpop.f32.mrb[0].mxu0
    %1644 = vmatprep.mubr.f32.mxu0 0.0
    %1645 = vmatmul.mubr.f32.gmra.mrb[0].mxu0 %v1478
    %v1646 = vpop.f32.mrb[0].mxu0
    %v1647 = vadd.f32 0.0, %v1646
    %v1648 = vpop.f32.mrb[0].mxu0
    %1649 = vmatprep.mubr.f32.mxu0 0.0
    %1650 = vmatmul.mubr.f32.gmra.mrb[0].mxu0 %v1481
    %v1651 = vpop.f32.mrb[0].mxu0
    %v1652 = vadd.f32 0.0, %v1651
    %v1653 = vpop.f32.mrb[0].mxu0
    %1654 = vmatprep.mubr.f32.mxu0 0.0
    %1655 = vmatmul.mubr.f32.gmra.mrb[0].mxu0 %v1484
    %v1656 = vpop.f32.mrb[0].mxu0
    %v1657 = vadd.f32 0.0, %v1656
    %v1658 = vpop.f32.mrb[0].mxu0
    %1659 = vmatprep.mubr.f32.mxu0 0.0
    %1660 = vmatmul.mubr.f32.gmra.mrb[0].mxu0 %v1487
    %v1661 = vpop.f32.mrb[0].mxu0
    %v1662 = vadd.f32 0.0, %v1661
    %v1663 = vpop.f32.mrb[0].mxu0
    %1664 = vmatprep.mubr.f32.mxu0 0.0
    %1665 = vmatmul.mubr.f32.gmra.mrb[0].mxu0 %v1490
    %v1666 = vpop.f32.mrb[0].mxu0
    %v1667 = vadd.f32 0.0, %v1666
    %v1668 = vpop.f32.mrb[0].mxu0
    %1669 = vmatprep.mubr.f32.mxu0 0.0
    %1670 = vmatmul.mubr.f32.gmra.mrb[0].mxu0 %v1493
    %v1671 = vpop.f32.mrb[0].mxu0
    %v1672 = vadd.f32 0.0, %v1671
    %v1673 = vpop.f32.mrb[0].mxu0
    %1674 = vmatprep.mubr.f32.mxu0 0.0
    %1675 = vmatmul.mubr.f32.gmra.mrb[0].mxu0 %v1496
    %v1676 = vpop.f32.mrb[0].mxu0
    %v1677 = vadd.f32 0.0, %v1676
    %v1678 = vpop.f32.mrb[0].mxu0
    %1679 = vmatprep.mubr.f32.mxu0 0.0
    %1680 = vmatmul.mubr.f32.gmra.mrb[0].mxu0 %v1499
    %v1681 = vpop.f32.mrb[0].mxu0
    %v1682 = vadd.f32 0.0, %v1681
    %v1683 = vpop.f32.mrb[0].mxu0
    %1684 = vmatprep.mubr.f32.mxu0 0.0
    %1685 = vmatmul.mubr.f32.gmra.mrb[0].mxu0 %v1502
    %v1686 = vpop.f32.mrb[0].mxu0
    %v1687 = vadd.f32 0.0, %v1686
    %v1688 = vpop.f32.mrb[0].mxu0
    %1689 = vmatprep.mubr.f32.mxu0 0.0
    %1690 = vmatmul.mubr.f32.gmra.mrb[0].mxu0 %v1505
    %v1691 = vpop.f32.mrb[0].mxu0
    %v1692 = vadd.f32 0.0, %v1691
    %v1693 = vpop.f32.mrb[0].mxu0
    %1694 = vmatprep.mubr.f32.mxu0 0.0
    %1695 = vmatmul.mubr.f32.gmra.mrb[0].mxu0 %v1508
    %v1696 = vpop.f32.mrb[0].mxu0
    %v1697 = vadd.f32 0.0, %v1696
    %v1698 = vpop.f32.mrb[0].mxu0
    %1699 = vmatprep.mubr.f32.mxu0 0.0
    %1700 = vmatmul.mubr.f32.gmra.mrb[0].mxu0 %v1511
    %v1701 = vpop.f32.mrb[0].mxu0
    %v1702 = vadd.f32 0.0, %v1701
    %v1703 = vpop.f32.mrb[0].mxu0
    %1704 = vmatprep.mubr.f32.mxu0 0.0
    %1705 = vmatmul.mubr.f32.gmra.mrb[0].mxu0 %v1514
    %v1706 = vpop.f32.mrb[0].mxu0
    %v1707 = vadd.f32 0.0, %v1706
    %v1708 = vpop.f32.mrb[0].mxu0
    %1709 = vmatprep.mubr.f32.mxu0 0.0
    %1710 = vmatmul.mubr.f32.gmra.mrb[0].mxu0 %v1517
    %v1711 = vpop.f32.mrb[0].mxu0
    %v1712 = vadd.f32 0.0, %v1711
    %v1713 = vpop.f32.mrb[0].mxu0
    %1714 = vmatprep.mubr.f32.mxu0 0.0
    %1715 = vmatmul.mubr.f32.gmra.mrb[0].mxu0 %v1520
    %v1716 = vpop.f32.mrb[0].mxu0
    %v1717 = vadd.f32 0.0, %v1716
    %v1718 = vpop.f32.mrb[0].mxu0
    %1719 = vmatprep.mubr.f32.mxu0 0.0
    %1720 = vmatmul.mubr.f32.gmra.mrb[0].mxu0 %v1523
    %v1721 = vpop.f32.mrb[0].mxu0
    %v1722 = vadd.f32 0.0, %v1721
    %v1723 = vpop.f32.mrb[0].mxu0
    %1724 = vmatprep.mubr.f32.mxu0 0.0
    %1725 = vmatmul.mubr.f32.gmra.mrb[0].mxu0 %v1526
    %v1726 = vpop.f32.mrb[0].mxu0
    %v1727 = vadd.f32 0.0, %v1726
    %v1728 = vpop.f32.mrb[0].mxu0
    %1729 = vmatprep.mubr.f32.mxu0 0.0
    %1730 = vmatmul.mubr.f32.gmra.mrb[0].mxu0 %v1529
    %v1731 = vpop.f32.mrb[0].mxu0
    %v1732 = vadd.f32 0.0, %v1731
    %v1733 = vpop.f32.mrb[0].mxu0
    %1734 = vmatprep.mubr.f32.mxu0 0.0
    %1735 = vmatmul.mubr.f32.gmra.mrb[0].mxu0 %v1532
    %v1736 = vpop.f32.mrb[0].mxu0
    %v1737 = vadd.f32 0.0, %v1736
    %v1738 = vpop.f32.mrb[0].mxu0
    %1739 = vmatprep.mubr.f32.mxu0 0.0
    %1740 = vmatmul.mubr.f32.gmra.mrb[0].mxu0 %v1535
    %v1741 = vpop.f32.mrb[0].mxu0
    %v1742 = vadd.f32 0.0, %v1741
    %v1743 = vpop.f32.mrb[0].mxu0
    %1744 = vmatprep.mubr.f32.mxu0 0.0
    %1745 = vmatmul.mubr.f32.gmra.mrb[0].mxu0 %v1538
    %v1746 = vpop.f32.mrb[0].mxu0
    %v1747 = vadd.f32 0.0, %v1746
    %v1748 = vpop.f32.mrb[0].mxu0
    %1749 = vmatprep.mubr.f32.mxu0 0.0
    %1750 = vmatmul.mubr.f32.gmra.mrb[0].mxu0 %v1541
    %v1751 = vpop.f32.mrb[0].mxu0
    %v1752 = vadd.f32 0.0, %v1751
    %v1753 = vpop.f32.mrb[0].mxu0
    %1754 = vmatprep.mubr.f32.mxu0 0.0
    %1755 = vmatmul.mubr.f32.gmra.mrb[0].mxu0 %v1544
    %v1756 = vpop.f32.mrb[0].mxu0
    %v1757 = vadd.f32 0.0, %v1756
    %v1758 = vpop.f32.mrb[0].mxu0
    %1759 = vmatprep.mubr.f32.mxu0 0.0
    %1760 = vmatmul.mubr.f32.gmra.mrb[0].mxu0 %v1547
    %v1761 = vpop.f32.mrb[0].mxu0
    %v1762 = vadd.f32 0.0, %v1761
    %v1763 = vpop.f32.mrb[0].mxu0
    %1764 = vmatprep.mubr.f32.mxu0 0.0
    %1765 = vmatmul.mubr.f32.gmra.mrb[0].mxu0 %v1550
    %v1766 = vpop.f32.mrb[0].mxu0
    %v1767 = vadd.f32 0.0, %v1766
    %v1768 = vpop.f32.mrb[0].mxu0
    %1769 = vmatprep.mubr.f32.mxu0 0.0
    %1770 = vmatmul.mubr.f32.gmra.mrb[0].mxu0 %v1553
    %v1771 = vpop.f32.mrb[0].mxu0
    %v1772 = vadd.f32 0.0, %v1771
    %v1773 = vpop.f32.mrb[0].mxu0
    %1774 = vmatprep.mubr.f32.mxu0 0.0
    %1775 = vmatmul.mubr.f32.gmra.mrb[0].mxu0 %v1556
    %v1776 = vpop.f32.mrb[0].mxu0
    %v1777 = vadd.f32 0.0, %v1776
    %v1778 = vpop.f32.mrb[0].mxu0
    %1779 = vmatprep.mubr.f32.mxu0 0.0
    %1780 = vmatmul.mubr.f32.gmra.mrb[0].mxu0 %v1559
    %v1781 = vpop.f32.mrb[0].mxu0
    %v1782 = vadd.f32 0.0, %v1781
    %v1783 = vpop.f32.mrb[0].mxu0
    %1784 = vmatprep.mubr.f32.mxu0 0.0
    %1785 = vmatmul.mubr.f32.gmra.mrb[0].mxu0 %v1562
    %v1786 = vpop.f32.mrb[0].mxu0
    %v1787 = vadd.f32 0.0, %v1786
    %v1788 = vpop.f32.mrb[0].mxu0
    %1789 = vmatprep.mubr.f32.mxu0 0.0
    %1790 = vmatmul.mubr.f32.gmra.mrb[0].mxu0 %v1565
    %v1791 = vpop.f32.mrb[0].mxu0
    %v1792 = vadd.f32 0.0, %v1791
    %v1793 = vpop.f32.mrb[0].mxu0
    %1794 = vdwg.mxu0
    %v1795 = vadd.f32 %v1405, %v1637
    %v1796 = vadd.f32 %v1406, %v1642
    %v1797 = vadd.f32 %v1407, %v1647
    %v1798 = vadd.f32 %v1408, %v1652
    %v1799 = vadd.f32 %v1409, %v1657
    %v1800 = vadd.f32 %v1410, %v1662
    %v1801 = vadd.f32 %v1411, %v1667
    %v1802 = vadd.f32 %v1412, %v1672
    %v1803 = vadd.f32 %v1413, %v1677
    %v1804 = vadd.f32 %v1414, %v1682
    %v1805 = vadd.f32 %v1415, %v1687
    %v1806 = vadd.f32 %v1416, %v1692
    %v1807 = vadd.f32 %v1417, %v1697
    %v1808 = vadd.f32 %v1418, %v1702
    %v1809 = vadd.f32 %v1419, %v1707
    %v1810 = vadd.f32 %v1420, %v1712
    %v1811 = vadd.f32 %v1421, %v1717
    %v1812 = vadd.f32 %v1422, %v1722
    %v1813 = vadd.f32 %v1423, %v1727
    %v1814 = vadd.f32 %v1424, %v1732
    %v1815 = vadd.f32 %v1425, %v1737
    %v1816 = vadd.f32 %v1426, %v1742
    %v1817 = vadd.f32 %v1427, %v1747
    %v1818 = vadd.f32 %v1428, %v1752
    %v1819 = vadd.f32 %v1429, %v1757
    %v1820 = vadd.f32 %v1430, %v1762
    %v1821 = vadd.f32 %v1431, %v1767
    %v1822 = vadd.f32 %v1432, %v1772
    %v1823 = vadd.f32 %v1433, %v1777
    %v1824 = vadd.f32 %v1434, %v1782
    %v1825 = vadd.f32 %v1435, %v1787
    %v1826 = vadd.f32 %v1436, %v1792
    %v1827 = vld [vmem:[%s0 + $0x140] sm:$0xff]
    %v1828 = vld [vmem:[%s0 + $0x148] sm:$0xff]
    %v1829 = vld [vmem:[%s0 + $0x150] sm:$0xff]
    %v1830 = vld [vmem:[%s0 + $0x158] sm:$0xff]
    %v1831 = vld [vmem:[%s0 + $0x160] sm:$0xff]
    %v1832 = vld [vmem:[%s0 + $0x168] sm:$0xff]
    %v1833 = vld [vmem:[%s0 + $0x170] sm:$0xff]
    %v1834 = vld [vmem:[%s0 + $0x178] sm:$0xff]
    %v1835 = vld [vmem:[%s0 + $0x180] sm:$0xff]
    %v1836 = vld [vmem:[%s0 + $0x188] sm:$0xff]
    %v1837 = vld [vmem:[%s0 + $0x190] sm:$0xff]
    %v1838 = vld [vmem:[%s0 + $0x198] sm:$0xff]
    %v1839 = vld [vmem:[%s0 + $0x1a0] sm:$0xff]
    %v1840 = vld [vmem:[%s0 + $0x1a8] sm:$0xff]
    %v1841 = vld [vmem:[%s0 + $0x1b0] sm:$0xff]
    %v1842 = vld [vmem:[%s0 + $0x1b8] sm:$0xff]
    %v1843 = vld [vmem:[%s0 + $0x1c0] sm:$0xff]
    %v1844 = vld [vmem:[%s0 + $0x1c8] sm:$0xff]
    %v1845 = vld [vmem:[%s0 + $0x1d0] sm:$0xff]
    %v1846 = vld [vmem:[%s0 + $0x1d8] sm:$0xff]
    %v1847 = vld [vmem:[%s0 + $0x1e0] sm:$0xff]
    %v1848 = vld [vmem:[%s0 + $0x1e8] sm:$0xff]
    %v1849 = vld [vmem:[%s0 + $0x1f0] sm:$0xff]
    %v1850 = vld [vmem:[%s0 + $0x1f8] sm:$0xff]
    %v1851 = vld [vmem:[%s0 + $0x200] sm:$0xff]
    %v1852 = vld [vmem:[%s0 + $0x208] sm:$0xff]
    %v1853 = vld [vmem:[%s0 + $0x210] sm:$0xff]
    %v1854 = vld [vmem:[%s0 + $0x218] sm:$0xff]
    %v1855 = vld [vmem:[%s0 + $0x220] sm:$0xff]
    %v1856 = vld [vmem:[%s0 + $0x228] sm:$0xff]
    %v1857 = vld [vmem:[%s0 + $0x230] sm:$0xff]
    %v1858 = vld [vmem:[%s0 + $0x238] sm:$0xff]
    %s1859 = scalar_lea.vmem [#allocation2], 7
    %v1860 = vld [vmem:[%s1859] sm:$0x1]
    %v1862 = vsel %vm97, %v1827, 0
    %v1865 = vsel %vm97, %v1828, 0
    %v1868 = vsel %vm97, %v1829, 0
    %v1871 = vsel %vm97, %v1830, 0
    %v1874 = vsel %vm97, %v1831, 0
    %v1877 = vsel %vm97, %v1832, 0
    %v1880 = vsel %vm97, %v1833, 0
    %v1883 = vsel %vm97, %v1834, 0
    %v1886 = vsel %vm97, %v1835, 0
    %v1889 = vsel %vm97, %v1836, 0
    %v1892 = vsel %vm97, %v1837, 0
    %v1895 = vsel %vm97, %v1838, 0
    %v1898 = vsel %vm97, %v1839, 0
    %v1901 = vsel %vm97, %v1840, 0
    %v1904 = vsel %vm97, %v1841, 0
    %v1907 = vsel %vm97, %v1842, 0
    %v1910 = vsel %vm97, %v1843, 0
    %v1913 = vsel %vm97, %v1844, 0
    %v1916 = vsel %vm97, %v1845, 0
    %v1919 = vsel %vm97, %v1846, 0
    %v1922 = vsel %vm97, %v1847, 0
    %v1925 = vsel %vm97, %v1848, 0
    %v1928 = vsel %vm97, %v1849, 0
    %v1931 = vsel %vm97, %v1850, 0
    %v1934 = vsel %vm97, %v1851, 0
    %v1937 = vsel %vm97, %v1852, 0
    %v1940 = vsel %vm97, %v1853, 0
    %v1943 = vsel %vm97, %v1854, 0
    %v1946 = vsel %vm97, %v1855, 0
    %v1949 = vsel %vm97, %v1856, 0
    %v1952 = vsel %vm97, %v1857, 0
    %v1955 = vsel %vm97, %v1858, 0
    %v1958 = vsel %vm194, %v1860, 0
    %1960 = vmatprep.subr.mxu0 0.0
    %1961 = vmatpush1.msra.mxu0 %v1958
    %1962 = vmatprep.subr.mxu0 0.0
    %1963 = vmatpush1.msra.mxu0 0.0
    %1964 = vmatprep.subr.mxu0 0.0
    %1965 = vmatpush1.msra.mxu0 0.0
    %1966 = vmatprep.subr.mxu0 0.0
    %1967 = vmatpush1.msra.mxu0 0.0
    %1968 = vmatprep.subr.mxu0 0.0
    %1969 = vmatpush1.msra.mxu0 0.0
    %1970 = vmatprep.subr.mxu0 0.0
    %1971 = vmatpush1.msra.mxu0 0.0
    %1972 = vmatprep.subr.mxu0 0.0
    %1973 = vmatpush1.msra.mxu0 0.0
    %1974 = vmatprep.subr.mxu0 0.0
    %1975 = vmatpush1.msra.mxu0 0.0
    %1976 = vmatprep.subr.mxu0 0.0
    %1977 = vmatpush1.msra.mxu0 0.0
    %1978 = vmatprep.subr.mxu0 0.0
    %1979 = vmatpush1.msra.mxu0 0.0
    %1980 = vmatprep.subr.mxu0 0.0
    %1981 = vmatpush1.msra.mxu0 0.0
    %1982 = vmatprep.subr.mxu0 0.0
    %1983 = vmatpush1.msra.mxu0 0.0
    %1984 = vmatprep.subr.mxu0 0.0
    %1985 = vmatpush1.msra.mxu0 0.0
    %1986 = vmatprep.subr.mxu0 0.0
    %1987 = vmatpush1.msra.mxu0 0.0
    %1988 = vmatprep.subr.mxu0 0.0
    %1989 = vmatpush1.msra.mxu0 0.0
    %1990 = vmatprep.subr.mxu0 0.0
    %1991 = vmatpush1.msra.mxu0 0.0
    %1992 = vmatprep.subr.mxu0 0.0
    %1993 = vmatpush1.msra.mxu0 0.0
    %1994 = vmatprep.subr.mxu0 0.0
    %1995 = vmatpush1.msra.mxu0 0.0
    %1996 = vmatprep.subr.mxu0 0.0
    %1997 = vmatpush1.msra.mxu0 0.0
    %1998 = vmatprep.subr.mxu0 0.0
    %1999 = vmatpush1.msra.mxu0 0.0
    %2000 = vmatprep.subr.mxu0 0.0
    %2001 = vmatpush1.msra.mxu0 0.0
    %2002 = vmatprep.subr.mxu0 0.0
    %2003 = vmatpush1.msra.mxu0 0.0
    %2004 = vmatprep.subr.mxu0 0.0
    %2005 = vmatpush1.msra.mxu0 0.0
    %2006 = vmatprep.subr.mxu0 0.0
    %2007 = vmatpush1.msra.mxu0 0.0
    %2008 = vmatprep.subr.mxu0 0.0
    %2009 = vmatpush1.msra.mxu0 0.0
    %2010 = vmatprep.subr.mxu0 0.0
    %2011 = vmatpush1.msra.mxu0 0.0
    %2012 = vmatprep.subr.mxu0 0.0
    %2013 = vmatpush1.msra.mxu0 0.0
    %2014 = vmatprep.subr.mxu0 0.0
    %2015 = vmatpush1.msra.mxu0 0.0
    %2016 = vmatprep.subr.mxu0 0.0
    %2017 = vmatpush1.msra.mxu0 0.0
    %2018 = vmatprep.subr.mxu0 0.0
    %2019 = vmatpush1.msra.mxu0 0.0
    %2020 = vmatprep.subr.mxu0 0.0
    %2021 = vmatpush1.msra.mxu0 0.0
    %2022 = vmatprep.subr.mxu0 0.0
    %2023 = vmatpush1.msra.mxu0 0.0
    %2024 = vmatprep.mubr.f32.mxu0 0.0
    %2025 = vmatmul.mubr.f32.gmra.mrb[0].mxu0 %v1862
    %v2026 = vpop.f32.mrb[0].mxu0
    %v2027 = vadd.f32 0.0, %v2026
    %v2028 = vpop.f32.mrb[0].mxu0
    %2029 = vmatprep.mubr.f32.mxu0 0.0
    %2030 = vmatmul.mubr.f32.gmra.mrb[0].mxu0 %v1865
    %v2031 = vpop.f32.mrb[0].mxu0
    %v2032 = vadd.f32 0.0, %v2031
    %v2033 = vpop.f32.mrb[0].mxu0
    %2034 = vmatprep.mubr.f32.mxu0 0.0
    %2035 = vmatmul.mubr.f32.gmra.mrb[0].mxu0 %v1868
    %v2036 = vpop.f32.mrb[0].mxu0
    %v2037 = vadd.f32 0.0, %v2036
    %v2038 = vpop.f32.mrb[0].mxu0
    %2039 = vmatprep.mubr.f32.mxu0 0.0
    %2040 = vmatmul.mubr.f32.gmra.mrb[0].mxu0 %v1871
    %v2041 = vpop.f32.mrb[0].mxu0
    %v2042 = vadd.f32 0.0, %v2041
    %v2043 = vpop.f32.mrb[0].mxu0
    %2044 = vmatprep.mubr.f32.mxu0 0.0
    %2045 = vmatmul.mubr.f32.gmra.mrb[0].mxu0 %v1874
    %v2046 = vpop.f32.mrb[0].mxu0
    %v2047 = vadd.f32 0.0, %v2046
    %v2048 = vpop.f32.mrb[0].mxu0
    %2049 = vmatprep.mubr.f32.mxu0 0.0
    %2050 = vmatmul.mubr.f32.gmra.mrb[0].mxu0 %v1877
    %v2051 = vpop.f32.mrb[0].mxu0
    %v2052 = vadd.f32 0.0, %v2051
    %v2053 = vpop.f32.mrb[0].mxu0
    %2054 = vmatprep.mubr.f32.mxu0 0.0
    %2055 = vmatmul.mubr.f32.gmra.mrb[0].mxu0 %v1880
    %v2056 = vpop.f32.mrb[0].mxu0
    %v2057 = vadd.f32 0.0, %v2056
    %v2058 = vpop.f32.mrb[0].mxu0
    %2059 = vmatprep.mubr.f32.mxu0 0.0
    %2060 = vmatmul.mubr.f32.gmra.mrb[0].mxu0 %v1883
    %v2061 = vpop.f32.mrb[0].mxu0
    %v2062 = vadd.f32 0.0, %v2061
    %v2063 = vpop.f32.mrb[0].mxu0
    %2064 = vmatprep.mubr.f32.mxu0 0.0
    %2065 = vmatmul.mubr.f32.gmra.mrb[0].mxu0 %v1886
    %v2066 = vpop.f32.mrb[0].mxu0
    %v2067 = vadd.f32 0.0, %v2066
    %v2068 = vpop.f32.mrb[0].mxu0
    %2069 = vmatprep.mubr.f32.mxu0 0.0
    %2070 = vmatmul.mubr.f32.gmra.mrb[0].mxu0 %v1889
    %v2071 = vpop.f32.mrb[0].mxu0
    %v2072 = vadd.f32 0.0, %v2071
    %v2073 = vpop.f32.mrb[0].mxu0
    %2074 = vmatprep.mubr.f32.mxu0 0.0
    %2075 = vmatmul.mubr.f32.gmra.mrb[0].mxu0 %v1892
    %v2076 = vpop.f32.mrb[0].mxu0
    %v2077 = vadd.f32 0.0, %v2076
    %v2078 = vpop.f32.mrb[0].mxu0
    %2079 = vmatprep.mubr.f32.mxu0 0.0
    %2080 = vmatmul.mubr.f32.gmra.mrb[0].mxu0 %v1895
    %v2081 = vpop.f32.mrb[0].mxu0
    %v2082 = vadd.f32 0.0, %v2081
    %v2083 = vpop.f32.mrb[0].mxu0
    %2084 = vmatprep.mubr.f32.mxu0 0.0
    %2085 = vmatmul.mubr.f32.gmra.mrb[0].mxu0 %v1898
    %v2086 = vpop.f32.mrb[0].mxu0
    %v2087 = vadd.f32 0.0, %v2086
    %v2088 = vpop.f32.mrb[0].mxu0
    %2089 = vmatprep.mubr.f32.mxu0 0.0
    %2090 = vmatmul.mubr.f32.gmra.mrb[0].mxu0 %v1901
    %v2091 = vpop.f32.mrb[0].mxu0
    %v2092 = vadd.f32 0.0, %v2091
    %v2093 = vpop.f32.mrb[0].mxu0
    %2094 = vmatprep.mubr.f32.mxu0 0.0
    %2095 = vmatmul.mubr.f32.gmra.mrb[0].mxu0 %v1904
    %v2096 = vpop.f32.mrb[0].mxu0
    %v2097 = vadd.f32 0.0, %v2096
    %v2098 = vpop.f32.mrb[0].mxu0
    %2099 = vmatprep.mubr.f32.mxu0 0.0
    %2100 = vmatmul.mubr.f32.gmra.mrb[0].mxu0 %v1907
    %v2101 = vpop.f32.mrb[0].mxu0
    %v2102 = vadd.f32 0.0, %v2101
    %v2103 = vpop.f32.mrb[0].mxu0
    %2104 = vmatprep.mubr.f32.mxu0 0.0
    %2105 = vmatmul.mubr.f32.gmra.mrb[0].mxu0 %v1910
    %v2106 = vpop.f32.mrb[0].mxu0
    %v2107 = vadd.f32 0.0, %v2106
    %v2108 = vpop.f32.mrb[0].mxu0
    %2109 = vmatprep.mubr.f32.mxu0 0.0
    %2110 = vmatmul.mubr.f32.gmra.mrb[0].mxu0 %v1913
    %v2111 = vpop.f32.mrb[0].mxu0
    %v2112 = vadd.f32 0.0, %v2111
    %v2113 = vpop.f32.mrb[0].mxu0
    %2114 = vmatprep.mubr.f32.mxu0 0.0
    %2115 = vmatmul.mubr.f32.gmra.mrb[0].mxu0 %v1916
    %v2116 = vpop.f32.mrb[0].mxu0
    %v2117 = vadd.f32 0.0, %v2116
    %v2118 = vpop.f32.mrb[0].mxu0
    %2119 = vmatprep.mubr.f32.mxu0 0.0
    %2120 = vmatmul.mubr.f32.gmra.mrb[0].mxu0 %v1919
    %v2121 = vpop.f32.mrb[0].mxu0
    %v2122 = vadd.f32 0.0, %v2121
    %v2123 = vpop.f32.mrb[0].mxu0
    %2124 = vmatprep.mubr.f32.mxu0 0.0
    %2125 = vmatmul.mubr.f32.gmra.mrb[0].mxu0 %v1922
    %v2126 = vpop.f32.mrb[0].mxu0
    %v2127 = vadd.f32 0.0, %v2126
    %v2128 = vpop.f32.mrb[0].mxu0
    %2129 = vmatprep.mubr.f32.mxu0 0.0
    %2130 = vmatmul.mubr.f32.gmra.mrb[0].mxu0 %v1925
    %v2131 = vpop.f32.mrb[0].mxu0
    %v2132 = vadd.f32 0.0, %v2131
    %v2133 = vpop.f32.mrb[0].mxu0
    %2134 = vmatprep.mubr.f32.mxu0 0.0
    %2135 = vmatmul.mubr.f32.gmra.mrb[0].mxu0 %v1928
    %v2136 = vpop.f32.mrb[0].mxu0
    %v2137 = vadd.f32 0.0, %v2136
    %v2138 = vpop.f32.mrb[0].mxu0
    %2139 = vmatprep.mubr.f32.mxu0 0.0
    %2140 = vmatmul.mubr.f32.gmra.mrb[0].mxu0 %v1931
    %v2141 = vpop.f32.mrb[0].mxu0
    %v2142 = vadd.f32 0.0, %v2141
    %v2143 = vpop.f32.mrb[0].mxu0
    %2144 = vmatprep.mubr.f32.mxu0 0.0
    %2145 = vmatmul.mubr.f32.gmra.mrb[0].mxu0 %v1934
    %v2146 = vpop.f32.mrb[0].mxu0
    %v2147 = vadd.f32 0.0, %v2146
    %v2148 = vpop.f32.mrb[0].mxu0
    %2149 = vmatprep.mubr.f32.mxu0 0.0
    %2150 = vmatmul.mubr.f32.gmra.mrb[0].mxu0 %v1937
    %v2151 = vpop.f32.mrb[0].mxu0
    %v2152 = vadd.f32 0.0, %v2151
    %v2153 = vpop.f32.mrb[0].mxu0
    %2154 = vmatprep.mubr.f32.mxu0 0.0
    %2155 = vmatmul.mubr.f32.gmra.mrb[0].mxu0 %v1940
    %v2156 = vpop.f32.mrb[0].mxu0
    %v2157 = vadd.f32 0.0, %v2156
    %v2158 = vpop.f32.mrb[0].mxu0
    %2159 = vmatprep.mubr.f32.mxu0 0.0
    %2160 = vmatmul.mubr.f32.gmra.mrb[0].mxu0 %v1943
    %v2161 = vpop.f32.mrb[0].mxu0
    %v2162 = vadd.f32 0.0, %v2161
    %v2163 = vpop.f32.mrb[0].mxu0
    %2164 = vmatprep.mubr.f32.mxu0 0.0
    %2165 = vmatmul.mubr.f32.gmra.mrb[0].mxu0 %v1946
    %v2166 = vpop.f32.mrb[0].mxu0
    %v2167 = vadd.f32 0.0, %v2166
    %v2168 = vpop.f32.mrb[0].mxu0
    %2169 = vmatprep.mubr.f32.mxu0 0.0
    %2170 = vmatmul.mubr.f32.gmra.mrb[0].mxu0 %v1949
    %v2171 = vpop.f32.mrb[0].mxu0
    %v2172 = vadd.f32 0.0, %v2171
    %v2173 = vpop.f32.mrb[0].mxu0
    %2174 = vmatprep.mubr.f32.mxu0 0.0
    %2175 = vmatmul.mubr.f32.gmra.mrb[0].mxu0 %v1952
    %v2176 = vpop.f32.mrb[0].mxu0
    %v2177 = vadd.f32 0.0, %v2176
    %v2178 = vpop.f32.mrb[0].mxu0
    %2179 = vmatprep.mubr.f32.mxu0 0.0
    %2180 = vmatmul.mubr.f32.gmra.mrb[0].mxu0 %v1955
    %v2181 = vpop.f32.mrb[0].mxu0
    %v2182 = vadd.f32 0.0, %v2181
    %v2183 = vpop.f32.mrb[0].mxu0
    %2184 = vdwg.mxu0
    %v2185 = vadd.f32 %v1795, %v2027
    %v2186 = vadd.f32 %v1796, %v2032
    %v2187 = vadd.f32 %v1797, %v2037
    %v2188 = vadd.f32 %v1798, %v2042
    %v2189 = vadd.f32 %v1799, %v2047
    %v2190 = vadd.f32 %v1800, %v2052
    %v2191 = vadd.f32 %v1801, %v2057
    %v2192 = vadd.f32 %v1802, %v2062
    %v2193 = vadd.f32 %v1803, %v2067
    %v2194 = vadd.f32 %v1804, %v2072
    %v2195 = vadd.f32 %v1805, %v2077
    %v2196 = vadd.f32 %v1806, %v2082
    %v2197 = vadd.f32 %v1807, %v2087
    %v2198 = vadd.f32 %v1808, %v2092
    %v2199 = vadd.f32 %v1809, %v2097
    %v2200 = vadd.f32 %v1810, %v2102
    %v2201 = vadd.f32 %v1811, %v2107
    %v2202 = vadd.f32 %v1812, %v2112
    %v2203 = vadd.f32 %v1813, %v2117
    %v2204 = vadd.f32 %v1814, %v2122
    %v2205 = vadd.f32 %v1815, %v2127
    %v2206 = vadd.f32 %v1816, %v2132
    %v2207 = vadd.f32 %v1817, %v2137
    %v2208 = vadd.f32 %v1818, %v2142
    %v2209 = vadd.f32 %v1819, %v2147
    %v2210 = vadd.f32 %v1820, %v2152
    %v2211 = vadd.f32 %v1821, %v2157
    %v2212 = vadd.f32 %v1822, %v2162
    %v2213 = vadd.f32 %v1823, %v2167
    %v2214 = vadd.f32 %v1824, %v2172
    %v2215 = vadd.f32 %v1825, %v2177
    %v2216 = vadd.f32 %v1826, %v2182
    %v2217 = vld [vmem:[%s0 + $0x240] sm:$0xff]
    %v2218 = vld [vmem:[%s0 + $0x248] sm:$0xff]
    %v2219 = vld [vmem:[%s0 + $0x250] sm:$0xff]
    %v2220 = vld [vmem:[%s0 + $0x258] sm:$0xff]
    %v2221 = vld [vmem:[%s0 + $0x260] sm:$0xff]
    %v2222 = vld [vmem:[%s0 + $0x268] sm:$0xff]
    %v2223 = vld [vmem:[%s0 + $0x270] sm:$0xff]
    %v2224 = vld [vmem:[%s0 + $0x278] sm:$0xff]
    %v2225 = vld [vmem:[%s0 + $0x280] sm:$0xff]
    %v2226 = vld [vmem:[%s0 + $0x288] sm:$0xff]
    %v2227 = vld [vmem:[%s0 + $0x290] sm:$0xff]
    %v2228 = vld [vmem:[%s0 + $0x298] sm:$0xff]
    %v2229 = vld [vmem:[%s0 + $0x2a0] sm:$0xff]
    %v2230 = vld [vmem:[%s0 + $0x2a8] sm:$0xff]
    %v2231 = vld [vmem:[%s0 + $0x2b0] sm:$0xff]
    %v2232 = vld [vmem:[%s0 + $0x2b8] sm:$0xff]
    %v2233 = vld [vmem:[%s0 + $0x2c0] sm:$0xff]
    %v2234 = vld [vmem:[%s0 + $0x2c8] sm:$0xff]
    %v2235 = vld [vmem:[%s0 + $0x2d0] sm:$0xff]
    %v2236 = vld [vmem:[%s0 + $0x2d8] sm:$0xff]
    %v2237 = vld [vmem:[%s0 + $0x2e0] sm:$0xff]
    %v2238 = vld [vmem:[%s0 + $0x2e8] sm:$0xff]
    %v2239 = vld [vmem:[%s0 + $0x2f0] sm:$0xff]
    %v2240 = vld [vmem:[%s0 + $0x2f8] sm:$0xff]
    %v2241 = vld [vmem:[%s0 + $0x300] sm:$0xff]
    %v2242 = vld [vmem:[%s0 + $0x308] sm:$0xff]
    %v2243 = vld [vmem:[%s0 + $0x310] sm:$0xff]
    %v2244 = vld [vmem:[%s0 + $0x318] sm:$0xff]
    %v2245 = vld [vmem:[%s0 + $0x320] sm:$0xff]
    %v2246 = vld [vmem:[%s0 + $0x328] sm:$0xff]
    %v2247 = vld [vmem:[%s0 + $0x330] sm:$0xff]
    %v2248 = vld [vmem:[%s0 + $0x338] sm:$0xff]
    %s2249 = scalar_lea.vmem [#allocation2], 2
    %v2250 = vld [vmem:[%s2249] sm:$0x1]
    %v2252 = vsel %vm97, %v2217, 0
    %v2255 = vsel %vm97, %v2218, 0
    %v2258 = vsel %vm97, %v2219, 0
    %v2261 = vsel %vm97, %v2220, 0
    %v2264 = vsel %vm97, %v2221, 0
    %v2267 = vsel %vm97, %v2222, 0
    %v2270 = vsel %vm97, %v2223, 0
    %v2273 = vsel %vm97, %v2224, 0
    %v2276 = vsel %vm97, %v2225, 0
    %v2279 = vsel %vm97, %v2226, 0
    %v2282 = vsel %vm97, %v2227, 0
    %v2285 = vsel %vm97, %v2228, 0
    %v2288 = vsel %vm97, %v2229, 0
    %v2291 = vsel %vm97, %v2230, 0
    %v2294 = vsel %vm97, %v2231, 0
    %v2297 = vsel %vm97, %v2232, 0
    %v2300 = vsel %vm97, %v2233, 0
    %v2303 = vsel %vm97, %v2234, 0
    %v2306 = vsel %vm97, %v2235, 0
    %v2309 = vsel %vm97, %v2236, 0
    %v2312 = vsel %vm97, %v2237, 0
    %v2315 = vsel %vm97, %v2238, 0
    %v2318 = vsel %vm97, %v2239, 0
    %v2321 = vsel %vm97, %v2240, 0
    %v2324 = vsel %vm97, %v2241, 0
    %v2327 = vsel %vm97, %v2242, 0
    %v2330 = vsel %vm97, %v2243, 0
    %v2333 = vsel %vm97, %v2244, 0
    %v2336 = vsel %vm97, %v2245, 0
    %v2339 = vsel %vm97, %v2246, 0
    %v2342 = vsel %vm97, %v2247, 0
    %v2345 = vsel %vm97, %v2248, 0
    %v2348 = vsel %vm194, %v2250, 0
    %2350 = vmatprep.subr.mxu0 0.0
    %2351 = vmatpush1.msra.mxu0 %v2348
    %2352 = vmatprep.subr.mxu0 0.0
    %2353 = vmatpush1.msra.mxu0 0.0
    %2354 = vmatprep.subr.mxu0 0.0
    %2355 = vmatpush1.msra.mxu0 0.0
    %2356 = vmatprep.subr.mxu0 0.0
    %2357 = vmatpush1.msra.mxu0 0.0
    %2358 = vmatprep.subr.mxu0 0.0
    %2359 = vmatpush1.msra.mxu0 0.0
    %2360 = vmatprep.subr.mxu0 0.0
    %2361 = vmatpush1.msra.mxu0 0.0
    %2362 = vmatprep.subr.mxu0 0.0
    %2363 = vmatpush1.msra.mxu0 0.0
    %2364 = vmatprep.subr.mxu0 0.0
    %2365 = vmatpush1.msra.mxu0 0.0
    %2366 = vmatprep.subr.mxu0 0.0
    %2367 = vmatpush1.msra.mxu0 0.0
    %2368 = vmatprep.subr.mxu0 0.0
    %2369 = vmatpush1.msra.mxu0 0.0
    %2370 = vmatprep.subr.mxu0 0.0
    %2371 = vmatpush1.msra.mxu0 0.0
    %2372 = vmatprep.subr.mxu0 0.0
    %2373 = vmatpush1.msra.mxu0 0.0
    %2374 = vmatprep.subr.mxu0 0.0
    %2375 = vmatpush1.msra.mxu0 0.0
    %2376 = vmatprep.subr.mxu0 0.0
    %2377 = vmatpush1.msra.mxu0 0.0
    %2378 = vmatprep.subr.mxu0 0.0
    %2379 = vmatpush1.msra.mxu0 0.0
    %2380 = vmatprep.subr.mxu0 0.0
    %2381 = vmatpush1.msra.mxu0 0.0
    %2382 = vmatprep.subr.mxu0 0.0
    %2383 = vmatpush1.msra.mxu0 0.0
    %2384 = vmatprep.subr.mxu0 0.0
    %2385 = vmatpush1.msra.mxu0 0.0
    %2386 = vmatprep.subr.mxu0 0.0
    %2387 = vmatpush1.msra.mxu0 0.0
    %2388 = vmatprep.subr.mxu0 0.0
    %2389 = vmatpush1.msra.mxu0 0.0
    %2390 = vmatprep.subr.mxu0 0.0
    %2391 = vmatpush1.msra.mxu0 0.0
    %2392 = vmatprep.subr.mxu0 0.0
    %2393 = vmatpush1.msra.mxu0 0.0
    %2394 = vmatprep.subr.mxu0 0.0
    %2395 = vmatpush1.msra.mxu0 0.0
    %2396 = vmatprep.subr.mxu0 0.0
    %2397 = vmatpush1.msra.mxu0 0.0
    %2398 = vmatprep.subr.mxu0 0.0
    %2399 = vmatpush1.msra.mxu0 0.0
    %2400 = vmatprep.subr.mxu0 0.0
    %2401 = vmatpush1.msra.mxu0 0.0
    %2402 = vmatprep.subr.mxu0 0.0
    %2403 = vmatpush1.msra.mxu0 0.0
    %2404 = vmatprep.subr.mxu0 0.0
    %2405 = vmatpush1.msra.mxu0 0.0
    %2406 = vmatprep.subr.mxu0 0.0
    %2407 = vmatpush1.msra.mxu0 0.0
    %2408 = vmatprep.subr.mxu0 0.0
    %2409 = vmatpush1.msra.mxu0 0.0
    %2410 = vmatprep.subr.mxu0 0.0
    %2411 = vmatpush1.msra.mxu0 0.0
    %2412 = vmatprep.subr.mxu0 0.0
    %2413 = vmatpush1.msra.mxu0 0.0
    %2414 = vmatprep.mubr.f32.mxu0 0.0
    %2415 = vmatmul.mubr.f32.gmra.mrb[0].mxu0 %v2252
    %v2416 = vpop.f32.mrb[0].mxu0
    %v2417 = vadd.f32 0.0, %v2416
    %v2418 = vpop.f32.mrb[0].mxu0
    %2419 = vmatprep.mubr.f32.mxu0 0.0
    %2420 = vmatmul.mubr.f32.gmra.mrb[0].mxu0 %v2255
    %v2421 = vpop.f32.mrb[0].mxu0
    %v2422 = vadd.f32 0.0, %v2421
    %v2423 = vpop.f32.mrb[0].mxu0
    %2424 = vmatprep.mubr.f32.mxu0 0.0
    %2425 = vmatmul.mubr.f32.gmra.mrb[0].mxu0 %v2258
    %v2426 = vpop.f32.mrb[0].mxu0
    %v2427 = vadd.f32 0.0, %v2426
    %v2428 = vpop.f32.mrb[0].mxu0
    %2429 = vmatprep.mubr.f32.mxu0 0.0
    %2430 = vmatmul.mubr.f32.gmra.mrb[0].mxu0 %v2261
    %v2431 = vpop.f32.mrb[0].mxu0
    %v2432 = vadd.f32 0.0, %v2431
    %v2433 = vpop.f32.mrb[0].mxu0
    %2434 = vmatprep.mubr.f32.mxu0 0.0
    %2435 = vmatmul.mubr.f32.gmra.mrb[0].mxu0 %v2264
    %v2436 = vpop.f32.mrb[0].mxu0
    %v2437 = vadd.f32 0.0, %v2436
    %v2438 = vpop.f32.mrb[0].mxu0
    %2439 = vmatprep.mubr.f32.mxu0 0.0
    %2440 = vmatmul.mubr.f32.gmra.mrb[0].mxu0 %v2267
    %v2441 = vpop.f32.mrb[0].mxu0
    %v2442 = vadd.f32 0.0, %v2441
    %v2443 = vpop.f32.mrb[0].mxu0
    %2444 = vmatprep.mubr.f32.mxu0 0.0
    %2445 = vmatmul.mubr.f32.gmra.mrb[0].mxu0 %v2270
    %v2446 = vpop.f32.mrb[0].mxu0
    %v2447 = vadd.f32 0.0, %v2446
    %v2448 = vpop.f32.mrb[0].mxu0
    %2449 = vmatprep.mubr.f32.mxu0 0.0
    %2450 = vmatmul.mubr.f32.gmra.mrb[0].mxu0 %v2273
    %v2451 = vpop.f32.mrb[0].mxu0
    %v2452 = vadd.f32 0.0, %v2451
    %v2453 = vpop.f32.mrb[0].mxu0
    %2454 = vmatprep.mubr.f32.mxu0 0.0
    %2455 = vmatmul.mubr.f32.gmra.mrb[0].mxu0 %v2276
    %v2456 = vpop.f32.mrb[0].mxu0
    %v2457 = vadd.f32 0.0, %v2456
    %v2458 = vpop.f32.mrb[0].mxu0
    %2459 = vmatprep.mubr.f32.mxu0 0.0
    %2460 = vmatmul.mubr.f32.gmra.mrb[0].mxu0 %v2279
    %v2461 = vpop.f32.mrb[0].mxu0
    %v2462 = vadd.f32 0.0, %v2461
    %v2463 = vpop.f32.mrb[0].mxu0
    %2464 = vmatprep.mubr.f32.mxu0 0.0
    %2465 = vmatmul.mubr.f32.gmra.mrb[0].mxu0 %v2282
    %v2466 = vpop.f32.mrb[0].mxu0
    %v2467 = vadd.f32 0.0, %v2466
    %v2468 = vpop.f32.mrb[0].mxu0
    %2469 = vmatprep.mubr.f32.mxu0 0.0
    %2470 = vmatmul.mubr.f32.gmra.mrb[0].mxu0 %v2285
    %v2471 = vpop.f32.mrb[0].mxu0
    %v2472 = vadd.f32 0.0, %v2471
    %v2473 = vpop.f32.mrb[0].mxu0
    %2474 = vmatprep.mubr.f32.mxu0 0.0
    %2475 = vmatmul.mubr.f32.gmra.mrb[0].mxu0 %v2288
    %v2476 = vpop.f32.mrb[0].mxu0
    %v2477 = vadd.f32 0.0, %v2476
    %v2478 = vpop.f32.mrb[0].mxu0
    %2479 = vmatprep.mubr.f32.mxu0 0.0
    %2480 = vmatmul.mubr.f32.gmra.mrb[0].mxu0 %v2291
    %v2481 = vpop.f32.mrb[0].mxu0
    %v2482 = vadd.f32 0.0, %v2481
    %v2483 = vpop.f32.mrb[0].mxu0
    %2484 = vmatprep.mubr.f32.mxu0 0.0
    %2485 = vmatmul.mubr.f32.gmra.mrb[0].mxu0 %v2294
    %v2486 = vpop.f32.mrb[0].mxu0
    %v2487 = vadd.f32 0.0, %v2486
    %v2488 = vpop.f32.mrb[0].mxu0
    %2489 = vmatprep.mubr.f32.mxu0 0.0
    %2490 = vmatmul.mubr.f32.gmra.mrb[0].mxu0 %v2297
    %v2491 = vpop.f32.mrb[0].mxu0
    %v2492 = vadd.f32 0.0, %v2491
    %v2493 = vpop.f32.mrb[0].mxu0
    %2494 = vmatprep.mubr.f32.mxu0 0.0
    %2495 = vmatmul.mubr.f32.gmra.mrb[0].mxu0 %v2300
    %v2496 = vpop.f32.mrb[0].mxu0
    %v2497 = vadd.f32 0.0, %v2496
    %v2498 = vpop.f32.mrb[0].mxu0
    %2499 = vmatprep.mubr.f32.mxu0 0.0
    %2500 = vmatmul.mubr.f32.gmra.mrb[0].mxu0 %v2303
    %v2501 = vpop.f32.mrb[0].mxu0
    %v2502 = vadd.f32 0.0, %v2501
    %v2503 = vpop.f32.mrb[0].mxu0
    %2504 = vmatprep.mubr.f32.mxu0 0.0
    %2505 = vmatmul.mubr.f32.gmra.mrb[0].mxu0 %v2306
    %v2506 = vpop.f32.mrb[0].mxu0
    %v2507 = vadd.f32 0.0, %v2506
    %v2508 = vpop.f32.mrb[0].mxu0
    %2509 = vmatprep.mubr.f32.mxu0 0.0
    %2510 = vmatmul.mubr.f32.gmra.mrb[0].mxu0 %v2309
    %v2511 = vpop.f32.mrb[0].mxu0
    %v2512 = vadd.f32 0.0, %v2511
    %v2513 = vpop.f32.mrb[0].mxu0
    %2514 = vmatprep.mubr.f32.mxu0 0.0
    %2515 = vmatmul.mubr.f32.gmra.mrb[0].mxu0 %v2312
    %v2516 = vpop.f32.mrb[0].mxu0
    %v2517 = vadd.f32 0.0, %v2516
    %v2518 = vpop.f32.mrb[0].mxu0
    %2519 = vmatprep.mubr.f32.mxu0 0.0
    %2520 = vmatmul.mubr.f32.gmra.mrb[0].mxu0 %v2315
    %v2521 = vpop.f32.mrb[0].mxu0
    %v2522 = vadd.f32 0.0, %v2521
    %v2523 = vpop.f32.mrb[0].mxu0
    %2524 = vmatprep.mubr.f32.mxu0 0.0
    %2525 = vmatmul.mubr.f32.gmra.mrb[0].mxu0 %v2318
    %v2526 = vpop.f32.mrb[0].mxu0
    %v2527 = vadd.f32 0.0, %v2526
    %v2528 = vpop.f32.mrb[0].mxu0
    %2529 = vmatprep.mubr.f32.mxu0 0.0
    %2530 = vmatmul.mubr.f32.gmra.mrb[0].mxu0 %v2321
    %v2531 = vpop.f32.mrb[0].mxu0
    %v2532 = vadd.f32 0.0, %v2531
    %v2533 = vpop.f32.mrb[0].mxu0
    %2534 = vmatprep.mubr.f32.mxu0 0.0
    %2535 = vmatmul.mubr.f32.gmra.mrb[0].mxu0 %v2324
    %v2536 = vpop.f32.mrb[0].mxu0
    %v2537 = vadd.f32 0.0, %v2536
    %v2538 = vpop.f32.mrb[0].mxu0
    %2539 = vmatprep.mubr.f32.mxu0 0.0
    %2540 = vmatmul.mubr.f32.gmra.mrb[0].mxu0 %v2327
    %v2541 = vpop.f32.mrb[0].mxu0
    %v2542 = vadd.f32 0.0, %v2541
    %v2543 = vpop.f32.mrb[0].mxu0
    %2544 = vmatprep.mubr.f32.mxu0 0.0
    %2545 = vmatmul.mubr.f32.gmra.mrb[0].mxu0 %v2330
    %v2546 = vpop.f32.mrb[0].mxu0
    %v2547 = vadd.f32 0.0, %v2546
    %v2548 = vpop.f32.mrb[0].mxu0
    %2549 = vmatprep.mubr.f32.mxu0 0.0
    %2550 = vmatmul.mubr.f32.gmra.mrb[0].mxu0 %v2333
    %v2551 = vpop.f32.mrb[0].mxu0
    %v2552 = vadd.f32 0.0, %v2551
    %v2553 = vpop.f32.mrb[0].mxu0
    %2554 = vmatprep.mubr.f32.mxu0 0.0
    %2555 = vmatmul.mubr.f32.gmra.mrb[0].mxu0 %v2336
    %v2556 = vpop.f32.mrb[0].mxu0
    %v2557 = vadd.f32 0.0, %v2556
    %v2558 = vpop.f32.mrb[0].mxu0
    %2559 = vmatprep.mubr.f32.mxu0 0.0
    %2560 = vmatmul.mubr.f32.gmra.mrb[0].mxu0 %v2339
    %v2561 = vpop.f32.mrb[0].mxu0
    %v2562 = vadd.f32 0.0, %v2561
    %v2563 = vpop.f32.mrb[0].mxu0
    %2564 = vmatprep.mubr.f32.mxu0 0.0
    %2565 = vmatmul.mubr.f32.gmra.mrb[0].mxu0 %v2342
    %v2566 = vpop.f32.mrb[0].mxu0
    %v2567 = vadd.f32 0.0, %v2566
    %v2568 = vpop.f32.mrb[0].mxu0
    %2569 = vmatprep.mubr.f32.mxu0 0.0
    %2570 = vmatmul.mubr.f32.gmra.mrb[0].mxu0 %v2345
    %v2571 = vpop.f32.mrb[0].mxu0
    %v2572 = vadd.f32 0.0, %v2571
    %v2573 = vpop.f32.mrb[0].mxu0
    %2574 = vdwg.mxu0
    %v2575 = vadd.f32 %v2185, %v2417
    %v2576 = vadd.f32 %v2186, %v2422
    %v2577 = vadd.f32 %v2187, %v2427
    %v2578 = vadd.f32 %v2188, %v2432
    %v2579 = vadd.f32 %v2189, %v2437
    %v2580 = vadd.f32 %v2190, %v2442
    %v2581 = vadd.f32 %v2191, %v2447
    %v2582 = vadd.f32 %v2192, %v2452
    %v2583 = vadd.f32 %v2193, %v2457
    %v2584 = vadd.f32 %v2194, %v2462
    %v2585 = vadd.f32 %v2195, %v2467
    %v2586 = vadd.f32 %v2196, %v2472
    %v2587 = vadd.f32 %v2197, %v2477
    %v2588 = vadd.f32 %v2198, %v2482
    %v2589 = vadd.f32 %v2199, %v2487
    %v2590 = vadd.f32 %v2200, %v2492
    %v2591 = vadd.f32 %v2201, %v2497
    %v2592 = vadd.f32 %v2202, %v2502
    %v2593 = vadd.f32 %v2203, %v2507
    %v2594 = vadd.f32 %v2204, %v2512
    %v2595 = vadd.f32 %v2205, %v2517
    %v2596 = vadd.f32 %v2206, %v2522
    %v2597 = vadd.f32 %v2207, %v2527
    %v2598 = vadd.f32 %v2208, %v2532
    %v2599 = vadd.f32 %v2209, %v2537
    %v2600 = vadd.f32 %v2210, %v2542
    %v2601 = vadd.f32 %v2211, %v2547
    %v2602 = vadd.f32 %v2212, %v2552
    %v2603 = vadd.f32 %v2213, %v2557
    %v2604 = vadd.f32 %v2214, %v2562
    %v2605 = vadd.f32 %v2215, %v2567
    %v2606 = vadd.f32 %v2216, %v2572
    %v2607 = vld [vmem:[%s0 + $0x250] sm:$0xff]
    %v2608 = vld [vmem:[%s0 + $0x258] sm:$0xff]
    %v2609 = vld [vmem:[%s0 + $0x260] sm:$0xff]
    %v2610 = vld [vmem:[%s0 + $0x268] sm:$0xff]
    %v2611 = vld [vmem:[%s0 + $0x270] sm:$0xff]
    %v2612 = vld [vmem:[%s0 + $0x278] sm:$0xff]
    %v2613 = vld [vmem:[%s0 + $0x280] sm:$0xff]
    %v2614 = vld [vmem:[%s0 + $0x288] sm:$0xff]
    %v2615 = vld [vmem:[%s0 + $0x290] sm:$0xff]
    %v2616 = vld [vmem:[%s0 + $0x298] sm:$0xff]
    %v2617 = vld [vmem:[%s0 + $0x2a0] sm:$0xff]
    %v2618 = vld [vmem:[%s0 + $0x2a8] sm:$0xff]
    %v2619 = vld [vmem:[%s0 + $0x2b0] sm:$0xff]
    %v2620 = vld [vmem:[%s0 + $0x2b8] sm:$0xff]
    %v2621 = vld [vmem:[%s0 + $0x2c0] sm:$0xff]
    %v2622 = vld [vmem:[%s0 + $0x2c8] sm:$0xff]
    %v2623 = vld [vmem:[%s0 + $0x2d0] sm:$0xff]
    %v2624 = vld [vmem:[%s0 + $0x2d8] sm:$0xff]
    %v2625 = vld [vmem:[%s0 + $0x2e0] sm:$0xff]
    %v2626 = vld [vmem:[%s0 + $0x2e8] sm:$0xff]
    %v2627 = vld [vmem:[%s0 + $0x2f0] sm:$0xff]
    %v2628 = vld [vmem:[%s0 + $0x2f8] sm:$0xff]
    %v2629 = vld [vmem:[%s0 + $0x300] sm:$0xff]
    %v2630 = vld [vmem:[%s0 + $0x308] sm:$0xff]
    %v2631 = vld [vmem:[%s0 + $0x310] sm:$0xff]
    %v2632 = vld [vmem:[%s0 + $0x318] sm:$0xff]
    %v2633 = vld [vmem:[%s0 + $0x320] sm:$0xff]
    %v2634 = vld [vmem:[%s0 + $0x328] sm:$0xff]
    %v2635 = vld [vmem:[%s0 + $0x330] sm:$0xff]
    %v2636 = vld [vmem:[%s0 + $0x338] sm:$0xff]
    %v2637 = vld [vmem:[%s0 + $0x340] sm:$0xff]
    %v2638 = vld [vmem:[%s0 + $0x348] sm:$0xff]
    %s2639 = scalar_lea.vmem [#allocation2], 5
    %v2640 = vld [vmem:[%s2639] sm:$0x1]
    %v2642 = vsel %vm97, %v2607, 0
    %v2645 = vsel %vm97, %v2608, 0
    %v2648 = vsel %vm97, %v2609, 0
    %v2651 = vsel %vm97, %v2610, 0
    %v2654 = vsel %vm97, %v2611, 0
    %v2657 = vsel %vm97, %v2612, 0
    %v2660 = vsel %vm97, %v2613, 0
    %v2663 = vsel %vm97, %v2614, 0
    %v2666 = vsel %vm97, %v2615, 0
    %v2669 = vsel %vm97, %v2616, 0
    %v2672 = vsel %vm97, %v2617, 0
    %v2675 = vsel %vm97, %v2618, 0
    %v2678 = vsel %vm97, %v2619, 0
    %v2681 = vsel %vm97, %v2620, 0
    %v2684 = vsel %vm97, %v2621, 0
    %v2687 = vsel %vm97, %v2622, 0
    %v2690 = vsel %vm97, %v2623, 0
    %v2693 = vsel %vm97, %v2624, 0
    %v2696 = vsel %vm97, %v2625, 0
    %v2699 = vsel %vm97, %v2626, 0
    %v2702 = vsel %vm97, %v2627, 0
    %v2705 = vsel %vm97, %v2628, 0
    %v2708 = vsel %vm97, %v2629, 0
    %v2711 = vsel %vm97, %v2630, 0
    %v2714 = vsel %vm97, %v2631, 0
    %v2717 = vsel %vm97, %v2632, 0
    %v2720 = vsel %vm97, %v2633, 0
    %v2723 = vsel %vm97, %v2634, 0
    %v2726 = vsel %vm97, %v2635, 0
    %v2729 = vsel %vm97, %v2636, 0
    %v2732 = vsel %vm97, %v2637, 0
    %v2735 = vsel %vm97, %v2638, 0
    %v2738 = vsel %vm194, %v2640, 0
    %2740 = vmatprep.subr.mxu0 0.0
    %2741 = vmatpush1.msra.mxu0 %v2738
    %2742 = vmatprep.subr.mxu0 0.0
    %2743 = vmatpush1.msra.mxu0 0.0
    %2744 = vmatprep.subr.mxu0 0.0
    %2745 = vmatpush1.msra.mxu0 0.0
    %2746 = vmatprep.subr.mxu0 0.0
    %2747 = vmatpush1.msra.mxu0 0.0
    %2748 = vmatprep.subr.mxu0 0.0
    %2749 = vmatpush1.msra.mxu0 0.0
    %2750 = vmatprep.subr.mxu0 0.0
    %2751 = vmatpush1.msra.mxu0 0.0
    %2752 = vmatprep.subr.mxu0 0.0
    %2753 = vmatpush1.msra.mxu0 0.0
    %2754 = vmatprep.subr.mxu0 0.0
    %2755 = vmatpush1.msra.mxu0 0.0
    %2756 = vmatprep.subr.mxu0 0.0
    %2757 = vmatpush1.msra.mxu0 0.0
    %2758 = vmatprep.subr.mxu0 0.0
    %2759 = vmatpush1.msra.mxu0 0.0
    %2760 = vmatprep.subr.mxu0 0.0
    %2761 = vmatpush1.msra.mxu0 0.0
    %2762 = vmatprep.subr.mxu0 0.0
    %2763 = vmatpush1.msra.mxu0 0.0
    %2764 = vmatprep.subr.mxu0 0.0
    %2765 = vmatpush1.msra.mxu0 0.0
    %2766 = vmatprep.subr.mxu0 0.0
    %2767 = vmatpush1.msra.mxu0 0.0
    %2768 = vmatprep.subr.mxu0 0.0
    %2769 = vmatpush1.msra.mxu0 0.0
    %2770 = vmatprep.subr.mxu0 0.0
    %2771 = vmatpush1.msra.mxu0 0.0
    %2772 = vmatprep.subr.mxu0 0.0
    %2773 = vmatpush1.msra.mxu0 0.0
    %2774 = vmatprep.subr.mxu0 0.0
    %2775 = vmatpush1.msra.mxu0 0.0
    %2776 = vmatprep.subr.mxu0 0.0
    %2777 = vmatpush1.msra.mxu0 0.0
    %2778 = vmatprep.subr.mxu0 0.0
    %2779 = vmatpush1.msra.mxu0 0.0
    %2780 = vmatprep.subr.mxu0 0.0
    %2781 = vmatpush1.msra.mxu0 0.0
    %2782 = vmatprep.subr.mxu0 0.0
    %2783 = vmatpush1.msra.mxu0 0.0
    %2784 = vmatprep.subr.mxu0 0.0
    %2785 = vmatpush1.msra.mxu0 0.0
    %2786 = vmatprep.subr.mxu0 0.0
    %2787 = vmatpush1.msra.mxu0 0.0
    %2788 = vmatprep.subr.mxu0 0.0
    %2789 = vmatpush1.msra.mxu0 0.0
    %2790 = vmatprep.subr.mxu0 0.0
    %2791 = vmatpush1.msra.mxu0 0.0
    %2792 = vmatprep.subr.mxu0 0.0
    %2793 = vmatpush1.msra.mxu0 0.0
    %2794 = vmatprep.subr.mxu0 0.0
    %2795 = vmatpush1.msra.mxu0 0.0
    %2796 = vmatprep.subr.mxu0 0.0
    %2797 = vmatpush1.msra.mxu0 0.0
    %2798 = vmatprep.subr.mxu0 0.0
    %2799 = vmatpush1.msra.mxu0 0.0
    %2800 = vmatprep.subr.mxu0 0.0
    %2801 = vmatpush1.msra.mxu0 0.0
    %2802 = vmatprep.subr.mxu0 0.0
    %2803 = vmatpush1.msra.mxu0 0.0
    %2804 = vmatprep.mubr.f32.mxu0 0.0
    %2805 = vmatmul.mubr.f32.gmra.mrb[0].mxu0 %v2642
    %v2806 = vpop.f32.mrb[0].mxu0
    %v2807 = vadd.f32 0.0, %v2806
    %v2808 = vpop.f32.mrb[0].mxu0
    %2809 = vmatprep.mubr.f32.mxu0 0.0
    %2810 = vmatmul.mubr.f32.gmra.mrb[0].mxu0 %v2645
    %v2811 = vpop.f32.mrb[0].mxu0
    %v2812 = vadd.f32 0.0, %v2811
    %v2813 = vpop.f32.mrb[0].mxu0
    %2814 = vmatprep.mubr.f32.mxu0 0.0
    %2815 = vmatmul.mubr.f32.gmra.mrb[0].mxu0 %v2648
    %v2816 = vpop.f32.mrb[0].mxu0
    %v2817 = vadd.f32 0.0, %v2816
    %v2818 = vpop.f32.mrb[0].mxu0
    %2819 = vmatprep.mubr.f32.mxu0 0.0
    %2820 = vmatmul.mubr.f32.gmra.mrb[0].mxu0 %v2651
    %v2821 = vpop.f32.mrb[0].mxu0
    %v2822 = vadd.f32 0.0, %v2821
    %v2823 = vpop.f32.mrb[0].mxu0
    %2824 = vmatprep.mubr.f32.mxu0 0.0
    %2825 = vmatmul.mubr.f32.gmra.mrb[0].mxu0 %v2654
    %v2826 = vpop.f32.mrb[0].mxu0
    %v2827 = vadd.f32 0.0, %v2826
    %v2828 = vpop.f32.mrb[0].mxu0
    %2829 = vmatprep.mubr.f32.mxu0 0.0
    %2830 = vmatmul.mubr.f32.gmra.mrb[0].mxu0 %v2657
    %v2831 = vpop.f32.mrb[0].mxu0
    %v2832 = vadd.f32 0.0, %v2831
    %v2833 = vpop.f32.mrb[0].mxu0
    %2834 = vmatprep.mubr.f32.mxu0 0.0
    %2835 = vmatmul.mubr.f32.gmra.mrb[0].mxu0 %v2660
    %v2836 = vpop.f32.mrb[0].mxu0
    %v2837 = vadd.f32 0.0, %v2836
    %v2838 = vpop.f32.mrb[0].mxu0
    %2839 = vmatprep.mubr.f32.mxu0 0.0
    %2840 = vmatmul.mubr.f32.gmra.mrb[0].mxu0 %v2663
    %v2841 = vpop.f32.mrb[0].mxu0
    %v2842 = vadd.f32 0.0, %v2841
    %v2843 = vpop.f32.mrb[0].mxu0
    %2844 = vmatprep.mubr.f32.mxu0 0.0
    %2845 = vmatmul.mubr.f32.gmra.mrb[0].mxu0 %v2666
    %v2846 = vpop.f32.mrb[0].mxu0
    %v2847 = vadd.f32 0.0, %v2846
    %v2848 = vpop.f32.mrb[0].mxu0
    %2849 = vmatprep.mubr.f32.mxu0 0.0
    %2850 = vmatmul.mubr.f32.gmra.mrb[0].mxu0 %v2669
    %v2851 = vpop.f32.mrb[0].mxu0
    %v2852 = vadd.f32 0.0, %v2851
    %v2853 = vpop.f32.mrb[0].mxu0
    %2854 = vmatprep.mubr.f32.mxu0 0.0
    %2855 = vmatmul.mubr.f32.gmra.mrb[0].mxu0 %v2672
    %v2856 = vpop.f32.mrb[0].mxu0
    %v2857 = vadd.f32 0.0, %v2856
    %v2858 = vpop.f32.mrb[0].mxu0
    %2859 = vmatprep.mubr.f32.mxu0 0.0
    %2860 = vmatmul.mubr.f32.gmra.mrb[0].mxu0 %v2675
    %v2861 = vpop.f32.mrb[0].mxu0
    %v2862 = vadd.f32 0.0, %v2861
    %v2863 = vpop.f32.mrb[0].mxu0
    %2864 = vmatprep.mubr.f32.mxu0 0.0
    %2865 = vmatmul.mubr.f32.gmra.mrb[0].mxu0 %v2678
    %v2866 = vpop.f32.mrb[0].mxu0
    %v2867 = vadd.f32 0.0, %v2866
    %v2868 = vpop.f32.mrb[0].mxu0
    %2869 = vmatprep.mubr.f32.mxu0 0.0
    %2870 = vmatmul.mubr.f32.gmra.mrb[0].mxu0 %v2681
    %v2871 = vpop.f32.mrb[0].mxu0
    %v2872 = vadd.f32 0.0, %v2871
    %v2873 = vpop.f32.mrb[0].mxu0
    %2874 = vmatprep.mubr.f32.mxu0 0.0
    %2875 = vmatmul.mubr.f32.gmra.mrb[0].mxu0 %v2684
    %v2876 = vpop.f32.mrb[0].mxu0
    %v2877 = vadd.f32 0.0, %v2876
    %v2878 = vpop.f32.mrb[0].mxu0
    %2879 = vmatprep.mubr.f32.mxu0 0.0
    %2880 = vmatmul.mubr.f32.gmra.mrb[0].mxu0 %v2687
    %v2881 = vpop.f32.mrb[0].mxu0
    %v2882 = vadd.f32 0.0, %v2881
    %v2883 = vpop.f32.mrb[0].mxu0
    %2884 = vmatprep.mubr.f32.mxu0 0.0
    %2885 = vmatmul.mubr.f32.gmra.mrb[0].mxu0 %v2690
    %v2886 = vpop.f32.mrb[0].mxu0
    %v2887 = vadd.f32 0.0, %v2886
    %v2888 = vpop.f32.mrb[0].mxu0
    %2889 = vmatprep.mubr.f32.mxu0 0.0
    %2890 = vmatmul.mubr.f32.gmra.mrb[0].mxu0 %v2693
    %v2891 = vpop.f32.mrb[0].mxu0
    %v2892 = vadd.f32 0.0, %v2891
    %v2893 = vpop.f32.mrb[0].mxu0
    %2894 = vmatprep.mubr.f32.mxu0 0.0
    %2895 = vmatmul.mubr.f32.gmra.mrb[0].mxu0 %v2696
    %v2896 = vpop.f32.mrb[0].mxu0
    %v2897 = vadd.f32 0.0, %v2896
    %v2898 = vpop.f32.mrb[0].mxu0
    %2899 = vmatprep.mubr.f32.mxu0 0.0
    %2900 = vmatmul.mubr.f32.gmra.mrb[0].mxu0 %v2699
    %v2901 = vpop.f32.mrb[0].mxu0
    %v2902 = vadd.f32 0.0, %v2901
    %v2903 = vpop.f32.mrb[0].mxu0
    %2904 = vmatprep.mubr.f32.mxu0 0.0
    %2905 = vmatmul.mubr.f32.gmra.mrb[0].mxu0 %v2702
    %v2906 = vpop.f32.mrb[0].mxu0
    %v2907 = vadd.f32 0.0, %v2906
    %v2908 = vpop.f32.mrb[0].mxu0
    %2909 = vmatprep.mubr.f32.mxu0 0.0
    %2910 = vmatmul.mubr.f32.gmra.mrb[0].mxu0 %v2705
    %v2911 = vpop.f32.mrb[0].mxu0
    %v2912 = vadd.f32 0.0, %v2911
    %v2913 = vpop.f32.mrb[0].mxu0
    %2914 = vmatprep.mubr.f32.mxu0 0.0
    %2915 = vmatmul.mubr.f32.gmra.mrb[0].mxu0 %v2708
    %v2916 = vpop.f32.mrb[0].mxu0
    %v2917 = vadd.f32 0.0, %v2916
    %v2918 = vpop.f32.mrb[0].mxu0
    %2919 = vmatprep.mubr.f32.mxu0 0.0
    %2920 = vmatmul.mubr.f32.gmra.mrb[0].mxu0 %v2711
    %v2921 = vpop.f32.mrb[0].mxu0
    %v2922 = vadd.f32 0.0, %v2921
    %v2923 = vpop.f32.mrb[0].mxu0
    %2924 = vmatprep.mubr.f32.mxu0 0.0
    %2925 = vmatmul.mubr.f32.gmra.mrb[0].mxu0 %v2714
    %v2926 = vpop.f32.mrb[0].mxu0
    %v2927 = vadd.f32 0.0, %v2926
    %v2928 = vpop.f32.mrb[0].mxu0
    %2929 = vmatprep.mubr.f32.mxu0 0.0
    %2930 = vmatmul.mubr.f32.gmra.mrb[0].mxu0 %v2717
    %v2931 = vpop.f32.mrb[0].mxu0
    %v2932 = vadd.f32 0.0, %v2931
    %v2933 = vpop.f32.mrb[0].mxu0
    %2934 = vmatprep.mubr.f32.mxu0 0.0
    %2935 = vmatmul.mubr.f32.gmra.mrb[0].mxu0 %v2720
    %v2936 = vpop.f32.mrb[0].mxu0
    %v2937 = vadd.f32 0.0, %v2936
    %v2938 = vpop.f32.mrb[0].mxu0
    %2939 = vmatprep.mubr.f32.mxu0 0.0
    %2940 = vmatmul.mubr.f32.gmra.mrb[0].mxu0 %v2723
    %v2941 = vpop.f32.mrb[0].mxu0
    %v2942 = vadd.f32 0.0, %v2941
    %v2943 = vpop.f32.mrb[0].mxu0
    %2944 = vmatprep.mubr.f32.mxu0 0.0
    %2945 = vmatmul.mubr.f32.gmra.mrb[0].mxu0 %v2726
    %v2946 = vpop.f32.mrb[0].mxu0
    %v2947 = vadd.f32 0.0, %v2946
    %v2948 = vpop.f32.mrb[0].mxu0
    %2949 = vmatprep.mubr.f32.mxu0 0.0
    %2950 = vmatmul.mubr.f32.gmra.mrb[0].mxu0 %v2729
    %v2951 = vpop.f32.mrb[0].mxu0
    %v2952 = vadd.f32 0.0, %v2951
    %v2953 = vpop.f32.mrb[0].mxu0
    %2954 = vmatprep.mubr.f32.mxu0 0.0
    %2955 = vmatmul.mubr.f32.gmra.mrb[0].mxu0 %v2732
    %v2956 = vpop.f32.mrb[0].mxu0
    %v2957 = vadd.f32 0.0, %v2956
    %v2958 = vpop.f32.mrb[0].mxu0
    %2959 = vmatprep.mubr.f32.mxu0 0.0
    %2960 = vmatmul.mubr.f32.gmra.mrb[0].mxu0 %v2735
    %v2961 = vpop.f32.mrb[0].mxu0
    %v2962 = vadd.f32 0.0, %v2961
    %v2963 = vpop.f32.mrb[0].mxu0
    %2964 = vdwg.mxu0
    %v2965 = vadd.f32 %v2575, %v2807
    %v2966 = vadd.f32 %v2576, %v2812
    %v2967 = vadd.f32 %v2577, %v2817
    %v2968 = vadd.f32 %v2578, %v2822
    %v2969 = vadd.f32 %v2579, %v2827
    %v2970 = vadd.f32 %v2580, %v2832
    %v2971 = vadd.f32 %v2581, %v2837
    %v2972 = vadd.f32 %v2582, %v2842
    %v2973 = vadd.f32 %v2583, %v2847
    %v2974 = vadd.f32 %v2584, %v2852
    %v2975 = vadd.f32 %v2585, %v2857
    %v2976 = vadd.f32 %v2586, %v2862
    %v2977 = vadd.f32 %v2587, %v2867
    %v2978 = vadd.f32 %v2588, %v2872
    %v2979 = vadd.f32 %v2589, %v2877
    %v2980 = vadd.f32 %v2590, %v2882
    %v2981 = vadd.f32 %v2591, %v2887
    %v2982 = vadd.f32 %v2592, %v2892
    %v2983 = vadd.f32 %v2593, %v2897
    %v2984 = vadd.f32 %v2594, %v2902
    %v2985 = vadd.f32 %v2595, %v2907
    %v2986 = vadd.f32 %v2596, %v2912
    %v2987 = vadd.f32 %v2597, %v2917
    %v2988 = vadd.f32 %v2598, %v2922
    %v2989 = vadd.f32 %v2599, %v2927
    %v2990 = vadd.f32 %v2600, %v2932
    %v2991 = vadd.f32 %v2601, %v2937
    %v2992 = vadd.f32 %v2602, %v2942
    %v2993 = vadd.f32 %v2603, %v2947
    %v2994 = vadd.f32 %v2604, %v2952
    %v2995 = vadd.f32 %v2605, %v2957
    %v2996 = vadd.f32 %v2606, %v2962
    %v2997 = vld [vmem:[%s0 + $0x260] sm:$0xff]
    %v2998 = vld [vmem:[%s0 + $0x268] sm:$0xff]
    %v2999 = vld [vmem:[%s0 + $0x270] sm:$0xff]
    %v3000 = vld [vmem:[%s0 + $0x278] sm:$0xff]
    %v3001 = vld [vmem:[%s0 + $0x280] sm:$0xff]
    %v3002 = vld [vmem:[%s0 + $0x288] sm:$0xff]
    %v3003 = vld [vmem:[%s0 + $0x290] sm:$0xff]
    %v3004 = vld [vmem:[%s0 + $0x298] sm:$0xff]
    %v3005 = vld [vmem:[%s0 + $0x2a0] sm:$0xff]
    %v3006 = vld [vmem:[%s0 + $0x2a8] sm:$0xff]
    %v3007 = vld [vmem:[%s0 + $0x2b0] sm:$0xff]
    %v3008 = vld [vmem:[%s0 + $0x2b8] sm:$0xff]
    %v3009 = vld [vmem:[%s0 + $0x2c0] sm:$0xff]
    %v3010 = vld [vmem:[%s0 + $0x2c8] sm:$0xff]
    %v3011 = vld [vmem:[%s0 + $0x2d0] sm:$0xff]
    %v3012 = vld [vmem:[%s0 + $0x2d8] sm:$0xff]
    %v3013 = vld [vmem:[%s0 + $0x2e0] sm:$0xff]
    %v3014 = vld [vmem:[%s0 + $0x2e8] sm:$0xff]
    %v3015 = vld [vmem:[%s0 + $0x2f0] sm:$0xff]
    %v3016 = vld [vmem:[%s0 + $0x2f8] sm:$0xff]
    %v3017 = vld [vmem:[%s0 + $0x300] sm:$0xff]
    %v3018 = vld [vmem:[%s0 + $0x308] sm:$0xff]
    %v3019 = vld [vmem:[%s0 + $0x310] sm:$0xff]
    %v3020 = vld [vmem:[%s0 + $0x318] sm:$0xff]
    %v3021 = vld [vmem:[%s0 + $0x320] sm:$0xff]
    %v3022 = vld [vmem:[%s0 + $0x328] sm:$0xff]
    %v3023 = vld [vmem:[%s0 + $0x330] sm:$0xff]
    %v3024 = vld [vmem:[%s0 + $0x338] sm:$0xff]
    %v3025 = vld [vmem:[%s0 + $0x340] sm:$0xff]
    %v3026 = vld [vmem:[%s0 + $0x348] sm:$0xff]
    %v3027 = vld [vmem:[%s0 + $0x350] sm:$0xff]
    %v3028 = vld [vmem:[%s0 + $0x358] sm:$0xff]
    %s3029 = scalar_lea.vmem [#allocation2], 8
    %v3030 = vld [vmem:[%s3029] sm:$0x1]
    %v3032 = vsel %vm97, %v2997, 0
    %v3035 = vsel %vm97, %v2998, 0
    %v3038 = vsel %vm97, %v2999, 0
    %v3041 = vsel %vm97, %v3000, 0
    %v3044 = vsel %vm97, %v3001, 0
    %v3047 = vsel %vm97, %v3002, 0
    %v3050 = vsel %vm97, %v3003, 0
    %v3053 = vsel %vm97, %v3004, 0
    %v3056 = vsel %vm97, %v3005, 0
    %v3059 = vsel %vm97, %v3006, 0
    %v3062 = vsel %vm97, %v3007, 0
    %v3065 = vsel %vm97, %v3008, 0
    %v3068 = vsel %vm97, %v3009, 0
    %v3071 = vsel %vm97, %v3010, 0
    %v3074 = vsel %vm97, %v3011, 0
    %v3077 = vsel %vm97, %v3012, 0
    %v3080 = vsel %vm97, %v3013, 0
    %v3083 = vsel %vm97, %v3014, 0
    %v3086 = vsel %vm97, %v3015, 0
    %v3089 = vsel %vm97, %v3016, 0
    %v3092 = vsel %vm97, %v3017, 0
    %v3095 = vsel %vm97, %v3018, 0
    %v3098 = vsel %vm97, %v3019, 0
    %v3101 = vsel %vm97, %v3020, 0
    %v3104 = vsel %vm97, %v3021, 0
    %v3107 = vsel %vm97, %v3022, 0
    %v3110 = vsel %vm97, %v3023, 0
    %v3113 = vsel %vm97, %v3024, 0
    %v3116 = vsel %vm97, %v3025, 0
    %v3119 = vsel %vm97, %v3026, 0
    %v3122 = vsel %vm97, %v3027, 0
    %v3125 = vsel %vm97, %v3028, 0
    %v3128 = vsel %vm194, %v3030, 0
    %3130 = vmatprep.subr.mxu0 0.0
    %3131 = vmatpush1.msra.mxu0 %v3128
    %3132 = vmatprep.subr.mxu0 0.0
    %3133 = vmatpush1.msra.mxu0 0.0
    %3134 = vmatprep.subr.mxu0 0.0
    %3135 = vmatpush1.msra.mxu0 0.0
    %3136 = vmatprep.subr.mxu0 0.0
    %3137 = vmatpush1.msra.mxu0 0.0
    %3138 = vmatprep.subr.mxu0 0.0
    %3139 = vmatpush1.msra.mxu0 0.0
    %3140 = vmatprep.subr.mxu0 0.0
    %3141 = vmatpush1.msra.mxu0 0.0
    %3142 = vmatprep.subr.mxu0 0.0
    %3143 = vmatpush1.msra.mxu0 0.0
    %3144 = vmatprep.subr.mxu0 0.0
    %3145 = vmatpush1.msra.mxu0 0.0
    %3146 = vmatprep.subr.mxu0 0.0
    %3147 = vmatpush1.msra.mxu0 0.0
    %3148 = vmatprep.subr.mxu0 0.0
    %3149 = vmatpush1.msra.mxu0 0.0
    %3150 = vmatprep.subr.mxu0 0.0
    %3151 = vmatpush1.msra.mxu0 0.0
    %3152 = vmatprep.subr.mxu0 0.0
    %3153 = vmatpush1.msra.mxu0 0.0
    %3154 = vmatprep.subr.mxu0 0.0
    %3155 = vmatpush1.msra.mxu0 0.0
    %3156 = vmatprep.subr.mxu0 0.0
    %3157 = vmatpush1.msra.mxu0 0.0
    %3158 = vmatprep.subr.mxu0 0.0
    %3159 = vmatpush1.msra.mxu0 0.0
    %3160 = vmatprep.subr.mxu0 0.0
    %3161 = vmatpush1.msra.mxu0 0.0
    %3162 = vmatprep.subr.mxu0 0.0
    %3163 = vmatpush1.msra.mxu0 0.0
    %3164 = vmatprep.subr.mxu0 0.0
    %3165 = vmatpush1.msra.mxu0 0.0
    %3166 = vmatprep.subr.mxu0 0.0
    %3167 = vmatpush1.msra.mxu0 0.0
    %3168 = vmatprep.subr.mxu0 0.0
    %3169 = vmatpush1.msra.mxu0 0.0
    %3170 = vmatprep.subr.mxu0 0.0
    %3171 = vmatpush1.msra.mxu0 0.0
    %3172 = vmatprep.subr.mxu0 0.0
    %3173 = vmatpush1.msra.mxu0 0.0
    %3174 = vmatprep.subr.mxu0 0.0
    %3175 = vmatpush1.msra.mxu0 0.0
    %3176 = vmatprep.subr.mxu0 0.0
    %3177 = vmatpush1.msra.mxu0 0.0
    %3178 = vmatprep.subr.mxu0 0.0
    %3179 = vmatpush1.msra.mxu0 0.0
    %3180 = vmatprep.subr.mxu0 0.0
    %3181 = vmatpush1.msra.mxu0 0.0
    %3182 = vmatprep.subr.mxu0 0.0
    %3183 = vmatpush1.msra.mxu0 0.0
    %3184 = vmatprep.subr.mxu0 0.0
    %3185 = vmatpush1.msra.mxu0 0.0
    %3186 = vmatprep.subr.mxu0 0.0
    %3187 = vmatpush1.msra.mxu0 0.0
    %3188 = vmatprep.subr.mxu0 0.0
    %3189 = vmatpush1.msra.mxu0 0.0
    %3190 = vmatprep.subr.mxu0 0.0
    %3191 = vmatpush1.msra.mxu0 0.0
    %3192 = vmatprep.subr.mxu0 0.0
    %3193 = vmatpush1.msra.mxu0 0.0
    %3194 = vmatprep.mubr.f32.mxu0 0.0
    %3195 = vmatmul.mubr.f32.gmra.mrb[0].mxu0 %v3032
    %v3196 = vpop.f32.mrb[0].mxu0
    %v3197 = vadd.f32 0.0, %v3196
    %v3198 = vpop.f32.mrb[0].mxu0
    %3199 = vmatprep.mubr.f32.mxu0 0.0
    %3200 = vmatmul.mubr.f32.gmra.mrb[0].mxu0 %v3035
    %v3201 = vpop.f32.mrb[0].mxu0
    %v3202 = vadd.f32 0.0, %v3201
    %v3203 = vpop.f32.mrb[0].mxu0
    %3204 = vmatprep.mubr.f32.mxu0 0.0
    %3205 = vmatmul.mubr.f32.gmra.mrb[0].mxu0 %v3038
    %v3206 = vpop.f32.mrb[0].mxu0
    %v3207 = vadd.f32 0.0, %v3206
    %v3208 = vpop.f32.mrb[0].mxu0
    %3209 = vmatprep.mubr.f32.mxu0 0.0
    %3210 = vmatmul.mubr.f32.gmra.mrb[0].mxu0 %v3041
    %v3211 = vpop.f32.mrb[0].mxu0
    %v3212 = vadd.f32 0.0, %v3211
    %v3213 = vpop.f32.mrb[0].mxu0
    %3214 = vmatprep.mubr.f32.mxu0 0.0
    %3215 = vmatmul.mubr.f32.gmra.mrb[0].mxu0 %v3044
    %v3216 = vpop.f32.mrb[0].mxu0
    %v3217 = vadd.f32 0.0, %v3216
    %v3218 = vpop.f32.mrb[0].mxu0
    %3219 = vmatprep.mubr.f32.mxu0 0.0
    %3220 = vmatmul.mubr.f32.gmra.mrb[0].mxu0 %v3047
    %v3221 = vpop.f32.mrb[0].mxu0
    %v3222 = vadd.f32 0.0, %v3221
    %v3223 = vpop.f32.mrb[0].mxu0
    %3224 = vmatprep.mubr.f32.mxu0 0.0
    %3225 = vmatmul.mubr.f32.gmra.mrb[0].mxu0 %v3050
    %v3226 = vpop.f32.mrb[0].mxu0
    %v3227 = vadd.f32 0.0, %v3226
    %v3228 = vpop.f32.mrb[0].mxu0
    %3229 = vmatprep.mubr.f32.mxu0 0.0
    %3230 = vmatmul.mubr.f32.gmra.mrb[0].mxu0 %v3053
    %v3231 = vpop.f32.mrb[0].mxu0
    %v3232 = vadd.f32 0.0, %v3231
    %v3233 = vpop.f32.mrb[0].mxu0
    %3234 = vmatprep.mubr.f32.mxu0 0.0
    %3235 = vmatmul.mubr.f32.gmra.mrb[0].mxu0 %v3056
    %v3236 = vpop.f32.mrb[0].mxu0
    %v3237 = vadd.f32 0.0, %v3236
    %v3238 = vpop.f32.mrb[0].mxu0
    %3239 = vmatprep.mubr.f32.mxu0 0.0
    %3240 = vmatmul.mubr.f32.gmra.mrb[0].mxu0 %v3059
    %v3241 = vpop.f32.mrb[0].mxu0
    %v3242 = vadd.f32 0.0, %v3241
    %v3243 = vpop.f32.mrb[0].mxu0
    %3244 = vmatprep.mubr.f32.mxu0 0.0
    %3245 = vmatmul.mubr.f32.gmra.mrb[0].mxu0 %v3062
    %v3246 = vpop.f32.mrb[0].mxu0
    %v3247 = vadd.f32 0.0, %v3246
    %v3248 = vpop.f32.mrb[0].mxu0
    %3249 = vmatprep.mubr.f32.mxu0 0.0
    %3250 = vmatmul.mubr.f32.gmra.mrb[0].mxu0 %v3065
    %v3251 = vpop.f32.mrb[0].mxu0
    %v3252 = vadd.f32 0.0, %v3251
    %v3253 = vpop.f32.mrb[0].mxu0
    %3254 = vmatprep.mubr.f32.mxu0 0.0
    %3255 = vmatmul.mubr.f32.gmra.mrb[0].mxu0 %v3068
    %v3256 = vpop.f32.mrb[0].mxu0
    %v3257 = vadd.f32 0.0, %v3256
    %v3258 = vpop.f32.mrb[0].mxu0
    %3259 = vmatprep.mubr.f32.mxu0 0.0
    %3260 = vmatmul.mubr.f32.gmra.mrb[0].mxu0 %v3071
    %v3261 = vpop.f32.mrb[0].mxu0
    %v3262 = vadd.f32 0.0, %v3261
    %v3263 = vpop.f32.mrb[0].mxu0
    %3264 = vmatprep.mubr.f32.mxu0 0.0
    %3265 = vmatmul.mubr.f32.gmra.mrb[0].mxu0 %v3074
    %v3266 = vpop.f32.mrb[0].mxu0
    %v3267 = vadd.f32 0.0, %v3266
    %v3268 = vpop.f32.mrb[0].mxu0
    %3269 = vmatprep.mubr.f32.mxu0 0.0
    %3270 = vmatmul.mubr.f32.gmra.mrb[0].mxu0 %v3077
    %v3271 = vpop.f32.mrb[0].mxu0
    %v3272 = vadd.f32 0.0, %v3271
    %v3273 = vpop.f32.mrb[0].mxu0
    %3274 = vmatprep.mubr.f32.mxu0 0.0
    %3275 = vmatmul.mubr.f32.gmra.mrb[0].mxu0 %v3080
    %v3276 = vpop.f32.mrb[0].mxu0
    %v3277 = vadd.f32 0.0, %v3276
    %v3278 = vpop.f32.mrb[0].mxu0
    %3279 = vmatprep.mubr.f32.mxu0 0.0
    %3280 = vmatmul.mubr.f32.gmra.mrb[0].mxu0 %v3083
    %v3281 = vpop.f32.mrb[0].mxu0
    %v3282 = vadd.f32 0.0, %v3281
    %v3283 = vpop.f32.mrb[0].mxu0
    %3284 = vmatprep.mubr.f32.mxu0 0.0
    %3285 = vmatmul.mubr.f32.gmra.mrb[0].mxu0 %v3086
    %v3286 = vpop.f32.mrb[0].mxu0
    %v3287 = vadd.f32 0.0, %v3286
    %v3288 = vpop.f32.mrb[0].mxu0
    %3289 = vmatprep.mubr.f32.mxu0 0.0
    %3290 = vmatmul.mubr.f32.gmra.mrb[0].mxu0 %v3089
    %v3291 = vpop.f32.mrb[0].mxu0
    %v3292 = vadd.f32 0.0, %v3291
    %v3293 = vpop.f32.mrb[0].mxu0
    %3294 = vmatprep.mubr.f32.mxu0 0.0
    %3295 = vmatmul.mubr.f32.gmra.mrb[0].mxu0 %v3092
    %v3296 = vpop.f32.mrb[0].mxu0
    %v3297 = vadd.f32 0.0, %v3296
    %v3298 = vpop.f32.mrb[0].mxu0
    %3299 = vmatprep.mubr.f32.mxu0 0.0
    %3300 = vmatmul.mubr.f32.gmra.mrb[0].mxu0 %v3095
    %v3301 = vpop.f32.mrb[0].mxu0
    %v3302 = vadd.f32 0.0, %v3301
    %v3303 = vpop.f32.mrb[0].mxu0
    %3304 = vmatprep.mubr.f32.mxu0 0.0
    %3305 = vmatmul.mubr.f32.gmra.mrb[0].mxu0 %v3098
    %v3306 = vpop.f32.mrb[0].mxu0
    %v3307 = vadd.f32 0.0, %v3306
    %v3308 = vpop.f32.mrb[0].mxu0
    %3309 = vmatprep.mubr.f32.mxu0 0.0
    %3310 = vmatmul.mubr.f32.gmra.mrb[0].mxu0 %v3101
    %v3311 = vpop.f32.mrb[0].mxu0
    %v3312 = vadd.f32 0.0, %v3311
    %v3313 = vpop.f32.mrb[0].mxu0
    %3314 = vmatprep.mubr.f32.mxu0 0.0
    %3315 = vmatmul.mubr.f32.gmra.mrb[0].mxu0 %v3104
    %v3316 = vpop.f32.mrb[0].mxu0
    %v3317 = vadd.f32 0.0, %v3316
    %v3318 = vpop.f32.mrb[0].mxu0
    %3319 = vmatprep.mubr.f32.mxu0 0.0
    %3320 = vmatmul.mubr.f32.gmra.mrb[0].mxu0 %v3107
    %v3321 = vpop.f32.mrb[0].mxu0
    %v3322 = vadd.f32 0.0, %v3321
    %v3323 = vpop.f32.mrb[0].mxu0
    %3324 = vmatprep.mubr.f32.mxu0 0.0
    %3325 = vmatmul.mubr.f32.gmra.mrb[0].mxu0 %v3110
    %v3326 = vpop.f32.mrb[0].mxu0
    %v3327 = vadd.f32 0.0, %v3326
    %v3328 = vpop.f32.mrb[0].mxu0
    %3329 = vmatprep.mubr.f32.mxu0 0.0
    %3330 = vmatmul.mubr.f32.gmra.mrb[0].mxu0 %v3113
    %v3331 = vpop.f32.mrb[0].mxu0
    %v3332 = vadd.f32 0.0, %v3331
    %v3333 = vpop.f32.mrb[0].mxu0
    %3334 = vmatprep.mubr.f32.mxu0 0.0
    %3335 = vmatmul.mubr.f32.gmra.mrb[0].mxu0 %v3116
    %v3336 = vpop.f32.mrb[0].mxu0
    %v3337 = vadd.f32 0.0, %v3336
    %v3338 = vpop.f32.mrb[0].mxu0
    %3339 = vmatprep.mubr.f32.mxu0 0.0
    %3340 = vmatmul.mubr.f32.gmra.mrb[0].mxu0 %v3119
    %v3341 = vpop.f32.mrb[0].mxu0
    %v3342 = vadd.f32 0.0, %v3341
    %v3343 = vpop.f32.mrb[0].mxu0
    %3344 = vmatprep.mubr.f32.mxu0 0.0
    %3345 = vmatmul.mubr.f32.gmra.mrb[0].mxu0 %v3122
    %v3346 = vpop.f32.mrb[0].mxu0
    %v3347 = vadd.f32 0.0, %v3346
    %v3348 = vpop.f32.mrb[0].mxu0
    %3349 = vmatprep.mubr.f32.mxu0 0.0
    %3350 = vmatmul.mubr.f32.gmra.mrb[0].mxu0 %v3125
    %v3351 = vpop.f32.mrb[0].mxu0
    %v3352 = vadd.f32 0.0, %v3351
    %v3353 = vpop.f32.mrb[0].mxu0
    %3354 = vdwg.mxu0
    %v3355 = vadd.f32 %v2965, %v3197
    %v3356 = vadd.f32 %v2966, %v3202
    %v3357 = vadd.f32 %v2967, %v3207
    %v3358 = vadd.f32 %v2968, %v3212
    %v3359 = vadd.f32 %v2969, %v3217
    %v3360 = vadd.f32 %v2970, %v3222
    %v3361 = vadd.f32 %v2971, %v3227
    %v3362 = vadd.f32 %v2972, %v3232
    %v3363 = vadd.f32 %v2973, %v3237
    %v3364 = vadd.f32 %v2974, %v3242
    %v3365 = vadd.f32 %v2975, %v3247
    %v3366 = vadd.f32 %v2976, %v3252
    %v3367 = vadd.f32 %v2977, %v3257
    %v3368 = vadd.f32 %v2978, %v3262
    %v3369 = vadd.f32 %v2979, %v3267
    %v3370 = vadd.f32 %v2980, %v3272
    %v3371 = vadd.f32 %v2981, %v3277
    %v3372 = vadd.f32 %v2982, %v3282
    %v3373 = vadd.f32 %v2983, %v3287
    %v3374 = vadd.f32 %v2984, %v3292
    %v3375 = vadd.f32 %v2985, %v3297
    %v3376 = vadd.f32 %v2986, %v3302
    %v3377 = vadd.f32 %v2987, %v3307
    %v3378 = vadd.f32 %v2988, %v3312
    %v3379 = vadd.f32 %v2989, %v3317
    %v3380 = vadd.f32 %v2990, %v3322
    %v3381 = vadd.f32 %v2991, %v3327
    %v3382 = vadd.f32 %v2992, %v3332
    %v3383 = vadd.f32 %v2993, %v3337
    %v3384 = vadd.f32 %v2994, %v3342
    %v3385 = vadd.f32 %v2995, %v3347
    %v3386 = vadd.f32 %v2996, %v3352
    %vm3387 = vcmask 64512
    %3388 = vst.msk [vmem:[%s3] sm:$0xff] %vm3387, %v3355
    %3389 = vst.msk [vmem:[%s3 + $0x8] sm:$0xff] %vm3387, %v3356
    %3390 = vst.msk [vmem:[%s3 + $0x10] sm:$0xff] %vm3387, %v3357
    %3391 = vst.msk [vmem:[%s3 + $0x18] sm:$0xff] %vm3387, %v3358
    %3392 = vst.msk [vmem:[%s3 + $0x20] sm:$0xff] %vm3387, %v3359
    %3393 = vst.msk [vmem:[%s3 + $0x28] sm:$0xff] %vm3387, %v3360
    %3394 = vst.msk [vmem:[%s3 + $0x30] sm:$0xff] %vm3387, %v3361
    %3395 = vst.msk [vmem:[%s3 + $0x38] sm:$0xff] %vm3387, %v3362
    %3396 = vst.msk [vmem:[%s3 + $0x40] sm:$0xff] %vm3387, %v3363
    %3397 = vst.msk [vmem:[%s3 + $0x48] sm:$0xff] %vm3387, %v3364
    %3398 = vst.msk [vmem:[%s3 + $0x50] sm:$0xff] %vm3387, %v3365
    %3399 = vst.msk [vmem:[%s3 + $0x58] sm:$0xff] %vm3387, %v3366
    %3400 = vst.msk [vmem:[%s3 + $0x60] sm:$0xff] %vm3387, %v3367
    %3401 = vst.msk [vmem:[%s3 + $0x68] sm:$0xff] %vm3387, %v3368
    %3402 = vst.msk [vmem:[%s3 + $0x70] sm:$0xff] %vm3387, %v3369
    %3403 = vst.msk [vmem:[%s3 + $0x78] sm:$0xff] %vm3387, %v3370
    %3404 = vst.msk [vmem:[%s3 + $0x80] sm:$0xff] %vm3387, %v3371
    %3405 = vst.msk [vmem:[%s3 + $0x88] sm:$0xff] %vm3387, %v3372
    %3406 = vst.msk [vmem:[%s3 + $0x90] sm:$0xff] %vm3387, %v3373
    %3407 = vst.msk [vmem:[%s3 + $0x98] sm:$0xff] %vm3387, %v3374
    %3408 = vst.msk [vmem:[%s3 + $0xa0] sm:$0xff] %vm3387, %v3375
    %3409 = vst.msk [vmem:[%s3 + $0xa8] sm:$0xff] %vm3387, %v3376
    %3410 = vst.msk [vmem:[%s3 + $0xb0] sm:$0xff] %vm3387, %v3377
    %3411 = vst.msk [vmem:[%s3 + $0xb8] sm:$0xff] %vm3387, %v3378
    %3412 = vst.msk [vmem:[%s3 + $0xc0] sm:$0xff] %vm3387, %v3379
    %3413 = vst.msk [vmem:[%s3 + $0xc8] sm:$0xff] %vm3387, %v3380
    %3414 = vst.msk [vmem:[%s3 + $0xd0] sm:$0xff] %vm3387, %v3381
    %3415 = vst.msk [vmem:[%s3 + $0xd8] sm:$0xff] %vm3387, %v3382
    %3416 = vst.msk [vmem:[%s3 + $0xe0] sm:$0xff] %vm3387, %v3383
    %3417 = vst.msk [vmem:[%s3 + $0xe8] sm:$0xff] %vm3387, %v3384
    %3418 = vst.msk [vmem:[%s3 + $0xf0] sm:$0xff] %vm3387, %v3385
    %3419 = vst.msk [vmem:[%s3 + $0xf8] sm:$0xff] %vm3387, %v3386
    %v3420 = vld [vmem:[#allocation3] sm:$0x1]
    %v3421 = vsel %vm3387, %v3355, 0.0
    %v3422 = vsel %vm3387, %v3356, 0.0
    %v3423 = vadd.f32 %v3421, %v3422
    %v3424 = vsel %vm3387, %v3357, 0.0
    %v3425 = vadd.f32 %v3423, %v3424
    %v3426 = vsel %vm3387, %v3358, 0.0
    %v3427 = vadd.f32 %v3425, %v3426
    %v3428 = vsel %vm3387, %v3359, 0.0
    %v3429 = vadd.f32 %v3427, %v3428
    %v3430 = vsel %vm3387, %v3360, 0.0
    %v3431 = vadd.f32 %v3429, %v3430
    %v3432 = vsel %vm3387, %v3361, 0.0
    %v3433 = vadd.f32 %v3431, %v3432
    %v3434 = vsel %vm3387, %v3362, 0.0
    %v3435 = vadd.f32 %v3433, %v3434
    %v3436 = vsel %vm3387, %v3363, 0.0
    %v3437 = vadd.f32 %v3435, %v3436
    %v3438 = vsel %vm3387, %v3364, 0.0
    %v3439 = vadd.f32 %v3437, %v3438
    %v3440 = vsel %vm3387, %v3365, 0.0
    %v3441 = vadd.f32 %v3439, %v3440
    %v3442 = vsel %vm3387, %v3366, 0.0
    %v3443 = vadd.f32 %v3441, %v3442
    %v3444 = vsel %vm3387, %v3367, 0.0
    %v3445 = vadd.f32 %v3443, %v3444
    %v3446 = vsel %vm3387, %v3368, 0.0
    %v3447 = vadd.f32 %v3445, %v3446
    %v3448 = vsel %vm3387, %v3369, 0.0
    %v3449 = vadd.f32 %v3447, %v3448
    %v3450 = vsel %vm3387, %v3370, 0.0
    %v3451 = vadd.f32 %v3449, %v3450
    %v3452 = vsel %vm3387, %v3371, 0.0
    %v3453 = vadd.f32 %v3451, %v3452
    %v3454 = vsel %vm3387, %v3372, 0.0
    %v3455 = vadd.f32 %v3453, %v3454
    %v3456 = vsel %vm3387, %v3373, 0.0
    %v3457 = vadd.f32 %v3455, %v3456
    %v3458 = vsel %vm3387, %v3374, 0.0
    %v3459 = vadd.f32 %v3457, %v3458
    %v3460 = vsel %vm3387, %v3375, 0.0
    %v3461 = vadd.f32 %v3459, %v3460
    %v3462 = vsel %vm3387, %v3376, 0.0
    %v3463 = vadd.f32 %v3461, %v3462
    %v3464 = vsel %vm3387, %v3377, 0.0
    %v3465 = vadd.f32 %v3463, %v3464
    %v3466 = vsel %vm3387, %v3378, 0.0
    %v3467 = vadd.f32 %v3465, %v3466
    %v3468 = vsel %vm3387, %v3379, 0.0
    %v3469 = vadd.f32 %v3467, %v3468
    %v3470 = vsel %vm3387, %v3380, 0.0
    %v3471 = vadd.f32 %v3469, %v3470
    %v3472 = vsel %vm3387, %v3381, 0.0
    %v3473 = vadd.f32 %v3471, %v3472
    %v3474 = vsel %vm3387, %v3382, 0.0
    %v3475 = vadd.f32 %v3473, %v3474
    %v3476 = vsel %vm3387, %v3383, 0.0
    %v3477 = vadd.f32 %v3475, %v3476
    %v3478 = vsel %vm3387, %v3384, 0.0
    %v3479 = vadd.f32 %v3477, %v3478
    %v3480 = vsel %vm3387, %v3385, 0.0
    %v3481 = vadd.f32 %v3479, %v3480
    %v3482 = vsel %vm3387, %v3386, 0.0
    %v3483 = vadd.f32 %v3481, %v3482
    %v3484 = vrot.slane %v3483, 4
    %v3485 = vadd.f32 %v3483, %v3484
    %v3486 = vrot.slane %v3485, 2
    %v3487 = vadd.f32 %v3485, %v3486
    %v3488 = vrot.slane %v3487, 1
    %v3489 = vadd.f32 %v3487, %v3488
    %v3490 = vadd.f32 %v3420, %v3489
    %vm3491 = vcmask 57344
    %3492 = vst.msk [vmem:[#allocation3] sm:$0x1] %vm3491, %v3490
    %v3493 = vld [vmem:[#allocation3 + $0x1] sm:$0x1]
    %v3494 = vmul.f32 %v3355, %v3355
    %v3495 = vmul.f32 %v3356, %v3356
    %v3496 = vmul.f32 %v3357, %v3357
    %v3497 = vmul.f32 %v3358, %v3358
    %v3498 = vmul.f32 %v3359, %v3359
    %v3499 = vmul.f32 %v3360, %v3360
    %v3500 = vmul.f32 %v3361, %v3361
    %v3501 = vmul.f32 %v3362, %v3362
    %v3502 = vmul.f32 %v3363, %v3363
    %v3503 = vmul.f32 %v3364, %v3364
    %v3504 = vmul.f32 %v3365, %v3365
    %v3505 = vmul.f32 %v3366, %v3366
    %v3506 = vmul.f32 %v3367, %v3367
    %v3507 = vmul.f32 %v3368, %v3368
    %v3508 = vmul.f32 %v3369, %v3369
    %v3509 = vmul.f32 %v3370, %v3370
    %v3510 = vmul.f32 %v3371, %v3371
    %v3511 = vmul.f32 %v3372, %v3372
    %v3512 = vmul.f32 %v3373, %v3373
    %v3513 = vmul.f32 %v3374, %v3374
    %v3514 = vmul.f32 %v3375, %v3375
    %v3515 = vmul.f32 %v3376, %v3376
    %v3516 = vmul.f32 %v3377, %v3377
    %v3517 = vmul.f32 %v3378, %v3378
    %v3518 = vmul.f32 %v3379, %v3379
    %v3519 = vmul.f32 %v3380, %v3380
    %v3520 = vmul.f32 %v3381, %v3381
    %v3521 = vmul.f32 %v3382, %v3382
    %v3522 = vmul.f32 %v3383, %v3383
    %v3523 = vmul.f32 %v3384, %v3384
    %v3524 = vmul.f32 %v3385, %v3385
    %v3525 = vmul.f32 %v3386, %v3386
    %v3526 = vsel %vm3387, %v3494, 0.0
    %v3527 = vsel %vm3387, %v3495, 0.0
    %v3528 = vadd.f32 %v3526, %v3527
    %v3529 = vsel %vm3387, %v3496, 0.0
    %v3530 = vadd.f32 %v3528, %v3529
    %v3531 = vsel %vm3387, %v3497, 0.0
    %v3532 = vadd.f32 %v3530, %v3531
    %v3533 = vsel %vm3387, %v3498, 0.0
    %v3534 = vadd.f32 %v3532, %v3533
    %v3535 = vsel %vm3387, %v3499, 0.0
    %v3536 = vadd.f32 %v3534, %v3535
    %v3537 = vsel %vm3387, %v3500, 0.0
    %v3538 = vadd.f32 %v3536, %v3537
    %v3539 = vsel %vm3387, %v3501, 0.0
    %v3540 = vadd.f32 %v3538, %v3539
    %v3541 = vsel %vm3387, %v3502, 0.0
    %v3542 = vadd.f32 %v3540, %v3541
    %v3543 = vsel %vm3387, %v3503, 0.0
    %v3544 = vadd.f32 %v3542, %v3543
    %v3545 = vsel %vm3387, %v3504, 0.0
    %v3546 = vadd.f32 %v3544, %v3545
    %v3547 = vsel %vm3387, %v3505, 0.0
    %v3548 = vadd.f32 %v3546, %v3547
    %v3549 = vsel %vm3387, %v3506, 0.0
    %v3550 = vadd.f32 %v3548, %v3549
    %v3551 = vsel %vm3387, %v3507, 0.0
    %v3552 = vadd.f32 %v3550, %v3551
    %v3553 = vsel %vm3387, %v3508, 0.0
    %v3554 = vadd.f32 %v3552, %v3553
    %v3555 = vsel %vm3387, %v3509, 0.0
    %v3556 = vadd.f32 %v3554, %v3555
    %v3557 = vsel %vm3387, %v3510, 0.0
    %v3558 = vadd.f32 %v3556, %v3557
    %v3559 = vsel %vm3387, %v3511, 0.0
    %v3560 = vadd.f32 %v3558, %v3559
    %v3561 = vsel %vm3387, %v3512, 0.0
    %v3562 = vadd.f32 %v3560, %v3561
    %v3563 = vsel %vm3387, %v3513, 0.0
    %v3564 = vadd.f32 %v3562, %v3563
    %v3565 = vsel %vm3387, %v3514, 0.0
    %v3566 = vadd.f32 %v3564, %v3565
    %v3567 = vsel %vm3387, %v3515, 0.0
    %v3568 = vadd.f32 %v3566, %v3567
    %v3569 = vsel %vm3387, %v3516, 0.0
    %v3570 = vadd.f32 %v3568, %v3569
    %v3571 = vsel %vm3387, %v3517, 0.0
    %v3572 = vadd.f32 %v3570, %v3571
    %v3573 = vsel %vm3387, %v3518, 0.0
    %v3574 = vadd.f32 %v3572, %v3573
    %v3575 = vsel %vm3387, %v3519, 0.0
    %v3576 = vadd.f32 %v3574, %v3575
    %v3577 = vsel %vm3387, %v3520, 0.0
    %v3578 = vadd.f32 %v3576, %v3577
    %v3579 = vsel %vm3387, %v3521, 0.0
    %v3580 = vadd.f32 %v3578, %v3579
    %v3581 = vsel %vm3387, %v3522, 0.0
    %v3582 = vadd.f32 %v3580, %v3581
    %v3583 = vsel %vm3387, %v3523, 0.0
    %v3584 = vadd.f32 %v3582, %v3583
    %v3585 = vsel %vm3387, %v3524, 0.0
    %v3586 = vadd.f32 %v3584, %v3585
    %v3587 = vsel %vm3387, %v3525, 0.0
    %v3588 = vadd.f32 %v3586, %v3587
    %v3589 = vrot.slane %v3588, 4
    %v3590 = vadd.f32 %v3588, %v3589
    %v3591 = vrot.slane %v3590, 2
    %v3592 = vadd.f32 %v3590, %v3591
    %v3593 = vrot.slane %v3592, 1
    %v3594 = vadd.f32 %v3592, %v3593
    %v3595 = vadd.f32 %v3493, %v3594
    %3596 = vst.msk [vmem:[#allocation3 + $0x1] sm:$0x1] %vm3491, %v3595
    // Predicated region
    $region18: #{tpu_custom_call.1} parent=1 // pred_check
      %p3597 = pneg %p17
    $region19: #{tpu_custom_call.1} parent=1 // pred_check_branch
      %3599 = sbr.rel (%p3597) target = $region21
    $region20: #{tpu_custom_call.1} parent=1 // pred_region
      %v3600 = vld [vmem:[#allocation3] sm:$0x3]
      %vm3601 = vcmask 58368
      %3602 = vst.msk [vmem:[#allocation4] sm:$0x3] %vm3601, %v3600
    $region21: #{tpu_custom_call.1} parent=1 // pred_fallthru
      _
    // Predicated region
    $region22: #{tpu_custom_call.1} parent=1 // pred_check
      _
    $region23: #{tpu_custom_call.1} parent=1 // pred_check_branch
      %3604 = sbr.rel (0) target = $region25
    $region24: #{tpu_custom_call.1} parent=1 // pred_region
      _
    $region25: #{tpu_custom_call.1} parent=1 // pred_fallthru
      _
    // Predicated region
    $region26: #{tpu_custom_call.1} parent=1 // pred_check
      _
    $region27: #{tpu_custom_call.1} parent=1 // pred_check_branch
      %3606 = sbr.rel (0) target = $region29
    $region28: #{tpu_custom_call.1} parent=1 // pred_region
      %s3608 = ssub.s32 32, 32
      %3609 = vsyncadd [#allocation5], %s3608
      %s3611 = sshll.u32 [#allocation4], 4
      %s3612 = int_to_ptr.vmem [resolvable:$true] %s3611
      %3614 = dma.vmem_to_hbm [thread:$0]  %s3612, 32, %s4, [#allocation5]
    $region29: #{tpu_custom_call.1} parent=1 // pred_fallthru
      _
    // Predicated region
    $region30: #{tpu_custom_call.1} parent=1 // pred_check
      _
    $region31: #{tpu_custom_call.1} parent=1 // pred_check_branch
      %3616 = sbr.rel (0) target = $region33
    $region32: #{tpu_custom_call.1} parent=1 // pred_region
      _
    $region33: #{tpu_custom_call.1} parent=1 // pred_fallthru
      _
    // Predicated region
    $region34: #{tpu_custom_call.1} parent=1 // pred_check
      _
    $region35: #{tpu_custom_call.1} parent=1 // pred_check_branch
      %3618 = sbr.rel (0) target = $region37
    $region36: #{tpu_custom_call.1} parent=1 // pred_region
      %3619 = dma.done [#allocation5], 32
    $region37: #{tpu_custom_call.1} parent=1 // pred_fallthru
      _
    %3620 = vsyncpa [#allocation5], 1

</llo_original>
